<compile_context>
chip_gen: v7x
topology: tpu7x:2x2x1
jax: 0.10.0
libtpu: 0.0.40
codegen_flags: <defaults>
</compile_context>

<pallas_src>
import functools

import jax
import jax.numpy as jnp
from jax import lax
from jax.experimental import pallas as pl
from jax.experimental.pallas import tpu as pltpu

_ROW_PARALLEL = pltpu.CompilerParams(dimension_semantics=("parallel",))


# ---------------------------------------------------------------------------
# In-kernel helpers
# ---------------------------------------------------------------------------
def _fold_scale_shift(s_in, q_in, g, b, inv_m, eps):
    """One-pass batch-norm fold: (sum, sum_sq) partials -> per-channel scale/shift.

    s_in, q_in: (P, 1, C) f32 per-tile partials; g, b: (1, C) f32.
    """
    s = jnp.sum(s_in, axis=(0, 1))
    q = jnp.sum(q_in, axis=(0, 1))
    mean = s * inv_m
    var = jnp.maximum(q * inv_m - mean * mean, 0.0)   # biased variance (training BN)
    inv = lax.rsqrt(var + eps)
    scale = g[0, :] * inv
    shift = b[0, :] - mean * scale
    return scale, shift


# ---------------------------------------------------------------------------
# Kernels
# ---------------------------------------------------------------------------
def _pointwise_conv_stats_kernel(inv_m, eps, has_pre, x_ref, *refs):
    """[optional in-kernel BN fold + scale/shift + ReLU] -> 1x1 conv -> stats."""
    if has_pre:
        s_in_ref, q_in_ref, g_ref, b_ref, w_ref, y_ref, s_ref, q_ref = refs
        scale, shift = _fold_scale_shift(s_in_ref[...], q_in_ref[...],
                                         g_ref[...], b_ref[...], inv_m, eps)
        h = jnp.maximum(x_ref[...].astype(jnp.float32) * scale + shift, 0.0)
    else:
        w_ref, y_ref, s_ref, q_ref = refs
        h = x_ref[...]
    # bf16 MXU operands, f32 accumulation.
    y = jnp.dot(h.astype(jnp.bfloat16), w_ref[...],
                preferred_element_type=jnp.float32)
    y_ref[...] = y.astype(y_ref.dtype)                # bf16 or f32 storage
    s_ref[...] = jnp.sum(y, axis=0).reshape(1, 1, -1)
    q_ref[...] = jnp.sum(y * y, axis=0).reshape(1, 1, -1)


def _conv3x3_stats_kernel(H, W, C, BH, inv_m, eps, use_im2col,
                          h_ref, s_in_ref, q_in_ref, g_ref, b_ref, w_ref,
                          y_ref, s_ref, q_ref, pad_ref):
    """BN1 (folded in-kernel) + ReLU, then 3x3 'same' conv on one H-band.

    Grid = (N, H//BH).  The input block is the full image (resident across
    bands); at band 0 the zero-bordered halo scratch is filled once per image,
    and each band then slices its rows and does the MXU matmul(s).
    """
    band = pl.program_id(1)

    @pl.when(band == 0)
    def _fill_halo():
        scale, shift = _fold_scale_shift(s_in_ref[...], q_in_ref[...],
                                         g_ref[...], b_ref[...], inv_m, eps)
        h = jnp.maximum(h_ref[0].astype(jnp.float32) * scale + shift, 0.0)
        hb = h.astype(jnp.bfloat16)
        # Zero only the 1-wide border; the interior is fully overwritten.
        zrow = jnp.zeros((1, W + 2, C), jnp.bfloat16)
        zcol = jnp.zeros((H, 1, C), jnp.bfloat16)
        pad_ref[0:1, :, :] = zrow
        pad_ref[H + 1:H + 2, :, :] = zrow
        pad_ref[1:H + 1, 0:1, :] = zcol
        pad_ref[1:H + 1, W + 1:W + 2, :] = zcol
        pad_ref[1:H + 1, 1:W + 1, :] = hb

    r0 = band * BH                                     # band's top row in padded coords
    taps = [pad_ref[pl.ds(r0 + ky, BH), kx:kx + W, :]  # 9 x (BH, W, C) bf16
            for ky in range(3) for kx in range(3)]
    if use_im2col:
        # Small C_mid: K = 9C fills MXU depth better -> one matmul.
        col = jnp.concatenate(taps, axis=-1).reshape(BH * W, 9 * C)
        y = jnp.dot(col, w_ref[...], preferred_element_type=jnp.float32)
    else:
        # C_mid >= 128: skip the im2col temporary, 9 accumulating tap matmuls.
        y = jnp.zeros((BH * W, C), jnp.float32)
        for t in range(9):
            y = y + jnp.dot(taps[t].reshape(BH * W, C), w_ref[t],
                            preferred_element_type=jnp.float32)
    y_ref[...] = y.reshape(1, BH, W, C).astype(y_ref.dtype)
    s_ref[...] = jnp.sum(y, axis=0).reshape(1, 1, -1)
    q_ref[...] = jnp.sum(y * y, axis=0).reshape(1, 1, -1)


def _bn_residual_relu_kernel(inv_m, eps, h_ref, s_in_ref, q_in_ref, g_ref, b_ref,
                             x_ref, o_ref):
    scale, shift = _fold_scale_shift(s_in_ref[...], q_in_ref[...],
                                     g_ref[...], b_ref[...], inv_m, eps)
    o_ref[...] = jnp.maximum(h_ref[...] * scale + shift + x_ref[...], 0.0)


# ---------------------------------------------------------------------------
# Tiling helpers
# ---------------------------------------------------------------------------
def _pick_row_tile(M, target):
    """Largest multiple-of-8 divisor of M <= target, preferring >= 2 grid steps."""
    divs = [d for d in range(8, M + 1, 8) if M % d == 0]
    if not divs:
        return M
    pool = [d for d in divs if d <= M // 2] or divs
    fits = [d for d in pool if d <= target] or [min(pool)]
    return max(fits)


def _pick_band_rows(H, target=16):
    """Largest divisor of H <= target that still gives >= 2 bands (else H)."""
    cands = [d for d in range(1, H) if H % d == 0 and d <= target]
    return max(cands) if cands else H


# ---------------------------------------------------------------------------
# pallas_call wrappers
# ---------------------------------------------------------------------------
def _pointwise_conv_stats(x2d, w, pre, row_tile, out_dtype, inv_m, eps):
    M, C_in = x2d.shape
    C_out = w.shape[-1]
    tm = _pick_row_tile(M, row_tile)
    nt = M // tm

    in_specs = [pl.BlockSpec((tm, C_in), lambda i: (i, 0))]
    args = [x2d]
    if pre is not None:
        s_in, q_in, g, b = pre
        in_specs += [pl.BlockSpec(s_in.shape, lambda i: (0, 0, 0)),
                     pl.BlockSpec(q_in.shape, lambda i: (0, 0, 0)),
                     pl.BlockSpec((1, C_in), lambda i: (0, 0)),
                     pl.BlockSpec((1, C_in), lambda i: (0, 0))]
        args += [s_in, q_in, g, b]
    in_specs.append(pl.BlockSpec(w.shape, lambda i: (0, 0)))
    args.append(w)

    return pl.pallas_call(
        functools.partial(_pointwise_conv_stats_kernel, inv_m, eps, pre is not None),
        grid=(nt,),
        in_specs=in_specs,
        out_specs=(pl.BlockSpec((tm, C_out), lambda i: (i, 0)),
                   pl.BlockSpec((1, 1, C_out), lambda i: (i, 0, 0)),
                   pl.BlockSpec((1, 1, C_out), lambda i: (i, 0, 0))),
        out_shape=(jax.ShapeDtypeStruct((M, C_out), out_dtype),
                   jax.ShapeDtypeStruct((nt, 1, C_out), jnp.float32),
                   jax.ShapeDtypeStruct((nt, 1, C_out), jnp.float32)),
        compiler_params=_ROW_PARALLEL,
    )(*args)


def _conv3x3_stats(h1_nhwc, s1, q1, g1, b1, w2, use_im2col, inv_m, eps):
    N, H, W, C = h1_nhwc.shape
    BH = _pick_band_rows(H)
    nb = H // BH
    w_idx = (lambda n, b: (0, 0)) if w2.ndim == 2 else (lambda n, b: (0, 0, 0))

    return pl.pallas_call(
        functools.partial(_conv3x3_stats_kernel, H, W, C, BH, inv_m, eps, use_im2col),
        grid=(N, nb),
        in_specs=[pl.BlockSpec((1, H, W, C), lambda n, b: (n, 0, 0, 0)),
                  pl.BlockSpec(s1.shape, lambda n, b: (0, 0, 0)),
                  pl.BlockSpec(q1.shape, lambda n, b: (0, 0, 0)),
                  pl.BlockSpec((1, C), lambda n, b: (0, 0)),
                  pl.BlockSpec((1, C), lambda n, b: (0, 0)),
                  pl.BlockSpec(w2.shape, w_idx)],
        out_specs=(pl.BlockSpec((1, BH, W, C), lambda n, b: (n, b, 0, 0)),
                   pl.BlockSpec((1, 1, C), lambda n, b: (n * nb + b, 0, 0)),
                   pl.BlockSpec((1, 1, C), lambda n, b: (n * nb + b, 0, 0))),
        out_shape=(jax.ShapeDtypeStruct((N, H, W, C), jnp.bfloat16),
                   jax.ShapeDtypeStruct((N * nb, 1, C), jnp.float32),
                   jax.ShapeDtypeStruct((N * nb, 1, C), jnp.float32)),
        scratch_shapes=[pltpu.VMEM((H + 2, W + 2, C), jnp.bfloat16)],
        compiler_params=pltpu.CompilerParams(
            dimension_semantics=("parallel", "arbitrary"),
            vmem_limit_bytes=48 * 1024 * 1024),
    )(h1_nhwc, s1, q1, g1, b1, w2)


def _bn_residual_relu(h3, s3, q3, g, b, x2d, row_tile, inv_m, eps):
    M, C = h3.shape
    tm = _pick_row_tile(M, row_tile)
    nt = M // tm
    return pl.pallas_call(
        functools.partial(_bn_residual_relu_kernel, inv_m, eps),
        grid=(nt,),
        in_specs=[pl.BlockSpec((tm, C), lambda i: (i, 0)),
                  pl.BlockSpec(s3.shape, lambda i: (0, 0, 0)),
                  pl.BlockSpec(q3.shape, lambda i: (0, 0, 0)),
                  pl.BlockSpec((1, C), lambda i: (0, 0)),
                  pl.BlockSpec((1, C), lambda i: (0, 0)),
                  pl.BlockSpec((tm, C), lambda i: (i, 0))],
        out_specs=pl.BlockSpec((tm, C), lambda i: (i, 0)),
        out_shape=jax.ShapeDtypeStruct((M, C), jnp.float32),
        compiler_params=_ROW_PARALLEL,
    )(h3, s3, q3, g, b, x2d)


# ---------------------------------------------------------------------------
# Block forward
# ---------------------------------------------------------------------------
def block_forward_nhwc(x_nhwc, params, eps=1e-5, row_tile=1024):
    N, H, W, C_in = x_nhwc.shape
    C_mid = params["w1"].shape[1]
    C_out = params["w3"].shape[1]
    assert C_out == C_in, "residual add requires in_channels == 4*intermediate"
    M = N * H * W
    inv_m = 1.0 / M

    x2d = x_nhwc.reshape(M, C_in).astype(jnp.float32)
    w1 = params["w1"].astype(jnp.bfloat16)                            # (C_in, C_mid)
    w3 = params["w3"].astype(jnp.bfloat16)                            # (C_mid, C_out)
    use_im2col = C_mid < 128
    if use_im2col:
        w2 = params["w2"].reshape(9 * C_mid, C_mid).astype(jnp.bfloat16)
    else:
        w2 = params["w2"].reshape(9, C_mid, C_mid).astype(jnp.bfloat16)

    # pass 1: conv1 (1x1) + stats of h1 (h1 stored bf16)
    h1, s1, q1 = _pointwise_conv_stats(x2d, w1, pre=None, row_tile=row_tile,
                                       out_dtype=jnp.bfloat16, inv_m=inv_m, eps=eps)

    # pass 2: BN1 (in-kernel fold) + ReLU + conv2 (3x3, halo scratch, banded)
    h2, s2, q2 = _conv3x3_stats(h1.reshape(N, H, W, C_mid), s1, q1,
                                params["g1"], params["b1"], w2,
                                use_im2col, inv_m, eps)

    # pass 3: BN2 + ReLU + conv3 (1x1 expand) + stats of h3 (h3 kept f32)
    h3, s3, q3 = _pointwise_conv_stats(h2.reshape(M, C_mid), w3,
                                       pre=(s2, q2, params["g2"], params["b2"]),
                                       row_tile=row_tile, out_dtype=jnp.float32,
                                       inv_m=inv_m, eps=eps)

    # pass 4: BN3 + residual add (f32 identity) + ReLU
    out2d = _bn_residual_relu(h3, s3, q3, params["g3"], params["b3"], x2d,
                              row_tile=row_tile, inv_m=inv_m, eps=eps)
    return out2d.reshape(N, H, W, C_out)


def block_forward(x_nchw, params, eps=1e-5, row_tile=1024):
    """PyTorch-style NCHW boundary (transposes kept only for interface parity)."""
    x_nhwc = jnp.transpose(x_nchw, (0, 2, 3, 1))
    out = block_forward_nhwc(x_nhwc, params, eps=eps, row_tile=row_tile)
    return jnp.transpose(out, (0, 3, 1, 2))


# ---------------------------------------------------------------------------
# Params / reference / test
# ---------------------------------------------------------------------------
def init_params(key, in_channels, intermediate_channels):
    c_in, c_mid = in_channels, intermediate_channels
    c_out = 4 * c_mid
    ks = jax.random.split(key, 9)
    w1_oihw = 0.1 * jax.random.normal(ks[0], (c_mid, c_in, 1, 1), jnp.float32)
    w2_oihw = 0.1 * jax.random.normal(ks[1], (c_mid, c_mid, 3, 3), jnp.float32)
    w3_oihw = 0.1 * jax.random.normal(ks[2], (c_out, c_mid, 1, 1), jnp.float32)
    return {
        "w1": w1_oihw[:, :, 0, 0].T,                   # (C_in, C_mid)
        "w2": jnp.transpose(w2_oihw, (2, 3, 1, 0)),    # (3, 3, C_mid_in, C_mid_out)
        "w3": w3_oihw[:, :, 0, 0].T,                   # (C_mid, C_out)
        "g1": 1.0 + 0.1 * jax.random.normal(ks[3], (1, c_mid), jnp.float32),
        "b1": 0.1 * jax.random.normal(ks[4], (1, c_mid), jnp.float32),
        "g2": 1.0 + 0.1 * jax.random.normal(ks[5], (1, c_mid), jnp.float32),
        "b2": 0.1 * jax.random.normal(ks[6], (1, c_mid), jnp.float32),
        "g3": 1.0 + 0.1 * jax.random.normal(ks[7], (1, c_out), jnp.float32),
        "b3": 0.1 * jax.random.normal(ks[8], (1, c_out), jnp.float32),
    }, w1_oihw, w2_oihw, w3_oihw


def _reference_forward(x, w1, w2, w3, p, eps=1e-5):
    """Pure-JAX NCHW reference with the same precision policy as the kernel:
    bf16 MXU operands / f32 accumulation, folded one-pass training-mode BN,
    bf16 storage of h1/h2, f32 h3 and residual."""
    dn = ("NCHW", "OIHW", "NCHW")

    def conv(h, w, padding):
        return lax.conv_general_dilated(
            h.astype(jnp.bfloat16), w.astype(jnp.bfloat16), (1, 1), padding,
            dimension_numbers=dn, preferred_element_type=jnp.float32)

    def fold(h, g, b):
        mean = jnp.mean(h, axis=(0, 2, 3))
        var = jnp.maximum(jnp.mean(h * h, axis=(0, 2, 3)) - mean * mean, 0.0)
        inv = lax.rsqrt(var + eps)
        scale = g.reshape(-1) * inv
        shift = b.reshape(-1) - mean * scale
        return scale.reshape(1, -1, 1, 1), shift.reshape(1, -1, 1, 1)

    h1 = conv(x, w1, "VALID")
    sc, sh = fold(h1, p["g1"], p["b1"])
    a1 = jnp.maximum(h1.astype(jnp.bfloat16).astype(jnp.float32) * sc + sh, 0.0)
    h2 = conv(a1, w2, ((1, 1), (1, 1)))
    sc, sh = fold(h2, p["g2"], p["b2"])
    a2 = jnp.maximum(h2.astype(jnp.bfloat16).astype(jnp.float32) * sc + sh, 0.0)
    h3 = conv(a2, w3, "VALID")
    sc, sh = fold(h3, p["g3"], p["b3"])
    return jnp.maximum(h3 * sc + sh + x, 0.0)


if __name__ == "__main__":
    key = jax.random.PRNGKey(0)
    k_x, k_p = jax.random.split(key)

    intermediate_channels = 32                  # -> C_out = 128 (lane-dense residual/out)
    in_channels = 4 * intermediate_channels     # residual add valid (no downsample)
    N, H, W = 2, 16, 16

    x = jax.random.normal(k_x, (N, in_channels, H, W), jnp.float32)
    params, w1_oihw, w2_oihw, w3_oihw = init_params(k_p, in_channels,
                                                    intermediate_channels)

    fwd = jax.jit(block_forward)
    out = jax.block_until_ready(fwd(x, params))
    assert out.shape == (N, in_channels, H, W)

    ref = _reference_forward(x, w1_oihw, w2_oihw, w3_oihw, params)
    max_err = float(jnp.max(jnp.abs(out - ref)))
    assert jnp.allclose(out, ref, atol=2e-2, rtol=2e-2), (
        "mismatch vs JAX reference: max |d| = %e" % max_err)

    print("KERNEL_OK")
</pallas_src>

<mosaic_0001>
module attributes {stable_mosaic.version = 11 : i64} {
  func.func @_conv3x3_stats_kernel(%arg0: i32, %arg1: i32, %arg2: memref<1x16x16x32xbf16, #tpu.memory_space<vmem>>, %arg3: memref<2x1x32xf32, #tpu.memory_space<vmem>>, %arg4: memref<2x1x32xf32, #tpu.memory_space<vmem>>, %arg5: memref<1x32xf32, #tpu.memory_space<vmem>>, %arg6: memref<1x32xf32, #tpu.memory_space<vmem>>, %arg7: memref<288x32xbf16, #tpu.memory_space<vmem>>, %arg8: memref<1x8x16x32xbf16, #tpu.memory_space<vmem>>, %arg9: memref<1x1x32xf32, #tpu.memory_space<vmem>>, %arg10: memref<1x1x32xf32, #tpu.memory_space<vmem>>, %arg11: memref<18x18x32xbf16, #tpu.memory_space<vmem>>) attributes {dimension_semantics = [#tpu.dimension_semantics<parallel>, #tpu.dimension_semantics<arbitrary>], iteration_bounds = array<i64: 2, 2>, scalar_prefetch = 0 : i64, scratch_operands = 1 : i64, tpu.core_type = #tpu.core_type<tc>, window_params = [{transform_indices = @transform_0, window_bounds = array<i64: 1, 16, 16, 32>}, {pipeline_mode = #tpu.pipeline_mode<synchronous>, transform_indices = @transform_1, window_bounds = array<i64: 2, 1, 32>}, {pipeline_mode = #tpu.pipeline_mode<synchronous>, transform_indices = @transform_2, window_bounds = array<i64: 2, 1, 32>}, {pipeline_mode = #tpu.pipeline_mode<synchronous>, transform_indices = @transform_3, window_bounds = array<i64: 1, 32>}, {pipeline_mode = #tpu.pipeline_mode<synchronous>, transform_indices = @transform_4, window_bounds = array<i64: 1, 32>}, {pipeline_mode = #tpu.pipeline_mode<synchronous>, transform_indices = @transform_5, window_bounds = array<i64: 288, 32>}, {transform_indices = @transform_6, window_bounds = array<i64: 1, 8, 16, 32>}, {transform_indices = @transform_7, window_bounds = array<i64: 1, 1, 32>}, {transform_indices = @transform_8, window_bounds = array<i64: 1, 1, 32>}]} {
    %c0_i32 = arith.constant 0 : i32
    %0 = arith.cmpi eq, %arg1, %c0_i32 : i32
    %1 = arith.extui %0 : i1 to i32
    %c0_i32_0 = arith.constant 0 : i32
    %2 = arith.cmpi ne, %1, %c0_i32_0 : i32
    scf.if %2 {
      %c0_37 = arith.constant 0 : index
      %c0_38 = arith.constant 0 : index
      %c0_39 = arith.constant 0 : index
      %45 = vector.load %arg3[%c0_37, %c0_38, %c0_39] : memref<2x1x32xf32, #tpu.memory_space<vmem>>, vector<2x1x32xf32>
      %c0_40 = arith.constant 0 : index
      %c0_41 = arith.constant 0 : index
      %c0_42 = arith.constant 0 : index
      %46 = vector.load %arg4[%c0_40, %c0_41, %c0_42] : memref<2x1x32xf32, #tpu.memory_space<vmem>>, vector<2x1x32xf32>
      %c0_43 = arith.constant 0 : index
      %c0_44 = arith.constant 0 : index
      %47 = vector.load %arg5[%c0_43, %c0_44] : memref<1x32xf32, #tpu.memory_space<vmem>>, vector<1x32xf32>
      %c0_45 = arith.constant 0 : index
      %c0_46 = arith.constant 0 : index
      %48 = vector.load %arg6[%c0_45, %c0_46] : memref<1x32xf32, #tpu.memory_space<vmem>>, vector<1x32xf32>
      %cst_47 = arith.constant dense<0.000000e+00> : vector<32xf32>
      %49 = vector.multi_reduction <add>, %45, %cst_47 [0, 1] : vector<2x1x32xf32> to vector<32xf32>
      %cst_48 = arith.constant dense<0.000000e+00> : vector<32xf32>
      %50 = vector.multi_reduction <add>, %46, %cst_48 [0, 1] : vector<2x1x32xf32> to vector<32xf32>
      %cst_49 = arith.constant 0.001953125 : f32
      %51 = vector.broadcast %cst_49 : f32 to vector<32xf32>
      %52 = arith.mulf %49, %51 : vector<32xf32>
      %cst_50 = arith.constant 0.001953125 : f32
      %53 = vector.broadcast %cst_50 : f32 to vector<32xf32>
      %54 = arith.mulf %50, %53 : vector<32xf32>
      %55 = arith.mulf %52, %52 : vector<32xf32>
      %56 = arith.subf %54, %55 : vector<32xf32>
      %cst_51 = arith.constant 0.000000e+00 : f32
      %57 = vector.broadcast %cst_51 : f32 to vector<32xf32>
      %58 = arith.maximumf %56, %57 : vector<32xf32>
      %cst_52 = arith.constant 9.99999974E-6 : f32
      %59 = vector.broadcast %cst_52 : f32 to vector<32xf32>
      %60 = arith.addf %58, %59 : vector<32xf32>
      %61 = math.rsqrt %60 : vector<32xf32>
      %62 = vector.shape_cast %47 : vector<1x32xf32> to vector<32xf32>
      %63 = arith.mulf %62, %61 : vector<32xf32>
      %64 = vector.shape_cast %48 : vector<1x32xf32> to vector<32xf32>
      %65 = arith.mulf %52, %63 : vector<32xf32>
      %66 = arith.subf %64, %65 : vector<32xf32>
      %c0_53 = arith.constant 0 : index
      %c0_54 = arith.constant 0 : index
      %c0_55 = arith.constant 0 : index
      %c0_56 = arith.constant 0 : index
      %67 = vector.load %arg2[%c0_53, %c0_54, %c0_55, %c0_56] : memref<1x16x16x32xbf16, #tpu.memory_space<vmem>>, vector<1x16x16x32xbf16>
      %68 = vector.shape_cast %67 : vector<1x16x16x32xbf16> to vector<16x16x32xbf16>
      %69 = arith.extf %68 : vector<16x16x32xbf16> to vector<16x16x32xf32>
      %70 = vector.shape_cast %63 : vector<32xf32> to vector<1x1x32xf32>
      %71 = vector.broadcast %70 : vector<1x1x32xf32> to vector<16x16x32xf32>
      %72 = arith.mulf %69, %71 : vector<16x16x32xf32>
      %73 = vector.shape_cast %66 : vector<32xf32> to vector<1x1x32xf32>
      %74 = vector.broadcast %73 : vector<1x1x32xf32> to vector<16x16x32xf32>
      %75 = arith.addf %72, %74 : vector<16x16x32xf32>
      %cst_57 = arith.constant 0.000000e+00 : f32
      %76 = vector.broadcast %cst_57 : f32 to vector<16x16x32xf32>
      %77 = arith.maximumf %75, %76 : vector<16x16x32xf32>
      %78 = arith.truncf %77 : vector<16x16x32xf32> to vector<16x16x32xbf16>
      %cst_58 = arith.constant 0.000000e+00 : bf16
      %79 = vector.broadcast %cst_58 : bf16 to vector<1x18x32xbf16>
      %cst_59 = arith.constant 0.000000e+00 : bf16
      %80 = vector.broadcast %cst_59 : bf16 to vector<16x1x32xbf16>
      %c0_60 = arith.constant 0 : index
      %c0_61 = arith.constant 0 : index
      %c0_62 = arith.constant 0 : index
      %81 = vector.load %arg11[%c0_60, %c0_61, %c0_62] : memref<18x18x32xbf16, #tpu.memory_space<vmem>>, vector<1x18x32xbf16>
      tpu.vector_store %arg11[%c0_60, %c0_61, %c0_62], %79 {strides = array<i32>} : memref<18x18x32xbf16, #tpu.memory_space<vmem>>, vector<1x18x32xbf16>,
      %c17 = arith.constant 17 : index
      %c0_63 = arith.constant 0 : index
      %c0_64 = arith.constant 0 : index
      %82 = vector.load %arg11[%c17, %c0_63, %c0_64] : memref<18x18x32xbf16, #tpu.memory_space<vmem>>, vector<1x18x32xbf16>
      tpu.vector_store %arg11[%c17, %c0_63, %c0_64], %79 {strides = array<i32>} : memref<18x18x32xbf16, #tpu.memory_space<vmem>>, vector<1x18x32xbf16>,
      %c1_65 = arith.constant 1 : index
      %c0_66 = arith.constant 0 : index
      %c0_67 = arith.constant 0 : index
      %83 = vector.load %arg11[%c1_65, %c0_66, %c0_67] : memref<18x18x32xbf16, #tpu.memory_space<vmem>>, vector<16x1x32xbf16>
      tpu.vector_store %arg11[%c1_65, %c0_66, %c0_67], %80 {strides = array<i32>} : memref<18x18x32xbf16, #tpu.memory_space<vmem>>, vector<16x1x32xbf16>,
      %c1_68 = arith.constant 1 : index
      %c17_69 = arith.constant 17 : index
      %c0_70 = arith.constant 0 : index
      %84 = vector.load %arg11[%c1_68, %c17_69, %c0_70] : memref<18x18x32xbf16, #tpu.memory_space<vmem>>, vector<16x1x32xbf16>
      tpu.vector_store %arg11[%c1_68, %c17_69, %c0_70], %80 {strides = array<i32>} : memref<18x18x32xbf16, #tpu.memory_space<vmem>>, vector<16x1x32xbf16>,
      %c1_71 = arith.constant 1 : index
      %c1_72 = arith.constant 1 : index
      %c0_73 = arith.constant 0 : index
      %85 = vector.load %arg11[%c1_71, %c1_72, %c0_73] : memref<18x18x32xbf16, #tpu.memory_space<vmem>>, vector<16x16x32xbf16>
      tpu.vector_store %arg11[%c1_71, %c1_72, %c0_73], %78 {strides = array<i32>} : memref<18x18x32xbf16, #tpu.memory_space<vmem>>, vector<16x16x32xbf16>,
    } else {
    }
    %c8_i32 = arith.constant 8 : i32
    %3 = arith.muli %arg1, %c8_i32 : i32
    %c0_i32_1 = arith.constant 0 : i32
    %4 = arith.addi %3, %c0_i32_1 : i32
    %5 = arith.index_cast %4 : i32 to index
    %c0 = arith.constant 0 : index
    %c0_2 = arith.constant 0 : index
    %6 = vector.load %arg11[%5, %c0, %c0_2] : memref<18x18x32xbf16, #tpu.memory_space<vmem>>, vector<8x16x32xbf16>
    %c0_i32_3 = arith.constant 0 : i32
    %7 = arith.addi %3, %c0_i32_3 : i32
    %8 = arith.index_cast %7 : i32 to index
    %c1 = arith.constant 1 : index
    %c0_4 = arith.constant 0 : index
    %9 = vector.load %arg11[%8, %c1, %c0_4] : memref<18x18x32xbf16, #tpu.memory_space<vmem>>, vector<8x16x32xbf16>
    %c0_i32_5 = arith.constant 0 : i32
    %10 = arith.addi %3, %c0_i32_5 : i32
    %11 = arith.index_cast %10 : i32 to index
    %c2 = arith.constant 2 : index
    %c0_6 = arith.constant 0 : index
    %12 = vector.load %arg11[%11, %c2, %c0_6] : memref<18x18x32xbf16, #tpu.memory_space<vmem>>, vector<8x16x32xbf16>
    %c1_i32 = arith.constant 1 : i32
    %13 = arith.addi %3, %c1_i32 : i32
    %14 = arith.index_cast %13 : i32 to index
    %c0_7 = arith.constant 0 : index
    %c0_8 = arith.constant 0 : index
    %15 = vector.load %arg11[%14, %c0_7, %c0_8] : memref<18x18x32xbf16, #tpu.memory_space<vmem>>, vector<8x16x32xbf16>
    %c1_i32_9 = arith.constant 1 : i32
    %16 = arith.addi %3, %c1_i32_9 : i32
    %17 = arith.index_cast %16 : i32 to index
    %c1_10 = arith.constant 1 : index
    %c0_11 = arith.constant 0 : index
    %18 = vector.load %arg11[%17, %c1_10, %c0_11] : memref<18x18x32xbf16, #tpu.memory_space<vmem>>, vector<8x16x32xbf16>
    %c1_i32_12 = arith.constant 1 : i32
    %19 = arith.addi %3, %c1_i32_12 : i32
    %20 = arith.index_cast %19 : i32 to index
    %c2_13 = arith.constant 2 : index
    %c0_14 = arith.constant 0 : index
    %21 = vector.load %arg11[%20, %c2_13, %c0_14] : memref<18x18x32xbf16, #tpu.memory_space<vmem>>, vector<8x16x32xbf16>
    %c2_i32 = arith.constant 2 : i32
    %22 = arith.addi %3, %c2_i32 : i32
    %23 = arith.index_cast %22 : i32 to index
    %c0_15 = arith.constant 0 : index
    %c0_16 = arith.constant 0 : index
    %24 = vector.load %arg11[%23, %c0_15, %c0_16] : memref<18x18x32xbf16, #tpu.memory_space<vmem>>, vector<8x16x32xbf16>
    %c2_i32_17 = arith.constant 2 : i32
    %25 = arith.addi %3, %c2_i32_17 : i32
    %26 = arith.index_cast %25 : i32 to index
    %c1_18 = arith.constant 1 : index
    %c0_19 = arith.constant 0 : index
    %27 = vector.load %arg11[%26, %c1_18, %c0_19] : memref<18x18x32xbf16, #tpu.memory_space<vmem>>, vector<8x16x32xbf16>
    %c2_i32_20 = arith.constant 2 : i32
    %28 = arith.addi %3, %c2_i32_20 : i32
    %29 = arith.index_cast %28 : i32 to index
    %c2_21 = arith.constant 2 : index
    %c0_22 = arith.constant 0 : index
    %30 = vector.load %arg11[%29, %c2_21, %c0_22] : memref<18x18x32xbf16, #tpu.memory_space<vmem>>, vector<8x16x32xbf16>
    %31 = tpu.concatenate %6, %9, %12, %15, %18, %21, %24, %27, %30 in 2 : vector<8x16x32xbf16>, vector<8x16x32xbf16>, vector<8x16x32xbf16>, vector<8x16x32xbf16>, vector<8x16x32xbf16>, vector<8x16x32xbf16>, vector<8x16x32xbf16>, vector<8x16x32xbf16>, vector<8x16x32xbf16> -> vector<8x16x288xbf16>
    %32 = vector.shape_cast %31 : vector<8x16x288xbf16> to vector<128x288xbf16>
    %c0_23 = arith.constant 0 : index
    %c0_24 = arith.constant 0 : index
    %33 = vector.load %arg7[%c0_23, %c0_24] : memref<288x32xbf16, #tpu.memory_space<vmem>>, vector<288x32xbf16>
    %cst = arith.constant dense<0.000000e+00> : vector<128x32xf32>
    %34 = tpu.matmul %32, %33, %cst {dimension_numbers = #tpu.dot_dimension_numbers<[1], [0], [0], [1], [0, 0, 1, 1], [], []>} : vector<128x288xbf16>, vector<288x32xbf16>, vector<128x32xf32> -> vector<128x32xf32>
    %35 = vector.shape_cast %34 : vector<128x32xf32> to vector<1x8x16x32xf32>
    %36 = arith.truncf %35 : vector<1x8x16x32xf32> to vector<1x8x16x32xbf16>
    %c0_25 = arith.constant 0 : index
    %c0_26 = arith.constant 0 : index
    %c0_27 = arith.constant 0 : index
    %c0_28 = arith.constant 0 : index
    %37 = vector.load %arg8[%c0_25, %c0_26, %c0_27, %c0_28] : memref<1x8x16x32xbf16, #tpu.memory_space<vmem>>, vector<1x8x16x32xbf16>
    tpu.vector_store %arg8[%c0_25, %c0_26, %c0_27, %c0_28], %36 {strides = array<i32>} : memref<1x8x16x32xbf16, #tpu.memory_space<vmem>>, vector<1x8x16x32xbf16>,
    %cst_29 = arith.constant dense<0.000000e+00> : vector<32xf32>
    %38 = vector.multi_reduction <add>, %34, %cst_29 [0] : vector<128x32xf32> to vector<32xf32>
    %39 = vector.shape_cast %38 : vector<32xf32> to vector<1x1x32xf32>
    %c0_30 = arith.constant 0 : index
    %c0_31 = arith.constant 0 : index
    %c0_32 = arith.constant 0 : index
    %40 = vector.load %arg9[%c0_30, %c0_31, %c0_32] : memref<1x1x32xf32, #tpu.memory_space<vmem>>, vector<1x1x32xf32>
    tpu.vector_store %arg9[%c0_30, %c0_31, %c0_32], %39 {strides = array<i32>} : memref<1x1x32xf32, #tpu.memory_space<vmem>>, vector<1x1x32xf32>,
    %41 = arith.mulf %34, %34 : vector<128x32xf32>
    %cst_33 = arith.constant dense<0.000000e+00> : vector<32xf32>
    %42 = vector.multi_reduction <add>, %41, %cst_33 [0] : vector<128x32xf32> to vector<32xf32>
    %43 = vector.shape_cast %42 : vector<32xf32> to vector<1x1x32xf32>
    %c0_34 = arith.constant 0 : index
    %c0_35 = arith.constant 0 : index
    %c0_36 = arith.constant 0 : index
    %44 = vector.load %arg10[%c0_34, %c0_35, %c0_36] : memref<1x1x32xf32, #tpu.memory_space<vmem>>, vector<1x1x32xf32>
    tpu.vector_store %arg10[%c0_34, %c0_35, %c0_36], %43 {strides = array<i32>} : memref<1x1x32xf32, #tpu.memory_space<vmem>>, vector<1x1x32xf32>,
    return
  }
  func.func @transform_0(%arg0: i32, %arg1: i32) -> (i32, i32, i32, i32) {
    %c0_i32 = arith.constant 0 : i32
    %c0_i32_0 = arith.constant 0 : i32
    %c0_i32_1 = arith.constant 0 : i32
    %c0_i32_2 = arith.constant 0 : i32
    return %arg0, %c0_i32, %c0_i32_0, %c0_i32_1 : i32, i32, i32, i32
  }
  func.func @transform_1(%arg0: i32, %arg1: i32) -> (i32, i32, i32) {
    %c0_i32 = arith.constant 0 : i32
    %c0_i32_0 = arith.constant 0 : i32
    %c0_i32_1 = arith.constant 0 : i32
    %c0_i32_2 = arith.constant 0 : i32
    return %c0_i32, %c0_i32_0, %c0_i32_1 : i32, i32, i32
  }
  func.func @transform_2(%arg0: i32, %arg1: i32) -> (i32, i32, i32) {
    %c0_i32 = arith.constant 0 : i32
    %c0_i32_0 = arith.constant 0 : i32
    %c0_i32_1 = arith.constant 0 : i32
    %c0_i32_2 = arith.constant 0 : i32
    return %c0_i32, %c0_i32_0, %c0_i32_1 : i32, i32, i32
  }
  func.func @transform_3(%arg0: i32, %arg1: i32) -> (i32, i32) {
    %c0_i32 = arith.constant 0 : i32
    %c0_i32_0 = arith.constant 0 : i32
    %c0_i32_1 = arith.constant 0 : i32
    return %c0_i32, %c0_i32_0 : i32, i32
  }
  func.func @transform_4(%arg0: i32, %arg1: i32) -> (i32, i32) {
    %c0_i32 = arith.constant 0 : i32
    %c0_i32_0 = arith.constant 0 : i32
    %c0_i32_1 = arith.constant 0 : i32
    return %c0_i32, %c0_i32_0 : i32, i32
  }
  func.func @transform_5(%arg0: i32, %arg1: i32) -> (i32, i32) {
    %c0_i32 = arith.constant 0 : i32
    %c0_i32_0 = arith.constant 0 : i32
    %c0_i32_1 = arith.constant 0 : i32
    return %c0_i32, %c0_i32_0 : i32, i32
  }
  func.func @transform_6(%arg0: i32, %arg1: i32) -> (i32, i32, i32, i32) {
    %c0_i32 = arith.constant 0 : i32
    %c0_i32_0 = arith.constant 0 : i32
    %c0_i32_1 = arith.constant 0 : i32
    return %arg0, %arg1, %c0_i32, %c0_i32_0 : i32, i32, i32, i32
  }
  func.func @transform_7(%arg0: i32, %arg1: i32) -> (i32, i32, i32) {
    %c2_i32 = arith.constant 2 : i32
    %0 = arith.muli %arg0, %c2_i32 : i32
    %1 = arith.addi %0, %arg1 : i32
    %c0_i32 = arith.constant 0 : i32
    %c0_i32_0 = arith.constant 0 : i32
    %c0_i32_1 = arith.constant 0 : i32
    return %1, %c0_i32, %c0_i32_0 : i32, i32, i32
  }
  func.func @transform_8(%arg0: i32, %arg1: i32) -> (i32, i32, i32) {
    %c2_i32 = arith.constant 2 : i32
    %0 = arith.muli %arg0, %c2_i32 : i32
    %1 = arith.addi %0, %arg1 : i32
    %c0_i32 = arith.constant 0 : i32
    %c0_i32_0 = arith.constant 0 : i32
    %c0_i32_1 = arith.constant 0 : i32
    return %1, %c0_i32, %c0_i32_0 : i32, i32, i32
  }
}

module attributes {stable_mosaic.version = 11 : i64} {
  func.func @_pointwise_conv_stats_kernel(%arg0: i32, %arg1: memref<256x128xf32, #tpu.memory_space<vmem>>, %arg2: memref<128x32xbf16, #tpu.memory_space<vmem>>, %arg3: memref<256x32xbf16, #tpu.memory_space<vmem>>, %arg4: memref<1x1x32xf32, #tpu.memory_space<vmem>>, %arg5: memref<1x1x32xf32, #tpu.memory_space<vmem>>) attributes {dimension_semantics = [#tpu.dimension_semantics<parallel>], iteration_bounds = array<i64: 2>, scalar_prefetch = 0 : i64, scratch_operands = 0 : i64, tpu.core_type = #tpu.core_type<tc>, window_params = [{transform_indices = @transform_0, window_bounds = array<i64: 256, 128>}, {pipeline_mode = #tpu.pipeline_mode<synchronous>, transform_indices = @transform_1, window_bounds = array<i64: 128, 32>}, {transform_indices = @transform_2, window_bounds = array<i64: 256, 32>}, {transform_indices = @transform_3, window_bounds = array<i64: 1, 1, 32>}, {transform_indices = @transform_4, window_bounds = array<i64: 1, 1, 32>}]} {
    %c0 = arith.constant 0 : index
    %c0_0 = arith.constant 0 : index
    %0 = vector.load %arg1[%c0, %c0_0] : memref<256x128xf32, #tpu.memory_space<vmem>>, vector<256x128xf32>
    %1 = arith.truncf %0 : vector<256x128xf32> to vector<256x128xbf16>
    %c0_1 = arith.constant 0 : index
    %c0_2 = arith.constant 0 : index
    %2 = vector.load %arg2[%c0_1, %c0_2] : memref<128x32xbf16, #tpu.memory_space<vmem>>, vector<128x32xbf16>
    %cst = arith.constant dense<0.000000e+00> : vector<256x32xf32>
    %3 = tpu.matmul %1, %2, %cst {dimension_numbers = #tpu.dot_dimension_numbers<[1], [0], [0], [1], [0, 0, 1, 1], [], []>} : vector<256x128xbf16>, vector<128x32xbf16>, vector<256x32xf32> -> vector<256x32xf32>
    %4 = arith.truncf %3 : vector<256x32xf32> to vector<256x32xbf16>
    %c0_3 = arith.constant 0 : index
    %c0_4 = arith.constant 0 : index
    %5 = vector.load %arg3[%c0_3, %c0_4] : memref<256x32xbf16, #tpu.memory_space<vmem>>, vector<256x32xbf16>
    tpu.vector_store %arg3[%c0_3, %c0_4], %4 {strides = array<i32>} : memref<256x32xbf16, #tpu.memory_space<vmem>>, vector<256x32xbf16>,
    %cst_5 = arith.constant dense<0.000000e+00> : vector<32xf32>
    %6 = vector.multi_reduction <add>, %3, %cst_5 [0] : vector<256x32xf32> to vector<32xf32>
    %7 = vector.shape_cast %6 : vector<32xf32> to vector<1x1x32xf32>
    %c0_6 = arith.constant 0 : index
    %c0_7 = arith.constant 0 : index
    %c0_8 = arith.constant 0 : index
    %8 = vector.load %arg4[%c0_6, %c0_7, %c0_8] : memref<1x1x32xf32, #tpu.memory_space<vmem>>, vector<1x1x32xf32>
    tpu.vector_store %arg4[%c0_6, %c0_7, %c0_8], %7 {strides = array<i32>} : memref<1x1x32xf32, #tpu.memory_space<vmem>>, vector<1x1x32xf32>,
    %9 = arith.mulf %3, %3 : vector<256x32xf32>
    %cst_9 = arith.constant dense<0.000000e+00> : vector<32xf32>
    %10 = vector.multi_reduction <add>, %9, %cst_9 [0] : vector<256x32xf32> to vector<32xf32>
    %11 = vector.shape_cast %10 : vector<32xf32> to vector<1x1x32xf32>
    %c0_10 = arith.constant 0 : index
    %c0_11 = arith.constant 0 : index
    %c0_12 = arith.constant 0 : index
    %12 = vector.load %arg5[%c0_10, %c0_11, %c0_12] : memref<1x1x32xf32, #tpu.memory_space<vmem>>, vector<1x1x32xf32>
    tpu.vector_store %arg5[%c0_10, %c0_11, %c0_12], %11 {strides = array<i32>} : memref<1x1x32xf32, #tpu.memory_space<vmem>>, vector<1x1x32xf32>,
    return
  }
  func.func @transform_0(%arg0: i32) -> (i32, i32) {
    %c0_i32 = arith.constant 0 : i32
    %c0_i32_0 = arith.constant 0 : i32
    return %arg0, %c0_i32 : i32, i32
  }
  func.func @transform_1(%arg0: i32) -> (i32, i32) {
    %c0_i32 = arith.constant 0 : i32
    %c0_i32_0 = arith.constant 0 : i32
    %c0_i32_1 = arith.constant 0 : i32
    return %c0_i32, %c0_i32_0 : i32, i32
  }
  func.func @transform_2(%arg0: i32) -> (i32, i32) {
    %c0_i32 = arith.constant 0 : i32
    %c0_i32_0 = arith.constant 0 : i32
    return %arg0, %c0_i32 : i32, i32
  }
  func.func @transform_3(%arg0: i32) -> (i32, i32, i32) {
    %c0_i32 = arith.constant 0 : i32
    %c0_i32_0 = arith.constant 0 : i32
    %c0_i32_1 = arith.constant 0 : i32
    return %arg0, %c0_i32, %c0_i32_0 : i32, i32, i32
  }
  func.func @transform_4(%arg0: i32) -> (i32, i32, i32) {
    %c0_i32 = arith.constant 0 : i32
    %c0_i32_0 = arith.constant 0 : i32
    %c0_i32_1 = arith.constant 0 : i32
    return %arg0, %c0_i32, %c0_i32_0 : i32, i32, i32
  }
}

module attributes {stable_mosaic.version = 11 : i64} {
  func.func @_pointwise_conv_stats_kernel(%arg0: i32, %arg1: memref<256x32xbf16, #tpu.memory_space<vmem>>, %arg2: memref<4x1x32xf32, #tpu.memory_space<vmem>>, %arg3: memref<4x1x32xf32, #tpu.memory_space<vmem>>, %arg4: memref<1x32xf32, #tpu.memory_space<vmem>>, %arg5: memref<1x32xf32, #tpu.memory_space<vmem>>, %arg6: memref<32x128xbf16, #tpu.memory_space<vmem>>, %arg7: memref<256x128xf32, #tpu.memory_space<vmem>>, %arg8: memref<1x1x128xf32, #tpu.memory_space<vmem>>, %arg9: memref<1x1x128xf32, #tpu.memory_space<vmem>>) attributes {dimension_semantics = [#tpu.dimension_semantics<parallel>], iteration_bounds = array<i64: 2>, scalar_prefetch = 0 : i64, scratch_operands = 0 : i64, tpu.core_type = #tpu.core_type<tc>, window_params = [{transform_indices = @transform_0, window_bounds = array<i64: 256, 32>}, {pipeline_mode = #tpu.pipeline_mode<synchronous>, transform_indices = @transform_1, window_bounds = array<i64: 4, 1, 32>}, {pipeline_mode = #tpu.pipeline_mode<synchronous>, transform_indices = @transform_2, window_bounds = array<i64: 4, 1, 32>}, {pipeline_mode = #tpu.pipeline_mode<synchronous>, transform_indices = @transform_3, window_bounds = array<i64: 1, 32>}, {pipeline_mode = #tpu.pipeline_mode<synchronous>, transform_indices = @transform_4, window_bounds = array<i64: 1, 32>}, {pipeline_mode = #tpu.pipeline_mode<synchronous>, transform_indices = @transform_5, window_bounds = array<i64: 32, 128>}, {transform_indices = @transform_6, window_bounds = array<i64: 256, 128>}, {transform_indices = @transform_7, window_bounds = array<i64: 1, 1, 128>}, {transform_indices = @transform_8, window_bounds = array<i64: 1, 1, 128>}]} {
    %c0 = arith.constant 0 : index
    %c0_0 = arith.constant 0 : index
    %c0_1 = arith.constant 0 : index
    %0 = vector.load %arg2[%c0, %c0_0, %c0_1] : memref<4x1x32xf32, #tpu.memory_space<vmem>>, vector<4x1x32xf32>
    %c0_2 = arith.constant 0 : index
    %c0_3 = arith.constant 0 : index
    %c0_4 = arith.constant 0 : index
    %1 = vector.load %arg3[%c0_2, %c0_3, %c0_4] : memref<4x1x32xf32, #tpu.memory_space<vmem>>, vector<4x1x32xf32>
    %c0_5 = arith.constant 0 : index
    %c0_6 = arith.constant 0 : index
    %2 = vector.load %arg4[%c0_5, %c0_6] : memref<1x32xf32, #tpu.memory_space<vmem>>, vector<1x32xf32>
    %c0_7 = arith.constant 0 : index
    %c0_8 = arith.constant 0 : index
    %3 = vector.load %arg5[%c0_7, %c0_8] : memref<1x32xf32, #tpu.memory_space<vmem>>, vector<1x32xf32>
    %cst = arith.constant dense<0.000000e+00> : vector<32xf32>
    %4 = vector.multi_reduction <add>, %0, %cst [0, 1] : vector<4x1x32xf32> to vector<32xf32>
    %cst_9 = arith.constant dense<0.000000e+00> : vector<32xf32>
    %5 = vector.multi_reduction <add>, %1, %cst_9 [0, 1] : vector<4x1x32xf32> to vector<32xf32>
    %cst_10 = arith.constant 0.001953125 : f32
    %6 = vector.broadcast %cst_10 : f32 to vector<32xf32>
    %7 = arith.mulf %4, %6 : vector<32xf32>
    %cst_11 = arith.constant 0.001953125 : f32
    %8 = vector.broadcast %cst_11 : f32 to vector<32xf32>
    %9 = arith.mulf %5, %8 : vector<32xf32>
    %10 = arith.mulf %7, %7 : vector<32xf32>
    %11 = arith.subf %9, %10 : vector<32xf32>
    %cst_12 = arith.constant 0.000000e+00 : f32
    %12 = vector.broadcast %cst_12 : f32 to vector<32xf32>
    %13 = arith.maximumf %11, %12 : vector<32xf32>
    %cst_13 = arith.constant 9.99999974E-6 : f32
    %14 = vector.broadcast %cst_13 : f32 to vector<32xf32>
    %15 = arith.addf %13, %14 : vector<32xf32>
    %16 = math.rsqrt %15 : vector<32xf32>
    %17 = vector.shape_cast %2 : vector<1x32xf32> to vector<32xf32>
    %18 = arith.mulf %17, %16 : vector<32xf32>
    %19 = vector.shape_cast %3 : vector<1x32xf32> to vector<32xf32>
    %20 = arith.mulf %7, %18 : vector<32xf32>
    %21 = arith.subf %19, %20 : vector<32xf32>
    %c0_14 = arith.constant 0 : index
    %c0_15 = arith.constant 0 : index
    %22 = vector.load %arg1[%c0_14, %c0_15] : memref<256x32xbf16, #tpu.memory_space<vmem>>, vector<256x32xbf16>
    %23 = arith.extf %22 : vector<256x32xbf16> to vector<256x32xf32>
    %24 = vector.shape_cast %18 : vector<32xf32> to vector<1x32xf32>
    %25 = vector.broadcast %24 : vector<1x32xf32> to vector<256x32xf32>
    %26 = arith.mulf %23, %25 : vector<256x32xf32>
    %27 = vector.shape_cast %21 : vector<32xf32> to vector<1x32xf32>
    %28 = vector.broadcast %27 : vector<1x32xf32> to vector<256x32xf32>
    %29 = arith.addf %26, %28 : vector<256x32xf32>
    %cst_16 = arith.constant 0.000000e+00 : f32
    %30 = vector.broadcast %cst_16 : f32 to vector<256x32xf32>
    %31 = arith.maximumf %29, %30 : vector<256x32xf32>
    %32 = arith.truncf %31 : vector<256x32xf32> to vector<256x32xbf16>
    %c0_17 = arith.constant 0 : index
    %c0_18 = arith.constant 0 : index
    %33 = vector.load %arg6[%c0_17, %c0_18] : memref<32x128xbf16, #tpu.memory_space<vmem>>, vector<32x128xbf16>
    %cst_19 = arith.constant dense<0.000000e+00> : vector<256x128xf32>
    %34 = tpu.matmul %32, %33, %cst_19 {dimension_numbers = #tpu.dot_dimension_numbers<[1], [0], [0], [1], [0, 0, 1, 1], [], []>} : vector<256x32xbf16>, vector<32x128xbf16>, vector<256x128xf32> -> vector<256x128xf32>
    %c0_20 = arith.constant 0 : index
    %c0_21 = arith.constant 0 : index
    %35 = vector.load %arg7[%c0_20, %c0_21] : memref<256x128xf32, #tpu.memory_space<vmem>>, vector<256x128xf32>
    tpu.vector_store %arg7[%c0_20, %c0_21], %34 {strides = array<i32>} : memref<256x128xf32, #tpu.memory_space<vmem>>, vector<256x128xf32>,
    %cst_22 = arith.constant dense<0.000000e+00> : vector<128xf32>
    %36 = vector.multi_reduction <add>, %34, %cst_22 [0] : vector<256x128xf32> to vector<128xf32>
    %37 = vector.shape_cast %36 : vector<128xf32> to vector<1x1x128xf32>
    %c0_23 = arith.constant 0 : index
    %c0_24 = arith.constant 0 : index
    %c0_25 = arith.constant 0 : index
    %38 = vector.load %arg8[%c0_23, %c0_24, %c0_25] : memref<1x1x128xf32, #tpu.memory_space<vmem>>, vector<1x1x128xf32>
    tpu.vector_store %arg8[%c0_23, %c0_24, %c0_25], %37 {strides = array<i32>} : memref<1x1x128xf32, #tpu.memory_space<vmem>>, vector<1x1x128xf32>,
    %39 = arith.mulf %34, %34 : vector<256x128xf32>
    %cst_26 = arith.constant dense<0.000000e+00> : vector<128xf32>
    %40 = vector.multi_reduction <add>, %39, %cst_26 [0] : vector<256x128xf32> to vector<128xf32>
    %41 = vector.shape_cast %40 : vector<128xf32> to vector<1x1x128xf32>
    %c0_27 = arith.constant 0 : index
    %c0_28 = arith.constant 0 : index
    %c0_29 = arith.constant 0 : index
    %42 = vector.load %arg9[%c0_27, %c0_28, %c0_29] : memref<1x1x128xf32, #tpu.memory_space<vmem>>, vector<1x1x128xf32>
    tpu.vector_store %arg9[%c0_27, %c0_28, %c0_29], %41 {strides = array<i32>} : memref<1x1x128xf32, #tpu.memory_space<vmem>>, vector<1x1x128xf32>,
    return
  }
  func.func @transform_0(%arg0: i32) -> (i32, i32) {
    %c0_i32 = arith.constant 0 : i32
    %c0_i32_0 = arith.constant 0 : i32
    return %arg0, %c0_i32 : i32, i32
  }
  func.func @transform_1(%arg0: i32) -> (i32, i32, i32) {
    %c0_i32 = arith.constant 0 : i32
    %c0_i32_0 = arith.constant 0 : i32
    %c0_i32_1 = arith.constant 0 : i32
    %c0_i32_2 = arith.constant 0 : i32
    return %c0_i32, %c0_i32_0, %c0_i32_1 : i32, i32, i32
  }
  func.func @transform_2(%arg0: i32) -> (i32, i32, i32) {
    %c0_i32 = arith.constant 0 : i32
    %c0_i32_0 = arith.constant 0 : i32
    %c0_i32_1 = arith.constant 0 : i32
    %c0_i32_2 = arith.constant 0 : i32
    return %c0_i32, %c0_i32_0, %c0_i32_1 : i32, i32, i32
  }
  func.func @transform_3(%arg0: i32) -> (i32, i32) {
    %c0_i32 = arith.constant 0 : i32
    %c0_i32_0 = arith.constant 0 : i32
    %c0_i32_1 = arith.constant 0 : i32
    return %c0_i32, %c0_i32_0 : i32, i32
  }
  func.func @transform_4(%arg0: i32) -> (i32, i32) {
    %c0_i32 = arith.constant 0 : i32
    %c0_i32_0 = arith.constant 0 : i32
    %c0_i32_1 = arith.constant 0 : i32
    return %c0_i32, %c0_i32_0 : i32, i32
  }
  func.func @transform_5(%arg0: i32) -> (i32, i32) {
    %c0_i32 = arith.constant 0 : i32
    %c0_i32_0 = arith.constant 0 : i32
    %c0_i32_1 = arith.constant 0 : i32
    return %c0_i32, %c0_i32_0 : i32, i32
  }
  func.func @transform_6(%arg0: i32) -> (i32, i32) {
    %c0_i32 = arith.constant 0 : i32
    %c0_i32_0 = arith.constant 0 : i32
    return %arg0, %c0_i32 : i32, i32
  }
  func.func @transform_7(%arg0: i32) -> (i32, i32, i32) {
    %c0_i32 = arith.constant 0 : i32
    %c0_i32_0 = arith.constant 0 : i32
    %c0_i32_1 = arith.constant 0 : i32
    return %arg0, %c0_i32, %c0_i32_0 : i32, i32, i32
  }
  func.func @transform_8(%arg0: i32) -> (i32, i32, i32) {
    %c0_i32 = arith.constant 0 : i32
    %c0_i32_0 = arith.constant 0 : i32
    %c0_i32_1 = arith.constant 0 : i32
    return %arg0, %c0_i32, %c0_i32_0 : i32, i32, i32
  }
}

module attributes {stable_mosaic.version = 11 : i64} {
  func.func @_bn_residual_relu_kernel(%arg0: i32, %arg1: memref<256x128xf32, #tpu.memory_space<vmem>>, %arg2: memref<2x1x128xf32, #tpu.memory_space<vmem>>, %arg3: memref<2x1x128xf32, #tpu.memory_space<vmem>>, %arg4: memref<1x128xf32, #tpu.memory_space<vmem>>, %arg5: memref<1x128xf32, #tpu.memory_space<vmem>>, %arg6: memref<256x128xf32, #tpu.memory_space<vmem>>, %arg7: memref<256x128xf32, #tpu.memory_space<vmem>>) attributes {dimension_semantics = [#tpu.dimension_semantics<parallel>], iteration_bounds = array<i64: 2>, scalar_prefetch = 0 : i64, scratch_operands = 0 : i64, tpu.core_type = #tpu.core_type<tc>, window_params = [{transform_indices = @transform_0, window_bounds = array<i64: 256, 128>}, {pipeline_mode = #tpu.pipeline_mode<synchronous>, transform_indices = @transform_1, window_bounds = array<i64: 2, 1, 128>}, {pipeline_mode = #tpu.pipeline_mode<synchronous>, transform_indices = @transform_2, window_bounds = array<i64: 2, 1, 128>}, {pipeline_mode = #tpu.pipeline_mode<synchronous>, transform_indices = @transform_3, window_bounds = array<i64: 1, 128>}, {pipeline_mode = #tpu.pipeline_mode<synchronous>, transform_indices = @transform_4, window_bounds = array<i64: 1, 128>}, {transform_indices = @transform_5, window_bounds = array<i64: 256, 128>}, {transform_indices = @transform_6, window_bounds = array<i64: 256, 128>}]} {
    %c0 = arith.constant 0 : index
    %c0_0 = arith.constant 0 : index
    %c0_1 = arith.constant 0 : index
    %0 = vector.load %arg2[%c0, %c0_0, %c0_1] : memref<2x1x128xf32, #tpu.memory_space<vmem>>, vector<2x1x128xf32>
    %c0_2 = arith.constant 0 : index
    %c0_3 = arith.constant 0 : index
    %c0_4 = arith.constant 0 : index
    %1 = vector.load %arg3[%c0_2, %c0_3, %c0_4] : memref<2x1x128xf32, #tpu.memory_space<vmem>>, vector<2x1x128xf32>
    %c0_5 = arith.constant 0 : index
    %c0_6 = arith.constant 0 : index
    %2 = vector.load %arg4[%c0_5, %c0_6] : memref<1x128xf32, #tpu.memory_space<vmem>>, vector<1x128xf32>
    %c0_7 = arith.constant 0 : index
    %c0_8 = arith.constant 0 : index
    %3 = vector.load %arg5[%c0_7, %c0_8] : memref<1x128xf32, #tpu.memory_space<vmem>>, vector<1x128xf32>
    %cst = arith.constant dense<0.000000e+00> : vector<128xf32>
    %4 = vector.multi_reduction <add>, %0, %cst [0, 1] : vector<2x1x128xf32> to vector<128xf32>
    %cst_9 = arith.constant dense<0.000000e+00> : vector<128xf32>
    %5 = vector.multi_reduction <add>, %1, %cst_9 [0, 1] : vector<2x1x128xf32> to vector<128xf32>
    %cst_10 = arith.constant 0.001953125 : f32
    %6 = vector.broadcast %cst_10 : f32 to vector<128xf32>
    %7 = arith.mulf %4, %6 : vector<128xf32>
    %cst_11 = arith.constant 0.001953125 : f32
    %8 = vector.broadcast %cst_11 : f32 to vector<128xf32>
    %9 = arith.mulf %5, %8 : vector<128xf32>
    %10 = arith.mulf %7, %7 : vector<128xf32>
    %11 = arith.subf %9, %10 : vector<128xf32>
    %cst_12 = arith.constant 0.000000e+00 : f32
    %12 = vector.broadcast %cst_12 : f32 to vector<128xf32>
    %13 = arith.maximumf %11, %12 : vector<128xf32>
    %cst_13 = arith.constant 9.99999974E-6 : f32
    %14 = vector.broadcast %cst_13 : f32 to vector<128xf32>
    %15 = arith.addf %13, %14 : vector<128xf32>
    %16 = math.rsqrt %15 : vector<128xf32>
    %17 = vector.shape_cast %2 : vector<1x128xf32> to vector<128xf32>
    %18 = arith.mulf %17, %16 : vector<128xf32>
    %19 = vector.shape_cast %3 : vector<1x128xf32> to vector<128xf32>
    %20 = arith.mulf %7, %18 : vector<128xf32>
    %21 = arith.subf %19, %20 : vector<128xf32>
    %c0_14 = arith.constant 0 : index
    %c0_15 = arith.constant 0 : index
    %22 = vector.load %arg1[%c0_14, %c0_15] : memref<256x128xf32, #tpu.memory_space<vmem>>, vector<256x128xf32>
    %23 = vector.shape_cast %18 : vector<128xf32> to vector<1x128xf32>
    %24 = vector.broadcast %23 : vector<1x128xf32> to vector<256x128xf32>
    %25 = arith.mulf %22, %24 : vector<256x128xf32>
    %26 = vector.shape_cast %21 : vector<128xf32> to vector<1x128xf32>
    %27 = vector.broadcast %26 : vector<1x128xf32> to vector<256x128xf32>
    %28 = arith.addf %25, %27 : vector<256x128xf32>
    %c0_16 = arith.constant 0 : index
    %c0_17 = arith.constant 0 : index
    %29 = vector.load %arg6[%c0_16, %c0_17] : memref<256x128xf32, #tpu.memory_space<vmem>>, vector<256x128xf32>
    %30 = arith.addf %28, %29 : vector<256x128xf32>
    %cst_18 = arith.constant 0.000000e+00 : f32
    %31 = vector.broadcast %cst_18 : f32 to vector<256x128xf32>
    %32 = arith.maximumf %30, %31 : vector<256x128xf32>
    %c0_19 = arith.constant 0 : index
    %c0_20 = arith.constant 0 : index
    %33 = vector.load %arg7[%c0_19, %c0_20] : memref<256x128xf32, #tpu.memory_space<vmem>>, vector<256x128xf32>
    tpu.vector_store %arg7[%c0_19, %c0_20], %32 {strides = array<i32>} : memref<256x128xf32, #tpu.memory_space<vmem>>, vector<256x128xf32>,
    return
  }
  func.func @transform_0(%arg0: i32) -> (i32, i32) {
    %c0_i32 = arith.constant 0 : i32
    %c0_i32_0 = arith.constant 0 : i32
    return %arg0, %c0_i32 : i32, i32
  }
  func.func @transform_1(%arg0: i32) -> (i32, i32, i32) {
    %c0_i32 = arith.constant 0 : i32
    %c0_i32_0 = arith.constant 0 : i32
    %c0_i32_1 = arith.constant 0 : i32
    %c0_i32_2 = arith.constant 0 : i32
    return %c0_i32, %c0_i32_0, %c0_i32_1 : i32, i32, i32
  }
  func.func @transform_2(%arg0: i32) -> (i32, i32, i32) {
    %c0_i32 = arith.constant 0 : i32
    %c0_i32_0 = arith.constant 0 : i32
    %c0_i32_1 = arith.constant 0 : i32
    %c0_i32_2 = arith.constant 0 : i32
    return %c0_i32, %c0_i32_0, %c0_i32_1 : i32, i32, i32
  }
  func.func @transform_3(%arg0: i32) -> (i32, i32) {
    %c0_i32 = arith.constant 0 : i32
    %c0_i32_0 = arith.constant 0 : i32
    %c0_i32_1 = arith.constant 0 : i32
    return %c0_i32, %c0_i32_0 : i32, i32
  }
  func.func @transform_4(%arg0: i32) -> (i32, i32) {
    %c0_i32 = arith.constant 0 : i32
    %c0_i32_0 = arith.constant 0 : i32
    %c0_i32_1 = arith.constant 0 : i32
    return %c0_i32, %c0_i32_0 : i32, i32
  }
  func.func @transform_5(%arg0: i32) -> (i32, i32) {
    %c0_i32 = arith.constant 0 : i32
    %c0_i32_0 = arith.constant 0 : i32
    return %arg0, %c0_i32 : i32, i32
  }
  func.func @transform_6(%arg0: i32) -> (i32, i32) {
    %c0_i32 = arith.constant 0 : i32
    %c0_i32_0 = arith.constant 0 : i32
    return %arg0, %c0_i32 : i32, i32
  }
}

</mosaic_0001>

<llo_original>
// kernel: block_forward.7
$region0: #{block_forward.7}
  #allocation0 [shape = 'u32[]', space=smem, size = 0x4, offset = 0x4, fixed_abs, tag = 'smem constant byte address 0x4 - core index']
  #allocation1 [shape = 'u32[144,128]{1,0:T(1,128)}', space=vmem, size = 0x12000, scoped, tag = 'internal scratch']
  %s0 = inlined_call_operand.vmem [shape: f32[512,128], index: 0, kind: input, shape index: {}]
  %s1 = inlined_call_operand.vmem [shape: f32[2,1,128], index: 1, kind: input, shape index: {}]
  %s2 = inlined_call_operand.vmem [shape: f32[2,1,128], index: 2, kind: input, shape index: {}]
  %s3 = inlined_call_operand.vmem [shape: f32[1,128], index: 3, kind: input, shape index: {}]
  %s4 = inlined_call_operand.vmem [shape: f32[1,128], index: 4, kind: input, shape index: {}]
  %s5 = inlined_call_operand.vmem [shape: f32[512,128], index: 5, kind: input, shape index: {}]
  %s6 = inlined_call_operand.hbm [shape: f32[512,128], index: 6, kind: output, shape index: {}]
  %s7 = sld [smem:[#allocation0]]
  $region57: #{block_forward.7} parent=0
    _
  %s9 = ssub.s32 1, %s7
  %s10 = scalar_select 0, %s9, %s7
  $region1: #{block_forward.7} parent=0
    #allocation2 [shape = 'u8[262144]{0}', space=vmem, size = 0x40000, scoped, tag = 'output window, operand 0']
    #allocation3 [shape = 's32[2]{0}', space=sflag, size = 0x8, scoped, tag = 'scoped memory for block_forward.7']
    %11 = vsyncpa [#allocation3], 0
    %s12 = scalar_lea.sflag [#allocation3], 1
    %13 = vsyncpa %s12, 0
    loop: start=0, step=1, limit=4
    $region2: #{block_forward.7} parent=1 // loop_pre_header
      _
    $region3: #{block_forward.7} parent=1 // loop_header
      %s15 = sphi 0, %s19
      %p16 = scmp.ge.s32.totalorder %s15, 4
      %s25 = sphi 0, %s27
      %s28 = sphi 0, %s25
      %s29 = sphi 0, %s28
      %s45 = sphi 0, %s29
      %s49 = sphi 0, %s49
      %s51 = sphi 0, %s49
      %s52 = sphi 0, %s51
      %s66 = sphi 0, %s52
      %s70 = sphi 0, %s70
      %s72 = sphi 0, %s70
      %s73 = sphi 0, %s72
      %s87 = sphi 0, %s73
      %s91 = sphi 0, %s91
      %s93 = sphi 0, %s91
      %s94 = sphi 0, %s93
      %s108 = sphi 0, %s94
      %s112 = sphi 0, %s112
      %s114 = sphi 0, %s112
      %s115 = sphi 0, %s114
      %s129 = sphi 0, %s115
      %s135 = sphi 0, %s137
      %s138 = sphi 0, %s135
      %s139 = sphi 0, %s138
      %s155 = sphi 0, %s139
      %s161 = sphi 0, %s163
      %s164 = sphi 0, %s161
      %s165 = sphi 0, %s164
      %s181 = sphi 0, %s165
    $region4: #{block_forward.7} parent=1 // loop_header_branch
      %18 = sbr.rel (%p16) target = $region8
    $region5: #{block_forward.7} parent=1 // loop_body
      %s20 = ssub.s32 %s15, 1
      %s21 = ssub.s32 %s15, 2
      %s22 = sadd.s32 %s15, 1
      %s23 = ssub.s32 %s15, %s22
      %p24 = scmp.eq.s32.totalorder %s23, 0
      %s26 = sadd.s32 %s25, 1
      %s27 = scalar_select %p24, %s25, %s26
      %p30 = pneg %p24
      %p31 = scmp.eq.s32.totalorder %s15, 1
      %p32 = por %p30, %p31
      %p33 = scmp.ne.s32.totalorder %s25, %s28
      %p34 = scmp.eq.s32.totalorder %s15, 0
      %p35 = por %p33, %p34
      %p36 = scmp.ne.s32.totalorder %s25, %s28
      %p37 = scmp.eq.s32.totalorder %s20, 1
      %p38 = por %p36, %p37
      %p39 = scmp.ne.s32.totalorder %s28, %s29
      %p40 = scmp.eq.s32.totalorder %s20, 0
      %p41 = por %p39, %p40
      %p42 = scmp.ne.s32.totalorder %s28, %s29
      %p43 = scmp.eq.s32.totalorder %s21, 1
      %p44 = por %p42, %p43
      %p46 = scmp.ne.s32.totalorder %s29, %s45
      %p47 = scmp.eq.s32.totalorder %s21, 0
      %p48 = por %p46, %p47
      %s50 = sadd.s32 %s49, 1
      %p53 = scmp.eq.s32.totalorder %s15, 1
      %p54 = scmp.ne.s32.totalorder %s49, %s51
      %p55 = scmp.eq.s32.totalorder %s15, 0
      %p56 = por %p54, %p55
      %p57 = scmp.ne.s32.totalorder %s49, %s51
      %p58 = scmp.eq.s32.totalorder %s20, 1
      %p59 = por %p57, %p58
      %p60 = scmp.ne.s32.totalorder %s51, %s52
      %p61 = scmp.eq.s32.totalorder %s20, 0
      %p62 = por %p60, %p61
      %p63 = scmp.ne.s32.totalorder %s51, %s52
      %p64 = scmp.eq.s32.totalorder %s21, 1
      %p65 = por %p63, %p64
      %p67 = scmp.ne.s32.totalorder %s52, %s66
      %p68 = scmp.eq.s32.totalorder %s21, 0
      %p69 = por %p67, %p68
      %s71 = sadd.s32 %s70, 1
      %p74 = scmp.eq.s32.totalorder %s15, 1
      %p75 = scmp.ne.s32.totalorder %s70, %s72
      %p76 = scmp.eq.s32.totalorder %s15, 0
      %p77 = por %p75, %p76
      %p78 = scmp.ne.s32.totalorder %s70, %s72
      %p79 = scmp.eq.s32.totalorder %s20, 1
      %p80 = por %p78, %p79
      %p81 = scmp.ne.s32.totalorder %s72, %s73
      %p82 = scmp.eq.s32.totalorder %s20, 0
      %p83 = por %p81, %p82
      %p84 = scmp.ne.s32.totalorder %s72, %s73
      %p85 = scmp.eq.s32.totalorder %s21, 1
      %p86 = por %p84, %p85
      %p88 = scmp.ne.s32.totalorder %s73, %s87
      %p89 = scmp.eq.s32.totalorder %s21, 0
      %p90 = por %p88, %p89
      %s92 = sadd.s32 %s91, 1
      %p95 = scmp.eq.s32.totalorder %s15, 1
      %p96 = scmp.ne.s32.totalorder %s91, %s93
      %p97 = scmp.eq.s32.totalorder %s15, 0
      %p98 = por %p96, %p97
      %p99 = scmp.ne.s32.totalorder %s91, %s93
      %p100 = scmp.eq.s32.totalorder %s20, 1
      %p101 = por %p99, %p100
      %p102 = scmp.ne.s32.totalorder %s93, %s94
      %p103 = scmp.eq.s32.totalorder %s20, 0
      %p104 = por %p102, %p103
      %p105 = scmp.ne.s32.totalorder %s93, %s94
      %p106 = scmp.eq.s32.totalorder %s21, 1
      %p107 = por %p105, %p106
      %p109 = scmp.ne.s32.totalorder %s94, %s108
      %p110 = scmp.eq.s32.totalorder %s21, 0
      %p111 = por %p109, %p110
      %s113 = sadd.s32 %s112, 1
      %p116 = scmp.eq.s32.totalorder %s15, 1
      %p117 = scmp.ne.s32.totalorder %s112, %s114
      %p118 = scmp.eq.s32.totalorder %s15, 0
      %p119 = por %p117, %p118
      %p120 = scmp.ne.s32.totalorder %s112, %s114
      %p121 = scmp.eq.s32.totalorder %s20, 1
      %p122 = por %p120, %p121
      %p123 = scmp.ne.s32.totalorder %s114, %s115
      %p124 = scmp.eq.s32.totalorder %s20, 0
      %p125 = por %p123, %p124
      %p126 = scmp.ne.s32.totalorder %s114, %s115
      %p127 = scmp.eq.s32.totalorder %s21, 1
      %p128 = por %p126, %p127
      %p130 = scmp.ne.s32.totalorder %s115, %s129
      %p131 = scmp.eq.s32.totalorder %s21, 0
      %p132 = por %p130, %p131
      %s133 = ssub.s32 %s15, %s22
      %p134 = scmp.eq.s32.totalorder %s133, 0
      %s136 = sadd.s32 %s135, 1
      %s137 = scalar_select %p134, %s135, %s136
      %p140 = pneg %p134
      %p141 = scmp.eq.s32.totalorder %s15, 1
      %p142 = por %p140, %p141
      %p143 = scmp.ne.s32.totalorder %s135, %s138
      %p144 = scmp.eq.s32.totalorder %s15, 0
      %p145 = por %p143, %p144
      %p146 = scmp.ne.s32.totalorder %s135, %s138
      %p147 = scmp.eq.s32.totalorder %s20, 1
      %p148 = por %p146, %p147
      %p149 = scmp.ne.s32.totalorder %s138, %s139
      %p150 = scmp.eq.s32.totalorder %s20, 0
      %p151 = por %p149, %p150
      %p152 = scmp.ne.s32.totalorder %s138, %s139
      %p153 = scmp.eq.s32.totalorder %s21, 1
      %p154 = por %p152, %p153
      %p156 = scmp.ne.s32.totalorder %s139, %s155
      %p157 = scmp.eq.s32.totalorder %s21, 0
      %p158 = por %p156, %p157
      %s159 = ssub.s32 %s15, %s22
      %p160 = scmp.eq.s32.totalorder %s159, 0
      %s162 = sadd.s32 %s161, 1
      %s163 = scalar_select %p160, %s161, %s162
      %p166 = pneg %p160
      %p167 = scmp.eq.s32.totalorder %s15, 1
      %p168 = por %p166, %p167
      %p169 = scmp.ne.s32.totalorder %s161, %s164
      %p170 = scmp.eq.s32.totalorder %s15, 0
      %p171 = por %p169, %p170
      %p172 = scmp.ne.s32.totalorder %s161, %s164
      %p173 = scmp.eq.s32.totalorder %s20, 1
      %p174 = por %p172, %p173
      %p175 = scmp.ne.s32.totalorder %s164, %s165
      %p176 = scmp.eq.s32.totalorder %s20, 0
      %p177 = por %p175, %p176
      %p178 = scmp.ne.s32.totalorder %s164, %s165
      %p179 = scmp.eq.s32.totalorder %s21, 1
      %p180 = por %p178, %p179
      %p182 = scmp.ne.s32.totalorder %s165, %s181
      %p183 = scmp.eq.s32.totalorder %s21, 0
      %p184 = por %p182, %p183
      %p185 = scmp.le.s32.totalorder 1, %s15
      %p186 = scmp.lt.s32.totalorder %s15, 3
      %p187 = pnand %p185, %p186
      %p188 = pneg %p187
      // Predicated region
      $region9: #{block_forward.7} parent=5 // pred_check
        _
      $region10: #{block_forward.7} parent=5 // pred_check_branch
        %190 = sbr.rel (%p187) target = $region12
      $region11: #{block_forward.7} parent=5 // pred_region
        %s191 = ssub.s32 %s15, 1
        // Predicated region
        $region13: #{block_forward.7} parent=11 // pred_check
          %p192 = pneg %p62
        $region14: #{block_forward.7} parent=11 // pred_check_branch
          %194 = sbr.rel (%p192) target = $region16
        $region15: #{block_forward.7} parent=11 // pred_region
          _
        $region16: #{block_forward.7} parent=11 // pred_fallthru
          _
        // Predicated region
        $region17: #{block_forward.7} parent=11 // pred_check
          %p195 = pneg %p83
        $region18: #{block_forward.7} parent=11 // pred_check_branch
          %197 = sbr.rel (%p195) target = $region20
        $region19: #{block_forward.7} parent=11 // pred_region
          _
        $region20: #{block_forward.7} parent=11 // pred_fallthru
          _
        // Predicated region
        $region21: #{block_forward.7} parent=11 // pred_check
          %p198 = pneg %p104
        $region22: #{block_forward.7} parent=11 // pred_check_branch
          %200 = sbr.rel (%p198) target = $region24
        $region23: #{block_forward.7} parent=11 // pred_region
          _
        $region24: #{block_forward.7} parent=11 // pred_fallthru
          _
        // Predicated region
        $region25: #{block_forward.7} parent=11 // pred_check
          %p201 = pneg %p125
        $region26: #{block_forward.7} parent=11 // pred_check_branch
          %203 = sbr.rel (%p201) target = $region28
        $region27: #{block_forward.7} parent=11 // pred_region
          _
        $region28: #{block_forward.7} parent=11 // pred_fallthru
          _
      $region12: #{block_forward.7} parent=5 // pred_fallthru
        _
      %p204 = scmp.lt.s32.totalorder %s15, 2
      // Predicated region
      $region29: #{block_forward.7} parent=5 // pred_check
        %p205 = pneg %p204
      $region30: #{block_forward.7} parent=5 // pred_check_branch
        %207 = sbr.rel (%p205) target = $region32
      $region31: #{block_forward.7} parent=5 // pred_region
        // Predicated region
        $region33: #{block_forward.7} parent=31 // pred_check
          %p208 = pneg %p35
        $region34: #{block_forward.7} parent=31 // pred_check_branch
          %210 = sbr.rel (%p208) target = $region36
        $region35: #{block_forward.7} parent=31 // pred_region
          %s211 = smul.u32 32, %s15
          %p212 = scmp.lt.s32.totalorder %s211, 63
          %s213 = scalar_select %p212, %s211, 63
          %s214 = smul.addr %s213, 8
          %s215 = scalar_lea.vmem %s0, %s214
          %s216 = smul.u32 32, %s15
        $region36: #{block_forward.7} parent=31 // pred_fallthru
          _
        // Predicated region
        $region37: #{block_forward.7} parent=31 // pred_check
          %p217 = pneg %p145
        $region38: #{block_forward.7} parent=31 // pred_check_branch
          %219 = sbr.rel (%p217) target = $region40
        $region39: #{block_forward.7} parent=31 // pred_region
          %s220 = smul.u32 32, %s15
          %p221 = scmp.lt.s32.totalorder %s220, 63
          %s222 = scalar_select %p221, %s220, 63
          %s223 = smul.addr %s222, 8
          %s224 = scalar_lea.vmem %s5, %s223
          %s225 = smul.u32 32, %s15
        $region40: #{block_forward.7} parent=31 // pred_fallthru
          _
      $region32: #{block_forward.7} parent=5 // pred_fallthru
        _
      %p226 = scmp.le.s32.totalorder 1, %s15
      %p227 = scmp.lt.s32.totalorder %s15, 3
      %p228 = pnand %p226, %p227
      %p229 = pneg %p228
      // Predicated region
      $region41: #{block_forward.7} parent=5 // pred_check
        _
      $region42: #{block_forward.7} parent=5 // pred_check_branch
        %231 = sbr.rel (%p228) target = $region44
      $region43: #{block_forward.7} parent=5 // pred_region
        %s232 = ssub.s32 %s15, 1
        %s233 = smul.u32 32, %s20
        %p234 = scmp.lt.s32.totalorder %s233, 63
        %s235 = scalar_select %p234, %s233, 63
        %s236 = smul.addr %s235, 8
        %s237 = scalar_lea.vmem %s0, %s236
        %p238 = pneg %p41
        %p239 = pneg %p38
        %p240 = pneg %p62
        %p241 = pneg %p59
        %p242 = pneg %p83
        %p243 = pneg %p80
        %p244 = pneg %p104
        %p245 = pneg %p101
        %p246 = pneg %p125
        %p247 = pneg %p122
        %s248 = smul.u32 32, %s20
        %p249 = scmp.lt.s32.totalorder %s248, 63
        %s250 = scalar_select %p249, %s248, 63
        %s251 = smul.addr %s250, 8
        %s252 = scalar_lea.vmem %s5, %s251
        %p253 = pneg %p151
        %p254 = pneg %p148
        %p255 = pneg %p177
        %p256 = pneg %p174
        %s257 = sand.u32 %s164, 1
        %s258 = scalar_lea.sflag [#allocation3], %s257
        %s259 = sand.u32 %s164, 1
        %s260 = smul.addr %s259, 256
        %s261 = scalar_lea.vmem [#allocation2], %s260
        %s262 = smul.u32 32, %s20
        %p263 = scmp.lt.s32.totalorder %s262, 63
        %s264 = scalar_select %p263, %s262, 63
        %s265 = smul.addr %s264, 8
        %s266 = scalar_lea.vmem %s0, %s265
        %s267 = smul.u32 32, %s20
        %s268 = smul.u32 32, %s20
        %p269 = scmp.lt.s32.totalorder %s268, 63
        %s270 = scalar_select %p269, %s268, 63
        %s271 = smul.addr %s270, 8
        %s272 = scalar_lea.vmem %s5, %s271
        %s273 = smul.u32 32, %s20
        %s274 = smul.u32 32, %s20
        %v275 = vld [vmem:[%s1] sm:$0x1]
        %v276 = vld [vmem:[%s1 + $0x1] sm:$0x1]
        %v277 = vld [vmem:[%s2] sm:$0x1]
        %v278 = vld [vmem:[%s2 + $0x1] sm:$0x1]
        %v279 = vld [vmem:[%s3] sm:$0x1]
        %v280 = vld [vmem:[%s4] sm:$0x1]
        %vm281 = vcmask 1040384
        %v282 = vsel %vm281, %v275, 0.0
        %v283 = vsel %vm281, %v276, 0.0
        %v284 = vadd.f32 %v282, %v283
        %v285 = vrot.slane %v284, 4
        %v286 = vadd.f32 %v284, %v285
        %v287 = vrot.slane %v286, 2
        %v288 = vadd.f32 %v286, %v287
        %v289 = vrot.slane %v288, 1
        %v290 = vadd.f32 %v288, %v289
        %v291 = vsel %vm281, %v277, 0.0
        %v292 = vsel %vm281, %v278, 0.0
        %v293 = vadd.f32 %v291, %v292
        %v294 = vrot.slane %v293, 4
        %v295 = vadd.f32 %v293, %v294
        %v296 = vrot.slane %v295, 2
        %v297 = vadd.f32 %v295, %v296
        %v298 = vrot.slane %v297, 1
        %v299 = vadd.f32 %v297, %v298
        %v300 = vmul.f32 %v290, 0.001953125
        %v301 = vmul.f32 %v299, 0.001953125
        %v302 = vmul.f32 %v300, %v300
        %v303 = vsub.f32 %v301, %v302
        %v304 = vmax.f32 %v303, 0.0
        %v305 = vadd.f32 %v304, 1e-05
        %v306 = vrsqrt.pop %v305
        %v307 = vmul.f32 %v279, %v306
        %v308 = vmul.f32 %v300, %v307
        %v309 = vsub.f32 %v280, %v308
        %v310 = vld [vmem:[%s266] sm:$0xff]
        %v311 = vld [vmem:[%s266 + $0x8] sm:$0xff]
        %v312 = vld [vmem:[%s266 + $0x10] sm:$0xff]
        %v313 = vld [vmem:[%s266 + $0x18] sm:$0xff]
        %v314 = vld [vmem:[%s266 + $0x20] sm:$0xff]
        %v315 = vld [vmem:[%s266 + $0x28] sm:$0xff]
        %v316 = vld [vmem:[%s266 + $0x30] sm:$0xff]
        %v317 = vld [vmem:[%s266 + $0x38] sm:$0xff]
        %v318 = vld [vmem:[%s266 + $0x40] sm:$0xff]
        %v319 = vld [vmem:[%s266 + $0x48] sm:$0xff]
        %v320 = vld [vmem:[%s266 + $0x50] sm:$0xff]
        %v321 = vld [vmem:[%s266 + $0x58] sm:$0xff]
        %v322 = vld [vmem:[%s266 + $0x60] sm:$0xff]
        %v323 = vld [vmem:[%s266 + $0x68] sm:$0xff]
        %v324 = vld [vmem:[%s266 + $0x70] sm:$0xff]
        %v325 = vld [vmem:[%s266 + $0x78] sm:$0xff]
        %v326 = vld [vmem:[%s266 + $0x80] sm:$0xff]
        %v327 = vld [vmem:[%s266 + $0x88] sm:$0xff]
        %v328 = vld [vmem:[%s266 + $0x90] sm:$0xff]
        %v329 = vld [vmem:[%s266 + $0x98] sm:$0xff]
        %v330 = vld [vmem:[%s266 + $0xa0] sm:$0xff]
        %v331 = vld [vmem:[%s266 + $0xa8] sm:$0xff]
        %v332 = vld [vmem:[%s266 + $0xb0] sm:$0xff]
        %v333 = vld [vmem:[%s266 + $0xb8] sm:$0xff]
        %v334 = vld [vmem:[%s266 + $0xc0] sm:$0xff]
        %v335 = vld [vmem:[%s266 + $0xc8] sm:$0xff]
        %v336 = vld [vmem:[%s266 + $0xd0] sm:$0xff]
        %v337 = vld [vmem:[%s266 + $0xd8] sm:$0xff]
        %v338 = vld [vmem:[%s266 + $0xe0] sm:$0xff]
        %v339 = vld [vmem:[%s266 + $0xe8] sm:$0xff]
        %v340 = vld [vmem:[%s266 + $0xf0] sm:$0xff]
        %v341 = vld [vmem:[%s266 + $0xf8] sm:$0xff]
        %v343 = vlaneseq
        %v344 = vshrl.u32 %v343, 7
        %v345 = vsub.s32 0, %v344
        %v346 = vrot.slane %v307, %v345
        %v348 = vmul.f32 %v310, %v346
        %v349 = vmul.f32 %v311, %v346
        %v350 = vmul.f32 %v312, %v346
        %v351 = vmul.f32 %v313, %v346
        %v352 = vmul.f32 %v314, %v346
        %v353 = vmul.f32 %v315, %v346
        %v354 = vmul.f32 %v316, %v346
        %v355 = vmul.f32 %v317, %v346
        %v356 = vmul.f32 %v318, %v346
        %v357 = vmul.f32 %v319, %v346
        %v358 = vmul.f32 %v320, %v346
        %v359 = vmul.f32 %v321, %v346
        %v360 = vmul.f32 %v322, %v346
        %v361 = vmul.f32 %v323, %v346
        %v362 = vmul.f32 %v324, %v346
        %v363 = vmul.f32 %v325, %v346
        %v364 = vmul.f32 %v326, %v346
        %v365 = vmul.f32 %v327, %v346
        %v366 = vmul.f32 %v328, %v346
        %v367 = vmul.f32 %v329, %v346
        %v368 = vmul.f32 %v330, %v346
        %v369 = vmul.f32 %v331, %v346
        %v370 = vmul.f32 %v332, %v346
        %v371 = vmul.f32 %v333, %v346
        %v372 = vmul.f32 %v334, %v346
        %v373 = vmul.f32 %v335, %v346
        %v374 = vmul.f32 %v336, %v346
        %v375 = vmul.f32 %v337, %v346
        %v376 = vmul.f32 %v338, %v346
        %v377 = vmul.f32 %v339, %v346
        %v378 = vmul.f32 %v340, %v346
        %v379 = vmul.f32 %v341, %v346
        %v381 = vlaneseq
        %v382 = vshrl.u32 %v381, 7
        %v383 = vsub.s32 0, %v382
        %v384 = vrot.slane %v309, %v383
        %v386 = vadd.f32 %v348, %v384
        %v387 = vadd.f32 %v349, %v384
        %v388 = vadd.f32 %v350, %v384
        %v389 = vadd.f32 %v351, %v384
        %v390 = vadd.f32 %v352, %v384
        %v391 = vadd.f32 %v353, %v384
        %v392 = vadd.f32 %v354, %v384
        %v393 = vadd.f32 %v355, %v384
        %v394 = vadd.f32 %v356, %v384
        %v395 = vadd.f32 %v357, %v384
        %v396 = vadd.f32 %v358, %v384
        %v397 = vadd.f32 %v359, %v384
        %v398 = vadd.f32 %v360, %v384
        %v399 = vadd.f32 %v361, %v384
        %v400 = vadd.f32 %v362, %v384
        %v401 = vadd.f32 %v363, %v384
        %v402 = vadd.f32 %v364, %v384
        %v403 = vadd.f32 %v365, %v384
        %v404 = vadd.f32 %v366, %v384
        %v405 = vadd.f32 %v367, %v384
        %v406 = vadd.f32 %v368, %v384
        %v407 = vadd.f32 %v369, %v384
        %v408 = vadd.f32 %v370, %v384
        %v409 = vadd.f32 %v371, %v384
        %v410 = vadd.f32 %v372, %v384
        %v411 = vadd.f32 %v373, %v384
        %v412 = vadd.f32 %v374, %v384
        %v413 = vadd.f32 %v375, %v384
        %v414 = vadd.f32 %v376, %v384
        %v415 = vadd.f32 %v377, %v384
        %v416 = vadd.f32 %v378, %v384
        %v417 = vadd.f32 %v379, %v384
        %v418 = vld [vmem:[%s272] sm:$0xff]
        %v419 = vld [vmem:[%s272 + $0x8] sm:$0xff]
        %v420 = vld [vmem:[%s272 + $0x10] sm:$0xff]
        %v421 = vld [vmem:[%s272 + $0x18] sm:$0xff]
        %v422 = vld [vmem:[%s272 + $0x20] sm:$0xff]
        %v423 = vld [vmem:[%s272 + $0x28] sm:$0xff]
        %v424 = vld [vmem:[%s272 + $0x30] sm:$0xff]
        %v425 = vld [vmem:[%s272 + $0x38] sm:$0xff]
        %v426 = vld [vmem:[%s272 + $0x40] sm:$0xff]
        %v427 = vld [vmem:[%s272 + $0x48] sm:$0xff]
        %v428 = vld [vmem:[%s272 + $0x50] sm:$0xff]
        %v429 = vld [vmem:[%s272 + $0x58] sm:$0xff]
        %v430 = vld [vmem:[%s272 + $0x60] sm:$0xff]
        %v431 = vld [vmem:[%s272 + $0x68] sm:$0xff]
        %v432 = vld [vmem:[%s272 + $0x70] sm:$0xff]
        %v433 = vld [vmem:[%s272 + $0x78] sm:$0xff]
        %v434 = vld [vmem:[%s272 + $0x80] sm:$0xff]
        %v435 = vld [vmem:[%s272 + $0x88] sm:$0xff]
        %v436 = vld [vmem:[%s272 + $0x90] sm:$0xff]
        %v437 = vld [vmem:[%s272 + $0x98] sm:$0xff]
        %v438 = vld [vmem:[%s272 + $0xa0] sm:$0xff]
        %v439 = vld [vmem:[%s272 + $0xa8] sm:$0xff]
        %v440 = vld [vmem:[%s272 + $0xb0] sm:$0xff]
        %v441 = vld [vmem:[%s272 + $0xb8] sm:$0xff]
        %v442 = vld [vmem:[%s272 + $0xc0] sm:$0xff]
        %v443 = vld [vmem:[%s272 + $0xc8] sm:$0xff]
        %v444 = vld [vmem:[%s272 + $0xd0] sm:$0xff]
        %v445 = vld [vmem:[%s272 + $0xd8] sm:$0xff]
        %v446 = vld [vmem:[%s272 + $0xe0] sm:$0xff]
        %v447 = vld [vmem:[%s272 + $0xe8] sm:$0xff]
        %v448 = vld [vmem:[%s272 + $0xf0] sm:$0xff]
        %v449 = vld [vmem:[%s272 + $0xf8] sm:$0xff]
        %v450 = vadd.f32 %v386, %v418
        %v451 = vadd.f32 %v387, %v419
        %v452 = vadd.f32 %v388, %v420
        %v453 = vadd.f32 %v389, %v421
        %v454 = vadd.f32 %v390, %v422
        %v455 = vadd.f32 %v391, %v423
        %v456 = vadd.f32 %v392, %v424
        %v457 = vadd.f32 %v393, %v425
        %v458 = vadd.f32 %v394, %v426
        %v459 = vadd.f32 %v395, %v427
        %v460 = vadd.f32 %v396, %v428
        %v461 = vadd.f32 %v397, %v429
        %v462 = vadd.f32 %v398, %v430
        %v463 = vadd.f32 %v399, %v431
        %v464 = vadd.f32 %v400, %v432
        %v465 = vadd.f32 %v401, %v433
        %v466 = vadd.f32 %v402, %v434
        %v467 = vadd.f32 %v403, %v435
        %v468 = vadd.f32 %v404, %v436
        %v469 = vadd.f32 %v405, %v437
        %v470 = vadd.f32 %v406, %v438
        %v471 = vadd.f32 %v407, %v439
        %v472 = vadd.f32 %v408, %v440
        %v473 = vadd.f32 %v409, %v441
        %v474 = vadd.f32 %v410, %v442
        %v475 = vadd.f32 %v411, %v443
        %v476 = vadd.f32 %v412, %v444
        %v477 = vadd.f32 %v413, %v445
        %v478 = vadd.f32 %v414, %v446
        %v479 = vadd.f32 %v415, %v447
        %v480 = vadd.f32 %v416, %v448
        %v481 = vadd.f32 %v417, %v449
        %v482 = vmax.f32 %v450, 0.0
        %v483 = vmax.f32 %v451, 0.0
        %v484 = vmax.f32 %v452, 0.0
        %v485 = vmax.f32 %v453, 0.0
        %v486 = vmax.f32 %v454, 0.0
        %v487 = vmax.f32 %v455, 0.0
        %v488 = vmax.f32 %v456, 0.0
        %v489 = vmax.f32 %v457, 0.0
        %v490 = vmax.f32 %v458, 0.0
        %v491 = vmax.f32 %v459, 0.0
        %v492 = vmax.f32 %v460, 0.0
        %v493 = vmax.f32 %v461, 0.0
        %v494 = vmax.f32 %v462, 0.0
        %v495 = vmax.f32 %v463, 0.0
        %v496 = vmax.f32 %v464, 0.0
        %v497 = vmax.f32 %v465, 0.0
        %v498 = vmax.f32 %v466, 0.0
        %v499 = vmax.f32 %v467, 0.0
        %v500 = vmax.f32 %v468, 0.0
        %v501 = vmax.f32 %v469, 0.0
        %v502 = vmax.f32 %v470, 0.0
        %v503 = vmax.f32 %v471, 0.0
        %v504 = vmax.f32 %v472, 0.0
        %v505 = vmax.f32 %v473, 0.0
        %v506 = vmax.f32 %v474, 0.0
        %v507 = vmax.f32 %v475, 0.0
        %v508 = vmax.f32 %v476, 0.0
        %v509 = vmax.f32 %v477, 0.0
        %v510 = vmax.f32 %v478, 0.0
        %v511 = vmax.f32 %v479, 0.0
        %v512 = vmax.f32 %v480, 0.0
        %v513 = vmax.f32 %v481, 0.0
        %514 = vst [vmem:[%s261] sm:$0xff] %v482
        %515 = vst [vmem:[%s261 + $0x8] sm:$0xff] %v483
        %516 = vst [vmem:[%s261 + $0x10] sm:$0xff] %v484
        %517 = vst [vmem:[%s261 + $0x18] sm:$0xff] %v485
        %518 = vst [vmem:[%s261 + $0x20] sm:$0xff] %v486
        %519 = vst [vmem:[%s261 + $0x28] sm:$0xff] %v487
        %520 = vst [vmem:[%s261 + $0x30] sm:$0xff] %v488
        %521 = vst [vmem:[%s261 + $0x38] sm:$0xff] %v489
        %522 = vst [vmem:[%s261 + $0x40] sm:$0xff] %v490
        %523 = vst [vmem:[%s261 + $0x48] sm:$0xff] %v491
        %524 = vst [vmem:[%s261 + $0x50] sm:$0xff] %v492
        %525 = vst [vmem:[%s261 + $0x58] sm:$0xff] %v493
        %526 = vst [vmem:[%s261 + $0x60] sm:$0xff] %v494
        %527 = vst [vmem:[%s261 + $0x68] sm:$0xff] %v495
        %528 = vst [vmem:[%s261 + $0x70] sm:$0xff] %v496
        %529 = vst [vmem:[%s261 + $0x78] sm:$0xff] %v497
        %530 = vst [vmem:[%s261 + $0x80] sm:$0xff] %v498
        %531 = vst [vmem:[%s261 + $0x88] sm:$0xff] %v499
        %532 = vst [vmem:[%s261 + $0x90] sm:$0xff] %v500
        %533 = vst [vmem:[%s261 + $0x98] sm:$0xff] %v501
        %534 = vst [vmem:[%s261 + $0xa0] sm:$0xff] %v502
        %535 = vst [vmem:[%s261 + $0xa8] sm:$0xff] %v503
        %536 = vst [vmem:[%s261 + $0xb0] sm:$0xff] %v504
        %537 = vst [vmem:[%s261 + $0xb8] sm:$0xff] %v505
        %538 = vst [vmem:[%s261 + $0xc0] sm:$0xff] %v506
        %539 = vst [vmem:[%s261 + $0xc8] sm:$0xff] %v507
        %540 = vst [vmem:[%s261 + $0xd0] sm:$0xff] %v508
        %541 = vst [vmem:[%s261 + $0xd8] sm:$0xff] %v509
        %542 = vst [vmem:[%s261 + $0xe0] sm:$0xff] %v510
        %543 = vst [vmem:[%s261 + $0xe8] sm:$0xff] %v511
        %544 = vst [vmem:[%s261 + $0xf0] sm:$0xff] %v512
        %545 = vst [vmem:[%s261 + $0xf8] sm:$0xff] %v513
        %s546 = sand.u32 %s164, 1
        %s547 = scalar_lea.sflag [#allocation3], %s546
        %s548 = sand.u32 %s164, 1
        %s549 = smul.addr %s548, 256
        %s550 = scalar_lea.vmem [#allocation2], %s549
        // Predicated region
        $region45: #{block_forward.7} parent=43 // pred_check
          %p551 = pneg %p174
        $region46: #{block_forward.7} parent=43 // pred_check_branch
          %553 = sbr.rel (%p551) target = $region48
        $region47: #{block_forward.7} parent=43 // pred_region
          %s554 = smul.u32 32, %s20
          %s556 = ssub.s32 4096, 4096
          %557 = vsyncadd %s547, %s556
          %s558 = smul.addr %s554, 128
          %s559 = scalar_lea.hbm %s6, %s558
          %s560 = sshll.u32 %s550, 4
          %s561 = int_to_ptr.vmem [resolvable:$true] %s560
          %566 = dma.vmem_to_hbm [thread:$0]  %s561, 4096, %s559, %s547, 128, 128, 8
        $region48: #{block_forward.7} parent=43 // pred_fallthru
          _
      $region44: #{block_forward.7} parent=5 // pred_fallthru
        _
      %p567 = scmp.le.s32.totalorder 2, %s15
      // Predicated region
      $region49: #{block_forward.7} parent=5 // pred_check
        %p568 = pneg %p567
      $region50: #{block_forward.7} parent=5 // pred_check_branch
        %570 = sbr.rel (%p568) target = $region52
      $region51: #{block_forward.7} parent=5 // pred_region
        %s571 = ssub.s32 %s15, 2
        // Predicated region
        $region53: #{block_forward.7} parent=51 // pred_check
          %p572 = pneg %p180
        $region54: #{block_forward.7} parent=51 // pred_check_branch
          %574 = sbr.rel (%p572) target = $region56
        $region55: #{block_forward.7} parent=51 // pred_region
          %s575 = sand.u32 %s165, 1
          %s576 = scalar_lea.sflag [#allocation3], %s575
          %s577 = sand.u32 %s165, 1
          %s578 = smul.addr %s577, 256
          %s579 = scalar_lea.vmem [#allocation2], %s578
          %580 = dma.done %s576, 4096
        $region56: #{block_forward.7} parent=51 // pred_fallthru
          _
      $region52: #{block_forward.7} parent=5 // pred_fallthru
        _
    $region6: #{block_forward.7} parent=1 // loop_footer
      %s19 = sadd.s32 1, %s15
    $region7: #{block_forward.7} parent=1 // loop_footer_branch
      %14 = sbr.rel target = $region3
    $region8: #{block_forward.7} parent=1 // loop_exit
      _
    %581 = vsyncpa [#allocation3], 1
    %s582 = scalar_lea.sflag [#allocation3], 1
    %583 = vsyncpa %s582, 1

// kernel: block_forward.6
$region0: #{block_forward.6}
  #allocation0 [shape = 'u32[]', space=smem, size = 0x4, offset = 0x4, fixed_abs, tag = 'smem constant byte address 0x4 - core index']
  #allocation1 [shape = 'u32[144,128]{1,0:T(1,128)}', space=vmem, size = 0x12000, scoped, tag = 'internal scratch']
  %s0 = inlined_call_operand.vmem [shape: bf16[512,32], index: 0, kind: input, shape index: {}]
  %s1 = inlined_call_operand.vmem [shape: f32[4,1,32], index: 1, kind: input, shape index: {}]
  %s2 = inlined_call_operand.vmem [shape: f32[4,1,32], index: 2, kind: input, shape index: {}]
  %s3 = inlined_call_operand.vmem [shape: f32[1,32], index: 3, kind: input, shape index: {}]
  %s4 = inlined_call_operand.vmem [shape: f32[1,32], index: 4, kind: input, shape index: {}]
  %s5 = inlined_call_operand.vmem [shape: bf16[32,128], index: 5, kind: input, shape index: {}]
  %s6 = inlined_call_operand.vmem [shape: f32[512,128], index: 6, kind: output, shape index: {0}]
  %s7 = inlined_call_operand.vmem [shape: f32[2,1,128], index: 7, kind: output, shape index: {1}]
  %s8 = inlined_call_operand.vmem [shape: f32[2,1,128], index: 8, kind: output, shape index: {2}]
  %9 = xla_tuple %s6, %s7, %s8
  %s10 = sld [smem:[#allocation0]]
  $region73: #{block_forward.6} parent=0
    _
  %s12 = ssub.s32 1, %s10
  %s13 = scalar_select 0, %s12, %s10
  loop: start=0, step=1, limit=4
  $region2: #{block_forward.6} parent=0 // loop_pre_header
    _
  $region3: #{block_forward.6} parent=0 // loop_header
    %s15 = sphi 0, %s19
    %p16 = scmp.ge.s32.totalorder %s15, 4
    %s25 = sphi 0, %s27
    %s28 = sphi 0, %s25
    %s29 = sphi 0, %s28
    %s45 = sphi 0, %s29
    %s49 = sphi 0, %s49
    %s51 = sphi 0, %s49
    %s52 = sphi 0, %s51
    %s66 = sphi 0, %s52
    %s70 = sphi 0, %s70
    %s72 = sphi 0, %s70
    %s73 = sphi 0, %s72
    %s87 = sphi 0, %s73
    %s91 = sphi 0, %s91
    %s93 = sphi 0, %s91
    %s94 = sphi 0, %s93
    %s108 = sphi 0, %s94
    %s112 = sphi 0, %s112
    %s114 = sphi 0, %s112
    %s115 = sphi 0, %s114
    %s129 = sphi 0, %s115
    %s133 = sphi 0, %s133
    %s135 = sphi 0, %s133
    %s136 = sphi 0, %s135
    %s150 = sphi 0, %s136
    %s156 = sphi 0, %s158
    %s159 = sphi 0, %s156
    %s160 = sphi 0, %s159
    %s176 = sphi 0, %s160
    %s182 = sphi 0, %s184
    %s185 = sphi 0, %s182
    %s186 = sphi 0, %s185
    %s202 = sphi 0, %s186
    %s208 = sphi 0, %s210
    %s211 = sphi 0, %s208
    %s212 = sphi 0, %s211
    %s228 = sphi 0, %s212
  $region4: #{block_forward.6} parent=0 // loop_header_branch
    %18 = sbr.rel (%p16) target = $region8
  $region5: #{block_forward.6} parent=0 // loop_body
    %s20 = ssub.s32 %s15, 1
    %s21 = ssub.s32 %s15, 2
    %s22 = sadd.s32 %s15, 1
    %s23 = ssub.s32 %s15, %s22
    %p24 = scmp.eq.s32.totalorder %s23, 0
    %s26 = sadd.s32 %s25, 1
    %s27 = scalar_select %p24, %s25, %s26
    %p30 = pneg %p24
    %p31 = scmp.eq.s32.totalorder %s15, 1
    %p32 = por %p30, %p31
    %p33 = scmp.ne.s32.totalorder %s25, %s28
    %p34 = scmp.eq.s32.totalorder %s15, 0
    %p35 = por %p33, %p34
    %p36 = scmp.ne.s32.totalorder %s25, %s28
    %p37 = scmp.eq.s32.totalorder %s20, 1
    %p38 = por %p36, %p37
    %p39 = scmp.ne.s32.totalorder %s28, %s29
    %p40 = scmp.eq.s32.totalorder %s20, 0
    %p41 = por %p39, %p40
    %p42 = scmp.ne.s32.totalorder %s28, %s29
    %p43 = scmp.eq.s32.totalorder %s21, 1
    %p44 = por %p42, %p43
    %p46 = scmp.ne.s32.totalorder %s29, %s45
    %p47 = scmp.eq.s32.totalorder %s21, 0
    %p48 = por %p46, %p47
    %s50 = sadd.s32 %s49, 1
    %p53 = scmp.eq.s32.totalorder %s15, 1
    %p54 = scmp.ne.s32.totalorder %s49, %s51
    %p55 = scmp.eq.s32.totalorder %s15, 0
    %p56 = por %p54, %p55
    %p57 = scmp.ne.s32.totalorder %s49, %s51
    %p58 = scmp.eq.s32.totalorder %s20, 1
    %p59 = por %p57, %p58
    %p60 = scmp.ne.s32.totalorder %s51, %s52
    %p61 = scmp.eq.s32.totalorder %s20, 0
    %p62 = por %p60, %p61
    %p63 = scmp.ne.s32.totalorder %s51, %s52
    %p64 = scmp.eq.s32.totalorder %s21, 1
    %p65 = por %p63, %p64
    %p67 = scmp.ne.s32.totalorder %s52, %s66
    %p68 = scmp.eq.s32.totalorder %s21, 0
    %p69 = por %p67, %p68
    %s71 = sadd.s32 %s70, 1
    %p74 = scmp.eq.s32.totalorder %s15, 1
    %p75 = scmp.ne.s32.totalorder %s70, %s72
    %p76 = scmp.eq.s32.totalorder %s15, 0
    %p77 = por %p75, %p76
    %p78 = scmp.ne.s32.totalorder %s70, %s72
    %p79 = scmp.eq.s32.totalorder %s20, 1
    %p80 = por %p78, %p79
    %p81 = scmp.ne.s32.totalorder %s72, %s73
    %p82 = scmp.eq.s32.totalorder %s20, 0
    %p83 = por %p81, %p82
    %p84 = scmp.ne.s32.totalorder %s72, %s73
    %p85 = scmp.eq.s32.totalorder %s21, 1
    %p86 = por %p84, %p85
    %p88 = scmp.ne.s32.totalorder %s73, %s87
    %p89 = scmp.eq.s32.totalorder %s21, 0
    %p90 = por %p88, %p89
    %s92 = sadd.s32 %s91, 1
    %p95 = scmp.eq.s32.totalorder %s15, 1
    %p96 = scmp.ne.s32.totalorder %s91, %s93
    %p97 = scmp.eq.s32.totalorder %s15, 0
    %p98 = por %p96, %p97
    %p99 = scmp.ne.s32.totalorder %s91, %s93
    %p100 = scmp.eq.s32.totalorder %s20, 1
    %p101 = por %p99, %p100
    %p102 = scmp.ne.s32.totalorder %s93, %s94
    %p103 = scmp.eq.s32.totalorder %s20, 0
    %p104 = por %p102, %p103
    %p105 = scmp.ne.s32.totalorder %s93, %s94
    %p106 = scmp.eq.s32.totalorder %s21, 1
    %p107 = por %p105, %p106
    %p109 = scmp.ne.s32.totalorder %s94, %s108
    %p110 = scmp.eq.s32.totalorder %s21, 0
    %p111 = por %p109, %p110
    %s113 = sadd.s32 %s112, 1
    %p116 = scmp.eq.s32.totalorder %s15, 1
    %p117 = scmp.ne.s32.totalorder %s112, %s114
    %p118 = scmp.eq.s32.totalorder %s15, 0
    %p119 = por %p117, %p118
    %p120 = scmp.ne.s32.totalorder %s112, %s114
    %p121 = scmp.eq.s32.totalorder %s20, 1
    %p122 = por %p120, %p121
    %p123 = scmp.ne.s32.totalorder %s114, %s115
    %p124 = scmp.eq.s32.totalorder %s20, 0
    %p125 = por %p123, %p124
    %p126 = scmp.ne.s32.totalorder %s114, %s115
    %p127 = scmp.eq.s32.totalorder %s21, 1
    %p128 = por %p126, %p127
    %p130 = scmp.ne.s32.totalorder %s115, %s129
    %p131 = scmp.eq.s32.totalorder %s21, 0
    %p132 = por %p130, %p131
    %s134 = sadd.s32 %s133, 1
    %p137 = scmp.eq.s32.totalorder %s15, 1
    %p138 = scmp.ne.s32.totalorder %s133, %s135
    %p139 = scmp.eq.s32.totalorder %s15, 0
    %p140 = por %p138, %p139
    %p141 = scmp.ne.s32.totalorder %s133, %s135
    %p142 = scmp.eq.s32.totalorder %s20, 1
    %p143 = por %p141, %p142
    %p144 = scmp.ne.s32.totalorder %s135, %s136
    %p145 = scmp.eq.s32.totalorder %s20, 0
    %p146 = por %p144, %p145
    %p147 = scmp.ne.s32.totalorder %s135, %s136
    %p148 = scmp.eq.s32.totalorder %s21, 1
    %p149 = por %p147, %p148
    %p151 = scmp.ne.s32.totalorder %s136, %s150
    %p152 = scmp.eq.s32.totalorder %s21, 0
    %p153 = por %p151, %p152
    %s154 = ssub.s32 %s15, %s22
    %p155 = scmp.eq.s32.totalorder %s154, 0
    %s157 = sadd.s32 %s156, 1
    %s158 = scalar_select %p155, %s156, %s157
    %p161 = pneg %p155
    %p162 = scmp.eq.s32.totalorder %s15, 1
    %p163 = por %p161, %p162
    %p164 = scmp.ne.s32.totalorder %s156, %s159
    %p165 = scmp.eq.s32.totalorder %s15, 0
    %p166 = por %p164, %p165
    %p167 = scmp.ne.s32.totalorder %s156, %s159
    %p168 = scmp.eq.s32.totalorder %s20, 1
    %p169 = por %p167, %p168
    %p170 = scmp.ne.s32.totalorder %s159, %s160
    %p171 = scmp.eq.s32.totalorder %s20, 0
    %p172 = por %p170, %p171
    %p173 = scmp.ne.s32.totalorder %s159, %s160
    %p174 = scmp.eq.s32.totalorder %s21, 1
    %p175 = por %p173, %p174
    %p177 = scmp.ne.s32.totalorder %s160, %s176
    %p178 = scmp.eq.s32.totalorder %s21, 0
    %p179 = por %p177, %p178
    %s180 = ssub.s32 %s15, %s22
    %p181 = scmp.eq.s32.totalorder %s180, 0
    %s183 = sadd.s32 %s182, 1
    %s184 = scalar_select %p181, %s182, %s183
    %p187 = pneg %p181
    %p188 = scmp.eq.s32.totalorder %s15, 1
    %p189 = por %p187, %p188
    %p190 = scmp.ne.s32.totalorder %s182, %s185
    %p191 = scmp.eq.s32.totalorder %s15, 0
    %p192 = por %p190, %p191
    %p193 = scmp.ne.s32.totalorder %s182, %s185
    %p194 = scmp.eq.s32.totalorder %s20, 1
    %p195 = por %p193, %p194
    %p196 = scmp.ne.s32.totalorder %s185, %s186
    %p197 = scmp.eq.s32.totalorder %s20, 0
    %p198 = por %p196, %p197
    %p199 = scmp.ne.s32.totalorder %s185, %s186
    %p200 = scmp.eq.s32.totalorder %s21, 1
    %p201 = por %p199, %p200
    %p203 = scmp.ne.s32.totalorder %s186, %s202
    %p204 = scmp.eq.s32.totalorder %s21, 0
    %p205 = por %p203, %p204
    %s206 = ssub.s32 %s15, %s22
    %p207 = scmp.eq.s32.totalorder %s206, 0
    %s209 = sadd.s32 %s208, 1
    %s210 = scalar_select %p207, %s208, %s209
    %p213 = pneg %p207
    %p214 = scmp.eq.s32.totalorder %s15, 1
    %p215 = por %p213, %p214
    %p216 = scmp.ne.s32.totalorder %s208, %s211
    %p217 = scmp.eq.s32.totalorder %s15, 0
    %p218 = por %p216, %p217
    %p219 = scmp.ne.s32.totalorder %s208, %s211
    %p220 = scmp.eq.s32.totalorder %s20, 1
    %p221 = por %p219, %p220
    %p222 = scmp.ne.s32.totalorder %s211, %s212
    %p223 = scmp.eq.s32.totalorder %s20, 0
    %p224 = por %p222, %p223
    %p225 = scmp.ne.s32.totalorder %s211, %s212
    %p226 = scmp.eq.s32.totalorder %s21, 1
    %p227 = por %p225, %p226
    %p229 = scmp.ne.s32.totalorder %s212, %s228
    %p230 = scmp.eq.s32.totalorder %s21, 0
    %p231 = por %p229, %p230
    %p232 = scmp.le.s32.totalorder 1, %s15
    %p233 = scmp.lt.s32.totalorder %s15, 3
    %p234 = pnand %p232, %p233
    %p235 = pneg %p234
    // Predicated region
    $region9: #{block_forward.6} parent=5 // pred_check
      _
    $region10: #{block_forward.6} parent=5 // pred_check_branch
      %237 = sbr.rel (%p234) target = $region12
    $region11: #{block_forward.6} parent=5 // pred_region
      %s238 = ssub.s32 %s15, 1
      // Predicated region
      $region13: #{block_forward.6} parent=11 // pred_check
        %p239 = pneg %p62
      $region14: #{block_forward.6} parent=11 // pred_check_branch
        %241 = sbr.rel (%p239) target = $region16
      $region15: #{block_forward.6} parent=11 // pred_region
        _
      $region16: #{block_forward.6} parent=11 // pred_fallthru
        _
      // Predicated region
      $region17: #{block_forward.6} parent=11 // pred_check
        %p242 = pneg %p83
      $region18: #{block_forward.6} parent=11 // pred_check_branch
        %244 = sbr.rel (%p242) target = $region20
      $region19: #{block_forward.6} parent=11 // pred_region
        _
      $region20: #{block_forward.6} parent=11 // pred_fallthru
        _
      // Predicated region
      $region21: #{block_forward.6} parent=11 // pred_check
        %p245 = pneg %p104
      $region22: #{block_forward.6} parent=11 // pred_check_branch
        %247 = sbr.rel (%p245) target = $region24
      $region23: #{block_forward.6} parent=11 // pred_region
        _
      $region24: #{block_forward.6} parent=11 // pred_fallthru
        _
      // Predicated region
      $region25: #{block_forward.6} parent=11 // pred_check
        %p248 = pneg %p125
      $region26: #{block_forward.6} parent=11 // pred_check_branch
        %250 = sbr.rel (%p248) target = $region28
      $region27: #{block_forward.6} parent=11 // pred_region
        _
      $region28: #{block_forward.6} parent=11 // pred_fallthru
        _
      // Predicated region
      $region29: #{block_forward.6} parent=11 // pred_check
        %p251 = pneg %p146
      $region30: #{block_forward.6} parent=11 // pred_check_branch
        %253 = sbr.rel (%p251) target = $region32
      $region31: #{block_forward.6} parent=11 // pred_region
        _
      $region32: #{block_forward.6} parent=11 // pred_fallthru
        _
    $region12: #{block_forward.6} parent=5 // pred_fallthru
      _
    %p254 = scmp.lt.s32.totalorder %s15, 2
    // Predicated region
    $region33: #{block_forward.6} parent=5 // pred_check
      %p255 = pneg %p254
    $region34: #{block_forward.6} parent=5 // pred_check_branch
      %257 = sbr.rel (%p255) target = $region36
    $region35: #{block_forward.6} parent=5 // pred_region
      // Predicated region
      $region37: #{block_forward.6} parent=35 // pred_check
        %p258 = pneg %p35
      $region38: #{block_forward.6} parent=35 // pred_check_branch
        %260 = sbr.rel (%p258) target = $region40
      $region39: #{block_forward.6} parent=35 // pred_region
        %s261 = smul.u32 32, %s15
        %p262 = scmp.lt.s32.totalorder %s261, 63
        %s263 = scalar_select %p262, %s261, 63
        %s264 = smul.addr %s263, 4
        %s265 = scalar_lea.vmem %s0, %s264
        %s266 = smul.u32 32, %s15
      $region40: #{block_forward.6} parent=35 // pred_fallthru
        _
    $region36: #{block_forward.6} parent=5 // pred_fallthru
      _
    %p267 = scmp.le.s32.totalorder 1, %s15
    %p268 = scmp.lt.s32.totalorder %s15, 3
    %p269 = pnand %p267, %p268
    %p270 = pneg %p269
    // Predicated region
    $region41: #{block_forward.6} parent=5 // pred_check
      _
    $region42: #{block_forward.6} parent=5 // pred_check_branch
      %272 = sbr.rel (%p269) target = $region44
    $region43: #{block_forward.6} parent=5 // pred_region
      %s273 = ssub.s32 %s15, 1
      %s274 = smul.u32 32, %s20
      %p275 = scmp.lt.s32.totalorder %s274, 63
      %s276 = scalar_select %p275, %s274, 63
      %s277 = smul.addr %s276, 4
      %s278 = scalar_lea.vmem %s0, %s277
      %p279 = pneg %p41
      %p280 = pneg %p38
      %p281 = pneg %p62
      %p282 = pneg %p59
      %p283 = pneg %p83
      %p284 = pneg %p80
      %p285 = pneg %p104
      %p286 = pneg %p101
      %p287 = pneg %p125
      %p288 = pneg %p122
      %p289 = pneg %p146
      %p290 = pneg %p143
      %p291 = pneg %p172
      %p292 = pneg %p169
      %s293 = smul.u32 32, %s20
      %p294 = scmp.lt.s32.totalorder %s293, 63
      %s295 = scalar_select %p294, %s293, 63
      %s296 = smul.addr %s295, 8
      %s297 = scalar_lea.vmem %s6, %s296
      %p298 = pneg %p198
      %p299 = pneg %p195
      %p300 = scmp.lt.s32.totalorder %s20, 1
      %s301 = scalar_select %p300, %s20, 1
      %s302 = scalar_lea.vmem %s7, %s301
      %p303 = pneg %p224
      %p304 = pneg %p221
      %p305 = scmp.lt.s32.totalorder %s20, 1
      %s306 = scalar_select %p305, %s20, 1
      %s307 = scalar_lea.vmem %s8, %s306
      %s308 = smul.u32 32, %s20
      %p309 = scmp.lt.s32.totalorder %s308, 63
      %s310 = scalar_select %p309, %s308, 63
      %s311 = smul.addr %s310, 4
      %s312 = scalar_lea.vmem %s0, %s311
      %s313 = smul.u32 32, %s20
      %s314 = smul.u32 32, %s20
      %p315 = scmp.lt.s32.totalorder %s314, 63
      %s316 = scalar_select %p315, %s314, 63
      %s317 = smul.addr %s316, 8
      %s318 = scalar_lea.vmem %s6, %s317
      %s319 = smul.u32 32, %s20
      %p320 = scmp.lt.s32.totalorder %s20, 1
      %s321 = scalar_select %p320, %s20, 1
      %s322 = scalar_lea.vmem %s7, %s321
      %p323 = scmp.lt.s32.totalorder %s20, 1
      %s324 = scalar_select %p323, %s20, 1
      %s325 = scalar_lea.vmem %s8, %s324
      %v327 = vld [vmem:[%s1] sm:$0x1]
      %v328 = vld [vmem:[%s1 + $0x1] sm:$0x1]
      %v329 = vld [vmem:[%s1 + $0x2] sm:$0x1]
      %v330 = vld [vmem:[%s1 + $0x3] sm:$0x1]
      %v331 = vld [vmem:[%s2] sm:$0x1]
      %v332 = vld [vmem:[%s2 + $0x1] sm:$0x1]
      %v333 = vld [vmem:[%s2 + $0x2] sm:$0x1]
      %v334 = vld [vmem:[%s2 + $0x3] sm:$0x1]
      %v335 = vld [vmem:[%s3] sm:$0x1]
      %v336 = vld [vmem:[%s4] sm:$0x1]
      %vm337 = vcmask 253952
      %v338 = vsel %vm337, %v327, 0.0
      %v339 = vsel %vm337, %v328, 0.0
      %v340 = vadd.f32 %v338, %v339
      %v341 = vsel %vm337, %v329, 0.0
      %v342 = vadd.f32 %v340, %v341
      %v343 = vsel %vm337, %v330, 0.0
      %v344 = vadd.f32 %v342, %v343
      %v345 = vrot.slane %v344, 4
      %v346 = vadd.f32 %v344, %v345
      %v347 = vrot.slane %v346, 2
      %v348 = vadd.f32 %v346, %v347
      %v349 = vrot.slane %v348, 1
      %v350 = vadd.f32 %v348, %v349
      %v351 = vsel %vm337, %v331, 0.0
      %v352 = vsel %vm337, %v332, 0.0
      %v353 = vadd.f32 %v351, %v352
      %v354 = vsel %vm337, %v333, 0.0
      %v355 = vadd.f32 %v353, %v354
      %v356 = vsel %vm337, %v334, 0.0
      %v357 = vadd.f32 %v355, %v356
      %v358 = vrot.slane %v357, 4
      %v359 = vadd.f32 %v357, %v358
      %v360 = vrot.slane %v359, 2
      %v361 = vadd.f32 %v359, %v360
      %v362 = vrot.slane %v361, 1
      %v363 = vadd.f32 %v361, %v362
      %v364 = vmul.f32 %v350, 0.001953125
      %v365 = vmul.f32 %v363, 0.001953125
      %v366 = vmul.f32 %v364, %v364
      %v367 = vsub.f32 %v365, %v366
      %v368 = vmax.f32 %v367, 0.0
      %v369 = vadd.f32 %v368, 1e-05
      %v370 = vrsqrt.pop %v369
      %v371 = vmul.f32 %v335, %v370
      %v372 = vmul.f32 %v364, %v371
      %v373 = vsub.f32 %v336, %v372
      %v374 = vld [vmem:[%s312] sm:$0xf]
      %v375 = vld [vmem:[%s312 + $0x4] sm:$0xf]
      %v376 = vld [vmem:[%s312 + $0x8] sm:$0xf]
      %v377 = vld [vmem:[%s312 + $0xc] sm:$0xf]
      %v378 = vld [vmem:[%s312 + $0x10] sm:$0xf]
      %v379 = vld [vmem:[%s312 + $0x14] sm:$0xf]
      %v380 = vld [vmem:[%s312 + $0x18] sm:$0xf]
      %v381 = vld [vmem:[%s312 + $0x1c] sm:$0xf]
      %v382 = vld [vmem:[%s312 + $0x20] sm:$0xf]
      %v383 = vld [vmem:[%s312 + $0x24] sm:$0xf]
      %v384 = vld [vmem:[%s312 + $0x28] sm:$0xf]
      %v385 = vld [vmem:[%s312 + $0x2c] sm:$0xf]
      %v386 = vld [vmem:[%s312 + $0x30] sm:$0xf]
      %v387 = vld [vmem:[%s312 + $0x34] sm:$0xf]
      %v388 = vld [vmem:[%s312 + $0x38] sm:$0xf]
      %v389 = vld [vmem:[%s312 + $0x3c] sm:$0xf]
      %v390 = vld [vmem:[%s312 + $0x40] sm:$0xf]
      %v391 = vld [vmem:[%s312 + $0x44] sm:$0xf]
      %v392 = vld [vmem:[%s312 + $0x48] sm:$0xf]
      %v393 = vld [vmem:[%s312 + $0x4c] sm:$0xf]
      %v394 = vld [vmem:[%s312 + $0x50] sm:$0xf]
      %v395 = vld [vmem:[%s312 + $0x54] sm:$0xf]
      %v396 = vld [vmem:[%s312 + $0x58] sm:$0xf]
      %v397 = vld [vmem:[%s312 + $0x5c] sm:$0xf]
      %v398 = vld [vmem:[%s312 + $0x60] sm:$0xf]
      %v399 = vld [vmem:[%s312 + $0x64] sm:$0xf]
      %v400 = vld [vmem:[%s312 + $0x68] sm:$0xf]
      %v401 = vld [vmem:[%s312 + $0x6c] sm:$0xf]
      %v402 = vld [vmem:[%s312 + $0x70] sm:$0xf]
      %v403 = vld [vmem:[%s312 + $0x74] sm:$0xf]
      %v404 = vld [vmem:[%s312 + $0x78] sm:$0xf]
      %v405 = vld [vmem:[%s312 + $0x7c] sm:$0xf]
      %v406 = vunpack.c.l.bf16 %v374
      %v407 = vunpack.c.l.bf16 %v375
      %v408 = vunpack.c.l.bf16 %v376
      %v409 = vunpack.c.l.bf16 %v377
      %v410 = vunpack.c.l.bf16 %v378
      %v411 = vunpack.c.l.bf16 %v379
      %v412 = vunpack.c.l.bf16 %v380
      %v413 = vunpack.c.l.bf16 %v381
      %v414 = vunpack.c.l.bf16 %v382
      %v415 = vunpack.c.l.bf16 %v383
      %v416 = vunpack.c.l.bf16 %v384
      %v417 = vunpack.c.l.bf16 %v385
      %v418 = vunpack.c.l.bf16 %v386
      %v419 = vunpack.c.l.bf16 %v387
      %v420 = vunpack.c.l.bf16 %v388
      %v421 = vunpack.c.l.bf16 %v389
      %v422 = vunpack.c.l.bf16 %v390
      %v423 = vunpack.c.l.bf16 %v391
      %v424 = vunpack.c.l.bf16 %v392
      %v425 = vunpack.c.l.bf16 %v393
      %v426 = vunpack.c.l.bf16 %v394
      %v427 = vunpack.c.l.bf16 %v395
      %v428 = vunpack.c.l.bf16 %v396
      %v429 = vunpack.c.l.bf16 %v397
      %v430 = vunpack.c.l.bf16 %v398
      %v431 = vunpack.c.l.bf16 %v399
      %v432 = vunpack.c.l.bf16 %v400
      %v433 = vunpack.c.l.bf16 %v401
      %v434 = vunpack.c.l.bf16 %v402
      %v435 = vunpack.c.l.bf16 %v403
      %v436 = vunpack.c.l.bf16 %v404
      %v437 = vunpack.c.l.bf16 %v405
      %v439 = vlaneseq
      %v440 = vshrl.u32 %v439, 7
      %v441 = vsub.s32 0, %v440
      %v442 = vrot.slane %v371, %v441
      %v444 = vmul.f32 %v406, %v442
      %v445 = vmul.f32 %v407, %v442
      %v446 = vmul.f32 %v408, %v442
      %v447 = vmul.f32 %v409, %v442
      %v448 = vmul.f32 %v410, %v442
      %v449 = vmul.f32 %v411, %v442
      %v450 = vmul.f32 %v412, %v442
      %v451 = vmul.f32 %v413, %v442
      %v452 = vmul.f32 %v414, %v442
      %v453 = vmul.f32 %v415, %v442
      %v454 = vmul.f32 %v416, %v442
      %v455 = vmul.f32 %v417, %v442
      %v456 = vmul.f32 %v418, %v442
      %v457 = vmul.f32 %v419, %v442
      %v458 = vmul.f32 %v420, %v442
      %v459 = vmul.f32 %v421, %v442
      %v460 = vmul.f32 %v422, %v442
      %v461 = vmul.f32 %v423, %v442
      %v462 = vmul.f32 %v424, %v442
      %v463 = vmul.f32 %v425, %v442
      %v464 = vmul.f32 %v426, %v442
      %v465 = vmul.f32 %v427, %v442
      %v466 = vmul.f32 %v428, %v442
      %v467 = vmul.f32 %v429, %v442
      %v468 = vmul.f32 %v430, %v442
      %v469 = vmul.f32 %v431, %v442
      %v470 = vmul.f32 %v432, %v442
      %v471 = vmul.f32 %v433, %v442
      %v472 = vmul.f32 %v434, %v442
      %v473 = vmul.f32 %v435, %v442
      %v474 = vmul.f32 %v436, %v442
      %v475 = vmul.f32 %v437, %v442
      %v477 = vlaneseq
      %v478 = vshrl.u32 %v477, 7
      %v479 = vsub.s32 0, %v478
      %v480 = vrot.slane %v373, %v479
      %v482 = vadd.f32 %v444, %v480
      %v483 = vadd.f32 %v445, %v480
      %v484 = vadd.f32 %v446, %v480
      %v485 = vadd.f32 %v447, %v480
      %v486 = vadd.f32 %v448, %v480
      %v487 = vadd.f32 %v449, %v480
      %v488 = vadd.f32 %v450, %v480
      %v489 = vadd.f32 %v451, %v480
      %v490 = vadd.f32 %v452, %v480
      %v491 = vadd.f32 %v453, %v480
      %v492 = vadd.f32 %v454, %v480
      %v493 = vadd.f32 %v455, %v480
      %v494 = vadd.f32 %v456, %v480
      %v495 = vadd.f32 %v457, %v480
      %v496 = vadd.f32 %v458, %v480
      %v497 = vadd.f32 %v459, %v480
      %v498 = vadd.f32 %v460, %v480
      %v499 = vadd.f32 %v461, %v480
      %v500 = vadd.f32 %v462, %v480
      %v501 = vadd.f32 %v463, %v480
      %v502 = vadd.f32 %v464, %v480
      %v503 = vadd.f32 %v465, %v480
      %v504 = vadd.f32 %v466, %v480
      %v505 = vadd.f32 %v467, %v480
      %v506 = vadd.f32 %v468, %v480
      %v507 = vadd.f32 %v469, %v480
      %v508 = vadd.f32 %v470, %v480
      %v509 = vadd.f32 %v471, %v480
      %v510 = vadd.f32 %v472, %v480
      %v511 = vadd.f32 %v473, %v480
      %v512 = vadd.f32 %v474, %v480
      %v513 = vadd.f32 %v475, %v480
      %v514 = vmax.f32 %v482, 0.0
      %v515 = vmax.f32 %v483, 0.0
      %v516 = vmax.f32 %v484, 0.0
      %v517 = vmax.f32 %v485, 0.0
      %v518 = vmax.f32 %v486, 0.0
      %v519 = vmax.f32 %v487, 0.0
      %v520 = vmax.f32 %v488, 0.0
      %v521 = vmax.f32 %v489, 0.0
      %v522 = vmax.f32 %v490, 0.0
      %v523 = vmax.f32 %v491, 0.0
      %v524 = vmax.f32 %v492, 0.0
      %v525 = vmax.f32 %v493, 0.0
      %v526 = vmax.f32 %v494, 0.0
      %v527 = vmax.f32 %v495, 0.0
      %v528 = vmax.f32 %v496, 0.0
      %v529 = vmax.f32 %v497, 0.0
      %v530 = vmax.f32 %v498, 0.0
      %v531 = vmax.f32 %v499, 0.0
      %v532 = vmax.f32 %v500, 0.0
      %v533 = vmax.f32 %v501, 0.0
      %v534 = vmax.f32 %v502, 0.0
      %v535 = vmax.f32 %v503, 0.0
      %v536 = vmax.f32 %v504, 0.0
      %v537 = vmax.f32 %v505, 0.0
      %v538 = vmax.f32 %v506, 0.0
      %v539 = vmax.f32 %v507, 0.0
      %v540 = vmax.f32 %v508, 0.0
      %v541 = vmax.f32 %v509, 0.0
      %v542 = vmax.f32 %v510, 0.0
      %v543 = vmax.f32 %v511, 0.0
      %v544 = vmax.f32 %v512, 0.0
      %v545 = vmax.f32 %v513, 0.0
      %v546 = vpack.c.bf16 %v515, %v514
      %v547 = vpack.c.bf16 %v517, %v516
      %v548 = vpack.c.bf16 %v519, %v518
      %v549 = vpack.c.bf16 %v521, %v520
      %v550 = vpack.c.bf16 %v523, %v522
      %v551 = vpack.c.bf16 %v525, %v524
      %v552 = vpack.c.bf16 %v527, %v526
      %v553 = vpack.c.bf16 %v529, %v528
      %v554 = vpack.c.bf16 %v531, %v530
      %v555 = vpack.c.bf16 %v533, %v532
      %v556 = vpack.c.bf16 %v535, %v534
      %v557 = vpack.c.bf16 %v537, %v536
      %v558 = vpack.c.bf16 %v539, %v538
      %v559 = vpack.c.bf16 %v541, %v540
      %v560 = vpack.c.bf16 %v543, %v542
      %v561 = vpack.c.bf16 %v545, %v544
      %v562 = vld [vmem:[%s5] sm:$0xf]
      %v563 = vld [vmem:[%s5 + $0x4] sm:$0xf]
      %v564 = vld [vmem:[%s5 + $0x8] sm:$0xf]
      %v565 = vld [vmem:[%s5 + $0xc] sm:$0xf]
      %v570 = vunpack.c.l.b16 %v562
      %v571 = vunpack.c.l.b16 %v563
      %v572 = vunpack.c.l.b16 %v564
      %v573 = vunpack.c.l.b16 %v565
      %v574 = vpack.c.b16 %v571, %v570
      %v575 = vpack.c.b16 %v573, %v572
      %vm578 = vcmask 261120
      %v580 = vsel %vm578, %v546, 0
      %v583 = vsel %vm578, %v547, 0
      %v586 = vsel %vm578, %v548, 0
      %v589 = vsel %vm578, %v549, 0
      %v592 = vsel %vm578, %v550, 0
      %v595 = vsel %vm578, %v551, 0
      %v598 = vsel %vm578, %v552, 0
      %v601 = vsel %vm578, %v553, 0
      %v604 = vsel %vm578, %v554, 0
      %v607 = vsel %vm578, %v555, 0
      %v610 = vsel %vm578, %v556, 0
      %v613 = vsel %vm578, %v557, 0
      %v616 = vsel %vm578, %v558, 0
      %v619 = vsel %vm578, %v559, 0
      %v622 = vsel %vm578, %v560, 0
      %v625 = vsel %vm578, %v561, 0
      %627 = vmatprep.subr.bf16.mxu0 0
      %628 = vmatpush1.bf16.msra.mxu0 %v574
      %629 = vmatprep.subr.bf16.mxu0 0
      %630 = vmatpush1.bf16.msra.mxu0 %v575
      %631 = vmatprep.subr.bf16.mxu0 0
      %632 = vmatpush1.bf16.msra.mxu0 0
      %633 = vmatprep.subr.bf16.mxu0 0
      %634 = vmatpush1.bf16.msra.mxu0 0
      %635 = vmatprep.subr.bf16.mxu0 0
      %636 = vmatpush1.bf16.msra.mxu0 0
      %637 = vmatprep.subr.bf16.mxu0 0
      %638 = vmatpush1.bf16.msra.mxu0 0
      %639 = vmatprep.subr.bf16.mxu0 0
      %640 = vmatpush1.bf16.msra.mxu0 0
      %641 = vmatprep.subr.bf16.mxu0 0
      %642 = vmatpush1.bf16.msra.mxu0 0
      %643 = vmatprep.subr.bf16.mxu0 0
      %644 = vmatpush1.bf16.msra.mxu0 0
      %645 = vmatprep.subr.bf16.mxu0 0
      %646 = vmatpush1.bf16.msra.mxu0 0
      %647 = vmatprep.subr.bf16.mxu0 0
      %648 = vmatpush1.bf16.msra.mxu0 0
      %649 = vmatprep.subr.bf16.mxu0 0
      %650 = vmatpush1.bf16.msra.mxu0 0
      %651 = vmatprep.subr.bf16.mxu0 0
      %652 = vmatpush1.bf16.msra.mxu0 0
      %653 = vmatprep.subr.bf16.mxu0 0
      %654 = vmatpush1.bf16.msra.mxu0 0
      %655 = vmatprep.subr.bf16.mxu0 0
      %656 = vmatpush1.bf16.msra.mxu0 0
      %657 = vmatprep.subr.bf16.mxu0 0
      %658 = vmatpush1.bf16.msra.mxu0 0
      %659 = vmatprep.mubr.bf16.mxu0 0
      %660 = vmatmul.mubr.bf16.gmra.mrb[0].mxu0 %v580
      %v661 = vpop.f32.mrb[0].mxu0
      %v662 = vadd.f32 0.0, %v661
      %v663 = vpop.f32.mrb[0].mxu0
      %v664 = vpop.f32.mrb[0].mxu0
      %v665 = vadd.f32 0.0, %v664
      %v666 = vpop.f32.mrb[0].mxu0
      %667 = vmatprep.mubr.bf16.mxu0 0
      %668 = vmatmul.mubr.bf16.gmra.mrb[0].mxu0 %v583
      %v669 = vpop.f32.mrb[0].mxu0
      %v670 = vadd.f32 0.0, %v669
      %v671 = vpop.f32.mrb[0].mxu0
      %v672 = vpop.f32.mrb[0].mxu0
      %v673 = vadd.f32 0.0, %v672
      %v674 = vpop.f32.mrb[0].mxu0
      %675 = vmatprep.mubr.bf16.mxu0 0
      %676 = vmatmul.mubr.bf16.gmra.mrb[0].mxu0 %v586
      %v677 = vpop.f32.mrb[0].mxu0
      %v678 = vadd.f32 0.0, %v677
      %v679 = vpop.f32.mrb[0].mxu0
      %v680 = vpop.f32.mrb[0].mxu0
      %v681 = vadd.f32 0.0, %v680
      %v682 = vpop.f32.mrb[0].mxu0
      %683 = vmatprep.mubr.bf16.mxu0 0
      %684 = vmatmul.mubr.bf16.gmra.mrb[0].mxu0 %v589
      %v685 = vpop.f32.mrb[0].mxu0
      %v686 = vadd.f32 0.0, %v685
      %v687 = vpop.f32.mrb[0].mxu0
      %v688 = vpop.f32.mrb[0].mxu0
      %v689 = vadd.f32 0.0, %v688
      %v690 = vpop.f32.mrb[0].mxu0
      %691 = vmatprep.mubr.bf16.mxu0 0
      %692 = vmatmul.mubr.bf16.gmra.mrb[0].mxu0 %v592
      %v693 = vpop.f32.mrb[0].mxu0
      %v694 = vadd.f32 0.0, %v693
      %v695 = vpop.f32.mrb[0].mxu0
      %v696 = vpop.f32.mrb[0].mxu0
      %v697 = vadd.f32 0.0, %v696
      %v698 = vpop.f32.mrb[0].mxu0
      %699 = vmatprep.mubr.bf16.mxu0 0
      %700 = vmatmul.mubr.bf16.gmra.mrb[0].mxu0 %v595
      %v701 = vpop.f32.mrb[0].mxu0
      %v702 = vadd.f32 0.0, %v701
      %v703 = vpop.f32.mrb[0].mxu0
      %v704 = vpop.f32.mrb[0].mxu0
      %v705 = vadd.f32 0.0, %v704
      %v706 = vpop.f32.mrb[0].mxu0
      %707 = vmatprep.mubr.bf16.mxu0 0
      %708 = vmatmul.mubr.bf16.gmra.mrb[0].mxu0 %v598
      %v709 = vpop.f32.mrb[0].mxu0
      %v710 = vadd.f32 0.0, %v709
      %v711 = vpop.f32.mrb[0].mxu0
      %v712 = vpop.f32.mrb[0].mxu0
      %v713 = vadd.f32 0.0, %v712
      %v714 = vpop.f32.mrb[0].mxu0
      %715 = vmatprep.mubr.bf16.mxu0 0
      %716 = vmatmul.mubr.bf16.gmra.mrb[0].mxu0 %v601
      %v717 = vpop.f32.mrb[0].mxu0
      %v718 = vadd.f32 0.0, %v717
      %v719 = vpop.f32.mrb[0].mxu0
      %v720 = vpop.f32.mrb[0].mxu0
      %v721 = vadd.f32 0.0, %v720
      %v722 = vpop.f32.mrb[0].mxu0
      %723 = vmatprep.mubr.bf16.mxu0 0
      %724 = vmatmul.mubr.bf16.gmra.mrb[0].mxu0 %v604
      %v725 = vpop.f32.mrb[0].mxu0
      %v726 = vadd.f32 0.0, %v725
      %v727 = vpop.f32.mrb[0].mxu0
      %v728 = vpop.f32.mrb[0].mxu0
      %v729 = vadd.f32 0.0, %v728
      %v730 = vpop.f32.mrb[0].mxu0
      %731 = vmatprep.mubr.bf16.mxu0 0
      %732 = vmatmul.mubr.bf16.gmra.mrb[0].mxu0 %v607
      %v733 = vpop.f32.mrb[0].mxu0
      %v734 = vadd.f32 0.0, %v733
      %v735 = vpop.f32.mrb[0].mxu0
      %v736 = vpop.f32.mrb[0].mxu0
      %v737 = vadd.f32 0.0, %v736
      %v738 = vpop.f32.mrb[0].mxu0
      %739 = vmatprep.mubr.bf16.mxu0 0
      %740 = vmatmul.mubr.bf16.gmra.mrb[0].mxu0 %v610
      %v741 = vpop.f32.mrb[0].mxu0
      %v742 = vadd.f32 0.0, %v741
      %v743 = vpop.f32.mrb[0].mxu0
      %v744 = vpop.f32.mrb[0].mxu0
      %v745 = vadd.f32 0.0, %v744
      %v746 = vpop.f32.mrb[0].mxu0
      %747 = vmatprep.mubr.bf16.mxu0 0
      %748 = vmatmul.mubr.bf16.gmra.mrb[0].mxu0 %v613
      %v749 = vpop.f32.mrb[0].mxu0
      %v750 = vadd.f32 0.0, %v749
      %v751 = vpop.f32.mrb[0].mxu0
      %v752 = vpop.f32.mrb[0].mxu0
      %v753 = vadd.f32 0.0, %v752
      %v754 = vpop.f32.mrb[0].mxu0
      %755 = vmatprep.mubr.bf16.mxu0 0
      %756 = vmatmul.mubr.bf16.gmra.mrb[0].mxu0 %v616
      %v757 = vpop.f32.mrb[0].mxu0
      %v758 = vadd.f32 0.0, %v757
      %v759 = vpop.f32.mrb[0].mxu0
      %v760 = vpop.f32.mrb[0].mxu0
      %v761 = vadd.f32 0.0, %v760
      %v762 = vpop.f32.mrb[0].mxu0
      %763 = vmatprep.mubr.bf16.mxu0 0
      %764 = vmatmul.mubr.bf16.gmra.mrb[0].mxu0 %v619
      %v765 = vpop.f32.mrb[0].mxu0
      %v766 = vadd.f32 0.0, %v765
      %v767 = vpop.f32.mrb[0].mxu0
      %v768 = vpop.f32.mrb[0].mxu0
      %v769 = vadd.f32 0.0, %v768
      %v770 = vpop.f32.mrb[0].mxu0
      %771 = vmatprep.mubr.bf16.mxu0 0
      %772 = vmatmul.mubr.bf16.gmra.mrb[0].mxu0 %v622
      %v773 = vpop.f32.mrb[0].mxu0
      %v774 = vadd.f32 0.0, %v773
      %v775 = vpop.f32.mrb[0].mxu0
      %v776 = vpop.f32.mrb[0].mxu0
      %v777 = vadd.f32 0.0, %v776
      %v778 = vpop.f32.mrb[0].mxu0
      %779 = vmatprep.mubr.bf16.mxu0 0
      %780 = vmatmul.mubr.bf16.gmra.mrb[0].mxu0 %v625
      %v781 = vpop.f32.mrb[0].mxu0
      %v782 = vadd.f32 0.0, %v781
      %v783 = vpop.f32.mrb[0].mxu0
      %v784 = vpop.f32.mrb[0].mxu0
      %v785 = vadd.f32 0.0, %v784
      %v786 = vpop.f32.mrb[0].mxu0
      %787 = vdwg.mxu0
      %788 = vst [vmem:[%s318] sm:$0xff] %v662
      %789 = vst [vmem:[%s318 + $0x8] sm:$0xff] %v665
      %790 = vst [vmem:[%s318 + $0x10] sm:$0xff] %v670
      %791 = vst [vmem:[%s318 + $0x18] sm:$0xff] %v673
      %792 = vst [vmem:[%s318 + $0x20] sm:$0xff] %v678
      %793 = vst [vmem:[%s318 + $0x28] sm:$0xff] %v681
      %794 = vst [vmem:[%s318 + $0x30] sm:$0xff] %v686
      %795 = vst [vmem:[%s318 + $0x38] sm:$0xff] %v689
      %796 = vst [vmem:[%s318 + $0x40] sm:$0xff] %v694
      %797 = vst [vmem:[%s318 + $0x48] sm:$0xff] %v697
      %798 = vst [vmem:[%s318 + $0x50] sm:$0xff] %v702
      %799 = vst [vmem:[%s318 + $0x58] sm:$0xff] %v705
      %800 = vst [vmem:[%s318 + $0x60] sm:$0xff] %v710
      %801 = vst [vmem:[%s318 + $0x68] sm:$0xff] %v713
      %802 = vst [vmem:[%s318 + $0x70] sm:$0xff] %v718
      %803 = vst [vmem:[%s318 + $0x78] sm:$0xff] %v721
      %804 = vst [vmem:[%s318 + $0x80] sm:$0xff] %v726
      %805 = vst [vmem:[%s318 + $0x88] sm:$0xff] %v729
      %806 = vst [vmem:[%s318 + $0x90] sm:$0xff] %v734
      %807 = vst [vmem:[%s318 + $0x98] sm:$0xff] %v737
      %808 = vst [vmem:[%s318 + $0xa0] sm:$0xff] %v742
      %809 = vst [vmem:[%s318 + $0xa8] sm:$0xff] %v745
      %810 = vst [vmem:[%s318 + $0xb0] sm:$0xff] %v750
      %811 = vst [vmem:[%s318 + $0xb8] sm:$0xff] %v753
      %812 = vst [vmem:[%s318 + $0xc0] sm:$0xff] %v758
      %813 = vst [vmem:[%s318 + $0xc8] sm:$0xff] %v761
      %814 = vst [vmem:[%s318 + $0xd0] sm:$0xff] %v766
      %815 = vst [vmem:[%s318 + $0xd8] sm:$0xff] %v769
      %816 = vst [vmem:[%s318 + $0xe0] sm:$0xff] %v774
      %817 = vst [vmem:[%s318 + $0xe8] sm:$0xff] %v777
      %818 = vst [vmem:[%s318 + $0xf0] sm:$0xff] %v782
      %819 = vst [vmem:[%s318 + $0xf8] sm:$0xff] %v785
      %v820 = vadd.f32 %v662, %v665
      %v821 = vadd.f32 %v820, %v670
      %v822 = vadd.f32 %v821, %v673
      %v823 = vadd.f32 %v822, %v678
      %v824 = vadd.f32 %v823, %v681
      %v825 = vadd.f32 %v824, %v686
      %v826 = vadd.f32 %v825, %v689
      %v827 = vadd.f32 %v826, %v694
      %v828 = vadd.f32 %v827, %v697
      %v829 = vadd.f32 %v828, %v702
      %v830 = vadd.f32 %v829, %v705
      %v831 = vadd.f32 %v830, %v710
      %v832 = vadd.f32 %v831, %v713
      %v833 = vadd.f32 %v832, %v718
      %v834 = vadd.f32 %v833, %v721
      %v835 = vadd.f32 %v834, %v726
      %v836 = vadd.f32 %v835, %v729
      %v837 = vadd.f32 %v836, %v734
      %v838 = vadd.f32 %v837, %v737
      %v839 = vadd.f32 %v838, %v742
      %v840 = vadd.f32 %v839, %v745
      %v841 = vadd.f32 %v840, %v750
      %v842 = vadd.f32 %v841, %v753
      %v843 = vadd.f32 %v842, %v758
      %v844 = vadd.f32 %v843, %v761
      %v845 = vadd.f32 %v844, %v766
      %v846 = vadd.f32 %v845, %v769
      %v847 = vadd.f32 %v846, %v774
      %v848 = vadd.f32 %v847, %v777
      %v849 = vadd.f32 %v848, %v782
      %v850 = vadd.f32 %v849, %v785
      %v851 = vrot.slane %v850, 4
      %v852 = vadd.f32 %v850, %v851
      %v853 = vrot.slane %v852, 2
      %v854 = vadd.f32 %v852, %v853
      %v855 = vrot.slane %v854, 1
      %v856 = vadd.f32 %v854, %v855
      %857 = vst [vmem:[%s322] sm:$0x1] %v856
      %v858 = vmul.f32 %v662, %v662
      %v859 = vmul.f32 %v665, %v665
      %v860 = vmul.f32 %v670, %v670
      %v861 = vmul.f32 %v673, %v673
      %v862 = vmul.f32 %v678, %v678
      %v863 = vmul.f32 %v681, %v681
      %v864 = vmul.f32 %v686, %v686
      %v865 = vmul.f32 %v689, %v689
      %v866 = vmul.f32 %v694, %v694
      %v867 = vmul.f32 %v697, %v697
      %v868 = vmul.f32 %v702, %v702
      %v869 = vmul.f32 %v705, %v705
      %v870 = vmul.f32 %v710, %v710
      %v871 = vmul.f32 %v713, %v713
      %v872 = vmul.f32 %v718, %v718
      %v873 = vmul.f32 %v721, %v721
      %v874 = vmul.f32 %v726, %v726
      %v875 = vmul.f32 %v729, %v729
      %v876 = vmul.f32 %v734, %v734
      %v877 = vmul.f32 %v737, %v737
      %v878 = vmul.f32 %v742, %v742
      %v879 = vmul.f32 %v745, %v745
      %v880 = vmul.f32 %v750, %v750
      %v881 = vmul.f32 %v753, %v753
      %v882 = vmul.f32 %v758, %v758
      %v883 = vmul.f32 %v761, %v761
      %v884 = vmul.f32 %v766, %v766
      %v885 = vmul.f32 %v769, %v769
      %v886 = vmul.f32 %v774, %v774
      %v887 = vmul.f32 %v777, %v777
      %v888 = vmul.f32 %v782, %v782
      %v889 = vmul.f32 %v785, %v785
      %v890 = vadd.f32 %v858, %v859
      %v891 = vadd.f32 %v890, %v860
      %v892 = vadd.f32 %v891, %v861
      %v893 = vadd.f32 %v892, %v862
      %v894 = vadd.f32 %v893, %v863
      %v895 = vadd.f32 %v894, %v864
      %v896 = vadd.f32 %v895, %v865
      %v897 = vadd.f32 %v896, %v866
      %v898 = vadd.f32 %v897, %v867
      %v899 = vadd.f32 %v898, %v868
      %v900 = vadd.f32 %v899, %v869
      %v901 = vadd.f32 %v900, %v870
      %v902 = vadd.f32 %v901, %v871
      %v903 = vadd.f32 %v902, %v872
      %v904 = vadd.f32 %v903, %v873
      %v905 = vadd.f32 %v904, %v874
      %v906 = vadd.f32 %v905, %v875
      %v907 = vadd.f32 %v906, %v876
      %v908 = vadd.f32 %v907, %v877
      %v909 = vadd.f32 %v908, %v878
      %v910 = vadd.f32 %v909, %v879
      %v911 = vadd.f32 %v910, %v880
      %v912 = vadd.f32 %v911, %v881
      %v913 = vadd.f32 %v912, %v882
      %v914 = vadd.f32 %v913, %v883
      %v915 = vadd.f32 %v914, %v884
      %v916 = vadd.f32 %v915, %v885
      %v917 = vadd.f32 %v916, %v886
      %v918 = vadd.f32 %v917, %v887
      %v919 = vadd.f32 %v918, %v888
      %v920 = vadd.f32 %v919, %v889
      %v921 = vrot.slane %v920, 4
      %v922 = vadd.f32 %v920, %v921
      %v923 = vrot.slane %v922, 2
      %v924 = vadd.f32 %v922, %v923
      %v925 = vrot.slane %v924, 1
      %v926 = vadd.f32 %v924, %v925
      %927 = vst [vmem:[%s325] sm:$0x1] %v926
      %s928 = smul.u32 32, %s20
      %p929 = scmp.lt.s32.totalorder %s928, 63
      %s930 = scalar_select %p929, %s928, 63
      %s931 = smul.addr %s930, 8
      %s932 = scalar_lea.vmem %s6, %s931
      %p933 = scmp.lt.s32.totalorder %s20, 1
      %s934 = scalar_select %p933, %s20, 1
      %s935 = scalar_lea.vmem %s7, %s934
      %p936 = scmp.lt.s32.totalorder %s20, 1
      %s937 = scalar_select %p936, %s20, 1
      %s938 = scalar_lea.vmem %s8, %s937
      // Predicated region
      $region45: #{block_forward.6} parent=43 // pred_check
        %p939 = pneg %p169
      $region46: #{block_forward.6} parent=43 // pred_check_branch
        %941 = sbr.rel (%p939) target = $region48
      $region47: #{block_forward.6} parent=43 // pred_region
        %s942 = smul.u32 32, %s20
      $region48: #{block_forward.6} parent=43 // pred_fallthru
        _
      // Predicated region
      $region49: #{block_forward.6} parent=43 // pred_check
        %p943 = pneg %p195
      $region50: #{block_forward.6} parent=43 // pred_check_branch
        %945 = sbr.rel (%p943) target = $region52
      $region51: #{block_forward.6} parent=43 // pred_region
        _
      $region52: #{block_forward.6} parent=43 // pred_fallthru
        _
      // Predicated region
      $region53: #{block_forward.6} parent=43 // pred_check
        %p946 = pneg %p221
      $region54: #{block_forward.6} parent=43 // pred_check_branch
        %948 = sbr.rel (%p946) target = $region56
      $region55: #{block_forward.6} parent=43 // pred_region
        _
      $region56: #{block_forward.6} parent=43 // pred_fallthru
        _
    $region44: #{block_forward.6} parent=5 // pred_fallthru
      _
    %p949 = scmp.le.s32.totalorder 2, %s15
    // Predicated region
    $region57: #{block_forward.6} parent=5 // pred_check
      %p950 = pneg %p949
    $region58: #{block_forward.6} parent=5 // pred_check_branch
      %952 = sbr.rel (%p950) target = $region60
    $region59: #{block_forward.6} parent=5 // pred_region
      %s953 = ssub.s32 %s15, 2
      // Predicated region
      $region61: #{block_forward.6} parent=59 // pred_check
        %p954 = pneg %p175
      $region62: #{block_forward.6} parent=59 // pred_check_branch
        %956 = sbr.rel (%p954) target = $region64
      $region63: #{block_forward.6} parent=59 // pred_region
        %s957 = smul.u32 32, %s21
        %p958 = scmp.lt.s32.totalorder %s957, 63
        %s959 = scalar_select %p958, %s957, 63
        %s960 = smul.addr %s959, 8
        %s961 = scalar_lea.vmem %s6, %s960
      $region64: #{block_forward.6} parent=59 // pred_fallthru
        _
      // Predicated region
      $region65: #{block_forward.6} parent=59 // pred_check
        %p962 = pneg %p201
      $region66: #{block_forward.6} parent=59 // pred_check_branch
        %964 = sbr.rel (%p962) target = $region68
      $region67: #{block_forward.6} parent=59 // pred_region
        %p965 = scmp.lt.s32.totalorder %s21, 1
        %s966 = scalar_select %p965, %s21, 1
        %s967 = scalar_lea.vmem %s7, %s966
      $region68: #{block_forward.6} parent=59 // pred_fallthru
        _
      // Predicated region
      $region69: #{block_forward.6} parent=59 // pred_check
        %p968 = pneg %p227
      $region70: #{block_forward.6} parent=59 // pred_check_branch
        %970 = sbr.rel (%p968) target = $region72
      $region71: #{block_forward.6} parent=59 // pred_region
        %p971 = scmp.lt.s32.totalorder %s21, 1
        %s972 = scalar_select %p971, %s21, 1
        %s973 = scalar_lea.vmem %s8, %s972
      $region72: #{block_forward.6} parent=59 // pred_fallthru
        _
    $region60: #{block_forward.6} parent=5 // pred_fallthru
      _
  $region6: #{block_forward.6} parent=0 // loop_footer
    %s19 = sadd.s32 1, %s15
  $region7: #{block_forward.6} parent=0 // loop_footer_branch
    %14 = sbr.rel target = $region3
  $region8: #{block_forward.6} parent=0 // loop_exit
    _

// kernel: block_forward.4
$region0: #{block_forward.4}
  #allocation0 [shape = 'u32[]', space=smem, size = 0x4, offset = 0x4, fixed_abs, tag = 'smem constant byte address 0x4 - core index']
  #allocation1 [shape = 'u32[144,128]{1,0:T(1,128)}', space=vmem, size = 0x12000, scoped, tag = 'internal scratch']
  %s0 = inlined_call_operand.vmem [shape: f32[512,128], index: 0, kind: input, shape index: {}]
  %s1 = inlined_call_operand.vmem [shape: bf16[128,32], index: 1, kind: input, shape index: {}]
  %s2 = inlined_call_operand.vmem [shape: bf16[512,32], index: 2, kind: output, shape index: {0}]
  %s3 = inlined_call_operand.vmem [shape: f32[2,1,32], index: 3, kind: output, shape index: {1}]
  %s4 = inlined_call_operand.vmem [shape: f32[2,1,32], index: 4, kind: output, shape index: {2}]
  %5 = xla_tuple %s2, %s3, %s4
  %s6 = sld [smem:[#allocation0]]
  $region57: #{block_forward.4} parent=0
    _
  %s8 = ssub.s32 1, %s6
  %s9 = scalar_select 0, %s8, %s6
  loop: start=0, step=1, limit=4
  $region2: #{block_forward.4} parent=0 // loop_pre_header
    _
  $region3: #{block_forward.4} parent=0 // loop_header
    %s11 = sphi 0, %s15
    %p12 = scmp.ge.s32.totalorder %s11, 4
    %s21 = sphi 0, %s23
    %s24 = sphi 0, %s21
    %s25 = sphi 0, %s24
    %s41 = sphi 0, %s25
    %s45 = sphi 0, %s45
    %s47 = sphi 0, %s45
    %s48 = sphi 0, %s47
    %s62 = sphi 0, %s48
    %s68 = sphi 0, %s70
    %s71 = sphi 0, %s68
    %s72 = sphi 0, %s71
    %s88 = sphi 0, %s72
    %s94 = sphi 0, %s96
    %s97 = sphi 0, %s94
    %s98 = sphi 0, %s97
    %s114 = sphi 0, %s98
    %s120 = sphi 0, %s122
    %s123 = sphi 0, %s120
    %s124 = sphi 0, %s123
    %s140 = sphi 0, %s124
  $region4: #{block_forward.4} parent=0 // loop_header_branch
    %14 = sbr.rel (%p12) target = $region8
  $region5: #{block_forward.4} parent=0 // loop_body
    %s16 = ssub.s32 %s11, 1
    %s17 = ssub.s32 %s11, 2
    %s18 = sadd.s32 %s11, 1
    %s19 = ssub.s32 %s11, %s18
    %p20 = scmp.eq.s32.totalorder %s19, 0
    %s22 = sadd.s32 %s21, 1
    %s23 = scalar_select %p20, %s21, %s22
    %p26 = pneg %p20
    %p27 = scmp.eq.s32.totalorder %s11, 1
    %p28 = por %p26, %p27
    %p29 = scmp.ne.s32.totalorder %s21, %s24
    %p30 = scmp.eq.s32.totalorder %s11, 0
    %p31 = por %p29, %p30
    %p32 = scmp.ne.s32.totalorder %s21, %s24
    %p33 = scmp.eq.s32.totalorder %s16, 1
    %p34 = por %p32, %p33
    %p35 = scmp.ne.s32.totalorder %s24, %s25
    %p36 = scmp.eq.s32.totalorder %s16, 0
    %p37 = por %p35, %p36
    %p38 = scmp.ne.s32.totalorder %s24, %s25
    %p39 = scmp.eq.s32.totalorder %s17, 1
    %p40 = por %p38, %p39
    %p42 = scmp.ne.s32.totalorder %s25, %s41
    %p43 = scmp.eq.s32.totalorder %s17, 0
    %p44 = por %p42, %p43
    %s46 = sadd.s32 %s45, 1
    %p49 = scmp.eq.s32.totalorder %s11, 1
    %p50 = scmp.ne.s32.totalorder %s45, %s47
    %p51 = scmp.eq.s32.totalorder %s11, 0
    %p52 = por %p50, %p51
    %p53 = scmp.ne.s32.totalorder %s45, %s47
    %p54 = scmp.eq.s32.totalorder %s16, 1
    %p55 = por %p53, %p54
    %p56 = scmp.ne.s32.totalorder %s47, %s48
    %p57 = scmp.eq.s32.totalorder %s16, 0
    %p58 = por %p56, %p57
    %p59 = scmp.ne.s32.totalorder %s47, %s48
    %p60 = scmp.eq.s32.totalorder %s17, 1
    %p61 = por %p59, %p60
    %p63 = scmp.ne.s32.totalorder %s48, %s62
    %p64 = scmp.eq.s32.totalorder %s17, 0
    %p65 = por %p63, %p64
    %s66 = ssub.s32 %s11, %s18
    %p67 = scmp.eq.s32.totalorder %s66, 0
    %s69 = sadd.s32 %s68, 1
    %s70 = scalar_select %p67, %s68, %s69
    %p73 = pneg %p67
    %p74 = scmp.eq.s32.totalorder %s11, 1
    %p75 = por %p73, %p74
    %p76 = scmp.ne.s32.totalorder %s68, %s71
    %p77 = scmp.eq.s32.totalorder %s11, 0
    %p78 = por %p76, %p77
    %p79 = scmp.ne.s32.totalorder %s68, %s71
    %p80 = scmp.eq.s32.totalorder %s16, 1
    %p81 = por %p79, %p80
    %p82 = scmp.ne.s32.totalorder %s71, %s72
    %p83 = scmp.eq.s32.totalorder %s16, 0
    %p84 = por %p82, %p83
    %p85 = scmp.ne.s32.totalorder %s71, %s72
    %p86 = scmp.eq.s32.totalorder %s17, 1
    %p87 = por %p85, %p86
    %p89 = scmp.ne.s32.totalorder %s72, %s88
    %p90 = scmp.eq.s32.totalorder %s17, 0
    %p91 = por %p89, %p90
    %s92 = ssub.s32 %s11, %s18
    %p93 = scmp.eq.s32.totalorder %s92, 0
    %s95 = sadd.s32 %s94, 1
    %s96 = scalar_select %p93, %s94, %s95
    %p99 = pneg %p93
    %p100 = scmp.eq.s32.totalorder %s11, 1
    %p101 = por %p99, %p100
    %p102 = scmp.ne.s32.totalorder %s94, %s97
    %p103 = scmp.eq.s32.totalorder %s11, 0
    %p104 = por %p102, %p103
    %p105 = scmp.ne.s32.totalorder %s94, %s97
    %p106 = scmp.eq.s32.totalorder %s16, 1
    %p107 = por %p105, %p106
    %p108 = scmp.ne.s32.totalorder %s97, %s98
    %p109 = scmp.eq.s32.totalorder %s16, 0
    %p110 = por %p108, %p109
    %p111 = scmp.ne.s32.totalorder %s97, %s98
    %p112 = scmp.eq.s32.totalorder %s17, 1
    %p113 = por %p111, %p112
    %p115 = scmp.ne.s32.totalorder %s98, %s114
    %p116 = scmp.eq.s32.totalorder %s17, 0
    %p117 = por %p115, %p116
    %s118 = ssub.s32 %s11, %s18
    %p119 = scmp.eq.s32.totalorder %s118, 0
    %s121 = sadd.s32 %s120, 1
    %s122 = scalar_select %p119, %s120, %s121
    %p125 = pneg %p119
    %p126 = scmp.eq.s32.totalorder %s11, 1
    %p127 = por %p125, %p126
    %p128 = scmp.ne.s32.totalorder %s120, %s123
    %p129 = scmp.eq.s32.totalorder %s11, 0
    %p130 = por %p128, %p129
    %p131 = scmp.ne.s32.totalorder %s120, %s123
    %p132 = scmp.eq.s32.totalorder %s16, 1
    %p133 = por %p131, %p132
    %p134 = scmp.ne.s32.totalorder %s123, %s124
    %p135 = scmp.eq.s32.totalorder %s16, 0
    %p136 = por %p134, %p135
    %p137 = scmp.ne.s32.totalorder %s123, %s124
    %p138 = scmp.eq.s32.totalorder %s17, 1
    %p139 = por %p137, %p138
    %p141 = scmp.ne.s32.totalorder %s124, %s140
    %p142 = scmp.eq.s32.totalorder %s17, 0
    %p143 = por %p141, %p142
    %p144 = scmp.le.s32.totalorder 1, %s11
    %p145 = scmp.lt.s32.totalorder %s11, 3
    %p146 = pnand %p144, %p145
    %p147 = pneg %p146
    // Predicated region
    $region9: #{block_forward.4} parent=5 // pred_check
      _
    $region10: #{block_forward.4} parent=5 // pred_check_branch
      %149 = sbr.rel (%p146) target = $region12
    $region11: #{block_forward.4} parent=5 // pred_region
      %s150 = ssub.s32 %s11, 1
      // Predicated region
      $region13: #{block_forward.4} parent=11 // pred_check
        %p151 = pneg %p58
      $region14: #{block_forward.4} parent=11 // pred_check_branch
        %153 = sbr.rel (%p151) target = $region16
      $region15: #{block_forward.4} parent=11 // pred_region
        _
      $region16: #{block_forward.4} parent=11 // pred_fallthru
        _
    $region12: #{block_forward.4} parent=5 // pred_fallthru
      _
    %p154 = scmp.lt.s32.totalorder %s11, 2
    // Predicated region
    $region17: #{block_forward.4} parent=5 // pred_check
      %p155 = pneg %p154
    $region18: #{block_forward.4} parent=5 // pred_check_branch
      %157 = sbr.rel (%p155) target = $region20
    $region19: #{block_forward.4} parent=5 // pred_region
      // Predicated region
      $region21: #{block_forward.4} parent=19 // pred_check
        %p158 = pneg %p31
      $region22: #{block_forward.4} parent=19 // pred_check_branch
        %160 = sbr.rel (%p158) target = $region24
      $region23: #{block_forward.4} parent=19 // pred_region
        %s161 = smul.u32 32, %s11
        %p162 = scmp.lt.s32.totalorder %s161, 63
        %s163 = scalar_select %p162, %s161, 63
        %s164 = smul.addr %s163, 8
        %s165 = scalar_lea.vmem %s0, %s164
        %s166 = smul.u32 32, %s11
      $region24: #{block_forward.4} parent=19 // pred_fallthru
        _
    $region20: #{block_forward.4} parent=5 // pred_fallthru
      _
    %p167 = scmp.le.s32.totalorder 1, %s11
    %p168 = scmp.lt.s32.totalorder %s11, 3
    %p169 = pnand %p167, %p168
    %p170 = pneg %p169
    // Predicated region
    $region25: #{block_forward.4} parent=5 // pred_check
      _
    $region26: #{block_forward.4} parent=5 // pred_check_branch
      %172 = sbr.rel (%p169) target = $region28
    $region27: #{block_forward.4} parent=5 // pred_region
      %s173 = ssub.s32 %s11, 1
      %s174 = smul.u32 32, %s16
      %p175 = scmp.lt.s32.totalorder %s174, 63
      %s176 = scalar_select %p175, %s174, 63
      %s177 = smul.addr %s176, 8
      %s178 = scalar_lea.vmem %s0, %s177
      %p179 = pneg %p37
      %p180 = pneg %p34
      %p181 = pneg %p58
      %p182 = pneg %p55
      %p183 = pneg %p84
      %p184 = pneg %p81
      %s185 = smul.u32 32, %s16
      %p186 = scmp.lt.s32.totalorder %s185, 63
      %s187 = scalar_select %p186, %s185, 63
      %s188 = smul.addr %s187, 4
      %s189 = scalar_lea.vmem %s2, %s188
      %p190 = pneg %p110
      %p191 = pneg %p107
      %p192 = scmp.lt.s32.totalorder %s16, 1
      %s193 = scalar_select %p192, %s16, 1
      %s194 = scalar_lea.vmem %s3, %s193
      %p195 = pneg %p136
      %p196 = pneg %p133
      %p197 = scmp.lt.s32.totalorder %s16, 1
      %s198 = scalar_select %p197, %s16, 1
      %s199 = scalar_lea.vmem %s4, %s198
      %s200 = smul.u32 32, %s16
      %p201 = scmp.lt.s32.totalorder %s200, 63
      %s202 = scalar_select %p201, %s200, 63
      %s203 = smul.addr %s202, 8
      %s204 = scalar_lea.vmem %s0, %s203
      %s205 = smul.u32 32, %s16
      %s206 = smul.u32 32, %s16
      %p207 = scmp.lt.s32.totalorder %s206, 63
      %s208 = scalar_select %p207, %s206, 63
      %s209 = smul.addr %s208, 4
      %s210 = scalar_lea.vmem %s2, %s209
      %s211 = smul.u32 32, %s16
      %p212 = scmp.lt.s32.totalorder %s16, 1
      %s213 = scalar_select %p212, %s16, 1
      %s214 = scalar_lea.vmem %s3, %s213
      %p215 = scmp.lt.s32.totalorder %s16, 1
      %s216 = scalar_select %p215, %s16, 1
      %s217 = scalar_lea.vmem %s4, %s216
      %v219 = vld [vmem:[%s204] sm:$0xff]
      %v220 = vld [vmem:[%s204 + $0x8] sm:$0xff]
      %v221 = vld [vmem:[%s204 + $0x10] sm:$0xff]
      %v222 = vld [vmem:[%s204 + $0x18] sm:$0xff]
      %v223 = vld [vmem:[%s204 + $0x20] sm:$0xff]
      %v224 = vld [vmem:[%s204 + $0x28] sm:$0xff]
      %v225 = vld [vmem:[%s204 + $0x30] sm:$0xff]
      %v226 = vld [vmem:[%s204 + $0x38] sm:$0xff]
      %v227 = vld [vmem:[%s204 + $0x40] sm:$0xff]
      %v228 = vld [vmem:[%s204 + $0x48] sm:$0xff]
      %v229 = vld [vmem:[%s204 + $0x50] sm:$0xff]
      %v230 = vld [vmem:[%s204 + $0x58] sm:$0xff]
      %v231 = vld [vmem:[%s204 + $0x60] sm:$0xff]
      %v232 = vld [vmem:[%s204 + $0x68] sm:$0xff]
      %v233 = vld [vmem:[%s204 + $0x70] sm:$0xff]
      %v234 = vld [vmem:[%s204 + $0x78] sm:$0xff]
      %v235 = vld [vmem:[%s204 + $0x80] sm:$0xff]
      %v236 = vld [vmem:[%s204 + $0x88] sm:$0xff]
      %v237 = vld [vmem:[%s204 + $0x90] sm:$0xff]
      %v238 = vld [vmem:[%s204 + $0x98] sm:$0xff]
      %v239 = vld [vmem:[%s204 + $0xa0] sm:$0xff]
      %v240 = vld [vmem:[%s204 + $0xa8] sm:$0xff]
      %v241 = vld [vmem:[%s204 + $0xb0] sm:$0xff]
      %v242 = vld [vmem:[%s204 + $0xb8] sm:$0xff]
      %v243 = vld [vmem:[%s204 + $0xc0] sm:$0xff]
      %v244 = vld [vmem:[%s204 + $0xc8] sm:$0xff]
      %v245 = vld [vmem:[%s204 + $0xd0] sm:$0xff]
      %v246 = vld [vmem:[%s204 + $0xd8] sm:$0xff]
      %v247 = vld [vmem:[%s204 + $0xe0] sm:$0xff]
      %v248 = vld [vmem:[%s204 + $0xe8] sm:$0xff]
      %v249 = vld [vmem:[%s204 + $0xf0] sm:$0xff]
      %v250 = vld [vmem:[%s204 + $0xf8] sm:$0xff]
      %v251 = vpack.c.bf16 %v220, %v219
      %v252 = vpack.c.bf16 %v222, %v221
      %v253 = vpack.c.bf16 %v224, %v223
      %v254 = vpack.c.bf16 %v226, %v225
      %v255 = vpack.c.bf16 %v228, %v227
      %v256 = vpack.c.bf16 %v230, %v229
      %v257 = vpack.c.bf16 %v232, %v231
      %v258 = vpack.c.bf16 %v234, %v233
      %v259 = vpack.c.bf16 %v236, %v235
      %v260 = vpack.c.bf16 %v238, %v237
      %v261 = vpack.c.bf16 %v240, %v239
      %v262 = vpack.c.bf16 %v242, %v241
      %v263 = vpack.c.bf16 %v244, %v243
      %v264 = vpack.c.bf16 %v246, %v245
      %v265 = vpack.c.bf16 %v248, %v247
      %v266 = vpack.c.bf16 %v250, %v249
      %v267 = vld [vmem:[%s1] sm:$0xf]
      %v268 = vld [vmem:[%s1 + $0x4] sm:$0xf]
      %v269 = vld [vmem:[%s1 + $0x8] sm:$0xf]
      %v270 = vld [vmem:[%s1 + $0xc] sm:$0xf]
      %v271 = vld [vmem:[%s1 + $0x10] sm:$0xf]
      %v272 = vld [vmem:[%s1 + $0x14] sm:$0xf]
      %v273 = vld [vmem:[%s1 + $0x18] sm:$0xf]
      %v274 = vld [vmem:[%s1 + $0x1c] sm:$0xf]
      %v275 = vld [vmem:[%s1 + $0x20] sm:$0xf]
      %v276 = vld [vmem:[%s1 + $0x24] sm:$0xf]
      %v277 = vld [vmem:[%s1 + $0x28] sm:$0xf]
      %v278 = vld [vmem:[%s1 + $0x2c] sm:$0xf]
      %v279 = vld [vmem:[%s1 + $0x30] sm:$0xf]
      %v280 = vld [vmem:[%s1 + $0x34] sm:$0xf]
      %v281 = vld [vmem:[%s1 + $0x38] sm:$0xf]
      %v282 = vld [vmem:[%s1 + $0x3c] sm:$0xf]
      %v299 = vunpack.c.l.b16 %v267
      %v300 = vunpack.c.l.b16 %v268
      %v301 = vunpack.c.l.b16 %v269
      %v302 = vunpack.c.l.b16 %v270
      %v303 = vunpack.c.l.b16 %v271
      %v304 = vunpack.c.l.b16 %v272
      %v305 = vunpack.c.l.b16 %v273
      %v306 = vunpack.c.l.b16 %v274
      %v307 = vunpack.c.l.b16 %v275
      %v308 = vunpack.c.l.b16 %v276
      %v309 = vunpack.c.l.b16 %v277
      %v310 = vunpack.c.l.b16 %v278
      %v311 = vunpack.c.l.b16 %v279
      %v312 = vunpack.c.l.b16 %v280
      %v313 = vunpack.c.l.b16 %v281
      %v314 = vunpack.c.l.b16 %v282
      %v315 = vpack.c.b16 %v300, %v299
      %v316 = vpack.c.b16 %v302, %v301
      %v317 = vpack.c.b16 %v304, %v303
      %v318 = vpack.c.b16 %v306, %v305
      %v319 = vpack.c.b16 %v308, %v307
      %v320 = vpack.c.b16 %v310, %v309
      %v321 = vpack.c.b16 %v312, %v311
      %v322 = vpack.c.b16 %v314, %v313
      %331 = vmatprep.subr.bf16.mxu0 0
      %332 = vmatpush1.bf16.msra.mxu0 %v315
      %333 = vmatprep.subr.bf16.mxu0 0
      %334 = vmatpush1.bf16.msra.mxu0 %v316
      %335 = vmatprep.subr.bf16.mxu0 0
      %336 = vmatpush1.bf16.msra.mxu0 %v317
      %337 = vmatprep.subr.bf16.mxu0 0
      %338 = vmatpush1.bf16.msra.mxu0 %v318
      %339 = vmatprep.subr.bf16.mxu0 0
      %340 = vmatpush1.bf16.msra.mxu0 %v319
      %341 = vmatprep.subr.bf16.mxu0 0
      %342 = vmatpush1.bf16.msra.mxu0 %v320
      %343 = vmatprep.subr.bf16.mxu0 0
      %344 = vmatpush1.bf16.msra.mxu0 %v321
      %345 = vmatprep.subr.bf16.mxu0 0
      %346 = vmatpush1.bf16.msra.mxu0 %v322
      %347 = vmatprep.subr.bf16.mxu0 0
      %348 = vmatpush1.bf16.msra.mxu0 0
      %349 = vmatprep.subr.bf16.mxu0 0
      %350 = vmatpush1.bf16.msra.mxu0 0
      %351 = vmatprep.subr.bf16.mxu0 0
      %352 = vmatpush1.bf16.msra.mxu0 0
      %353 = vmatprep.subr.bf16.mxu0 0
      %354 = vmatpush1.bf16.msra.mxu0 0
      %355 = vmatprep.subr.bf16.mxu0 0
      %356 = vmatpush1.bf16.msra.mxu0 0
      %357 = vmatprep.subr.bf16.mxu0 0
      %358 = vmatpush1.bf16.msra.mxu0 0
      %359 = vmatprep.subr.bf16.mxu0 0
      %360 = vmatpush1.bf16.msra.mxu0 0
      %361 = vmatprep.subr.bf16.mxu0 0
      %362 = vmatpush1.bf16.msra.mxu0 0
      %363 = vmatprep.mubr.bf16.mxu0 0
      %364 = vmatmul.mubr.bf16.gmra.mrb[0].mxu0 %v251
      %v365 = vpop.f32.mrb[0].mxu0
      %v366 = vadd.f32 0.0, %v365
      %v367 = vpop.f32.mrb[0].mxu0
      %v368 = vpop.f32.mrb[0].mxu0
      %v369 = vadd.f32 0.0, %v368
      %v370 = vpop.f32.mrb[0].mxu0
      %371 = vmatprep.mubr.bf16.mxu0 0
      %372 = vmatmul.mubr.bf16.gmra.mrb[0].mxu0 %v252
      %v373 = vpop.f32.mrb[0].mxu0
      %v374 = vadd.f32 0.0, %v373
      %v375 = vpop.f32.mrb[0].mxu0
      %v376 = vpop.f32.mrb[0].mxu0
      %v377 = vadd.f32 0.0, %v376
      %v378 = vpop.f32.mrb[0].mxu0
      %379 = vmatprep.mubr.bf16.mxu0 0
      %380 = vmatmul.mubr.bf16.gmra.mrb[0].mxu0 %v253
      %v381 = vpop.f32.mrb[0].mxu0
      %v382 = vadd.f32 0.0, %v381
      %v383 = vpop.f32.mrb[0].mxu0
      %v384 = vpop.f32.mrb[0].mxu0
      %v385 = vadd.f32 0.0, %v384
      %v386 = vpop.f32.mrb[0].mxu0
      %387 = vmatprep.mubr.bf16.mxu0 0
      %388 = vmatmul.mubr.bf16.gmra.mrb[0].mxu0 %v254
      %v389 = vpop.f32.mrb[0].mxu0
      %v390 = vadd.f32 0.0, %v389
      %v391 = vpop.f32.mrb[0].mxu0
      %v392 = vpop.f32.mrb[0].mxu0
      %v393 = vadd.f32 0.0, %v392
      %v394 = vpop.f32.mrb[0].mxu0
      %395 = vmatprep.mubr.bf16.mxu0 0
      %396 = vmatmul.mubr.bf16.gmra.mrb[0].mxu0 %v255
      %v397 = vpop.f32.mrb[0].mxu0
      %v398 = vadd.f32 0.0, %v397
      %v399 = vpop.f32.mrb[0].mxu0
      %v400 = vpop.f32.mrb[0].mxu0
      %v401 = vadd.f32 0.0, %v400
      %v402 = vpop.f32.mrb[0].mxu0
      %403 = vmatprep.mubr.bf16.mxu0 0
      %404 = vmatmul.mubr.bf16.gmra.mrb[0].mxu0 %v256
      %v405 = vpop.f32.mrb[0].mxu0
      %v406 = vadd.f32 0.0, %v405
      %v407 = vpop.f32.mrb[0].mxu0
      %v408 = vpop.f32.mrb[0].mxu0
      %v409 = vadd.f32 0.0, %v408
      %v410 = vpop.f32.mrb[0].mxu0
      %411 = vmatprep.mubr.bf16.mxu0 0
      %412 = vmatmul.mubr.bf16.gmra.mrb[0].mxu0 %v257
      %v413 = vpop.f32.mrb[0].mxu0
      %v414 = vadd.f32 0.0, %v413
      %v415 = vpop.f32.mrb[0].mxu0
      %v416 = vpop.f32.mrb[0].mxu0
      %v417 = vadd.f32 0.0, %v416
      %v418 = vpop.f32.mrb[0].mxu0
      %419 = vmatprep.mubr.bf16.mxu0 0
      %420 = vmatmul.mubr.bf16.gmra.mrb[0].mxu0 %v258
      %v421 = vpop.f32.mrb[0].mxu0
      %v422 = vadd.f32 0.0, %v421
      %v423 = vpop.f32.mrb[0].mxu0
      %v424 = vpop.f32.mrb[0].mxu0
      %v425 = vadd.f32 0.0, %v424
      %v426 = vpop.f32.mrb[0].mxu0
      %427 = vmatprep.mubr.bf16.mxu0 0
      %428 = vmatmul.mubr.bf16.gmra.mrb[0].mxu0 %v259
      %v429 = vpop.f32.mrb[0].mxu0
      %v430 = vadd.f32 0.0, %v429
      %v431 = vpop.f32.mrb[0].mxu0
      %v432 = vpop.f32.mrb[0].mxu0
      %v433 = vadd.f32 0.0, %v432
      %v434 = vpop.f32.mrb[0].mxu0
      %435 = vmatprep.mubr.bf16.mxu0 0
      %436 = vmatmul.mubr.bf16.gmra.mrb[0].mxu0 %v260
      %v437 = vpop.f32.mrb[0].mxu0
      %v438 = vadd.f32 0.0, %v437
      %v439 = vpop.f32.mrb[0].mxu0
      %v440 = vpop.f32.mrb[0].mxu0
      %v441 = vadd.f32 0.0, %v440
      %v442 = vpop.f32.mrb[0].mxu0
      %443 = vmatprep.mubr.bf16.mxu0 0
      %444 = vmatmul.mubr.bf16.gmra.mrb[0].mxu0 %v261
      %v445 = vpop.f32.mrb[0].mxu0
      %v446 = vadd.f32 0.0, %v445
      %v447 = vpop.f32.mrb[0].mxu0
      %v448 = vpop.f32.mrb[0].mxu0
      %v449 = vadd.f32 0.0, %v448
      %v450 = vpop.f32.mrb[0].mxu0
      %451 = vmatprep.mubr.bf16.mxu0 0
      %452 = vmatmul.mubr.bf16.gmra.mrb[0].mxu0 %v262
      %v453 = vpop.f32.mrb[0].mxu0
      %v454 = vadd.f32 0.0, %v453
      %v455 = vpop.f32.mrb[0].mxu0
      %v456 = vpop.f32.mrb[0].mxu0
      %v457 = vadd.f32 0.0, %v456
      %v458 = vpop.f32.mrb[0].mxu0
      %459 = vmatprep.mubr.bf16.mxu0 0
      %460 = vmatmul.mubr.bf16.gmra.mrb[0].mxu0 %v263
      %v461 = vpop.f32.mrb[0].mxu0
      %v462 = vadd.f32 0.0, %v461
      %v463 = vpop.f32.mrb[0].mxu0
      %v464 = vpop.f32.mrb[0].mxu0
      %v465 = vadd.f32 0.0, %v464
      %v466 = vpop.f32.mrb[0].mxu0
      %467 = vmatprep.mubr.bf16.mxu0 0
      %468 = vmatmul.mubr.bf16.gmra.mrb[0].mxu0 %v264
      %v469 = vpop.f32.mrb[0].mxu0
      %v470 = vadd.f32 0.0, %v469
      %v471 = vpop.f32.mrb[0].mxu0
      %v472 = vpop.f32.mrb[0].mxu0
      %v473 = vadd.f32 0.0, %v472
      %v474 = vpop.f32.mrb[0].mxu0
      %475 = vmatprep.mubr.bf16.mxu0 0
      %476 = vmatmul.mubr.bf16.gmra.mrb[0].mxu0 %v265
      %v477 = vpop.f32.mrb[0].mxu0
      %v478 = vadd.f32 0.0, %v477
      %v479 = vpop.f32.mrb[0].mxu0
      %v480 = vpop.f32.mrb[0].mxu0
      %v481 = vadd.f32 0.0, %v480
      %v482 = vpop.f32.mrb[0].mxu0
      %483 = vmatprep.mubr.bf16.mxu0 0
      %484 = vmatmul.mubr.bf16.gmra.mrb[0].mxu0 %v266
      %v485 = vpop.f32.mrb[0].mxu0
      %v486 = vadd.f32 0.0, %v485
      %v487 = vpop.f32.mrb[0].mxu0
      %v488 = vpop.f32.mrb[0].mxu0
      %v489 = vadd.f32 0.0, %v488
      %v490 = vpop.f32.mrb[0].mxu0
      %491 = vdwg.mxu0
      %v492 = vpack.c.bf16 %v369, %v366
      %v493 = vpack.c.bf16 %v377, %v374
      %v494 = vpack.c.bf16 %v385, %v382
      %v495 = vpack.c.bf16 %v393, %v390
      %v496 = vpack.c.bf16 %v401, %v398
      %v497 = vpack.c.bf16 %v409, %v406
      %v498 = vpack.c.bf16 %v417, %v414
      %v499 = vpack.c.bf16 %v425, %v422
      %v500 = vpack.c.bf16 %v433, %v430
      %v501 = vpack.c.bf16 %v441, %v438
      %v502 = vpack.c.bf16 %v449, %v446
      %v503 = vpack.c.bf16 %v457, %v454
      %v504 = vpack.c.bf16 %v465, %v462
      %v505 = vpack.c.bf16 %v473, %v470
      %v506 = vpack.c.bf16 %v481, %v478
      %v507 = vpack.c.bf16 %v489, %v486
      %v524 = vunpack.c.l.b16 %v492
      %v525 = vunpack.c.h.b16 %v492
      %v526 = vunpack.c.l.b16 %v493
      %v527 = vunpack.c.h.b16 %v493
      %v528 = vunpack.c.l.b16 %v494
      %v529 = vunpack.c.h.b16 %v494
      %v530 = vunpack.c.l.b16 %v495
      %v531 = vunpack.c.h.b16 %v495
      %v532 = vunpack.c.l.b16 %v496
      %v533 = vunpack.c.h.b16 %v496
      %v534 = vunpack.c.l.b16 %v497
      %v535 = vunpack.c.h.b16 %v497
      %v536 = vunpack.c.l.b16 %v498
      %v537 = vunpack.c.h.b16 %v498
      %v538 = vunpack.c.l.b16 %v499
      %v539 = vunpack.c.h.b16 %v499
      %v540 = vunpack.c.l.b16 %v500
      %v541 = vunpack.c.h.b16 %v500
      %v542 = vunpack.c.l.b16 %v501
      %v543 = vunpack.c.h.b16 %v501
      %v544 = vunpack.c.l.b16 %v502
      %v545 = vunpack.c.h.b16 %v502
      %v546 = vunpack.c.l.b16 %v503
      %v547 = vunpack.c.h.b16 %v503
      %v548 = vunpack.c.l.b16 %v504
      %v549 = vunpack.c.h.b16 %v504
      %v550 = vunpack.c.l.b16 %v505
      %v551 = vunpack.c.h.b16 %v505
      %v552 = vunpack.c.l.b16 %v506
      %v553 = vunpack.c.h.b16 %v506
      %v554 = vunpack.c.l.b16 %v507
      %v555 = vunpack.c.h.b16 %v507
      %v556 = vpack.c.b16 %v524, %v524
      %v557 = vpack.c.b16 %v525, %v525
      %v558 = vpack.c.b16 %v526, %v526
      %v559 = vpack.c.b16 %v527, %v527
      %v560 = vpack.c.b16 %v528, %v528
      %v561 = vpack.c.b16 %v529, %v529
      %v562 = vpack.c.b16 %v530, %v530
      %v563 = vpack.c.b16 %v531, %v531
      %v564 = vpack.c.b16 %v532, %v532
      %v565 = vpack.c.b16 %v533, %v533
      %v566 = vpack.c.b16 %v534, %v534
      %v567 = vpack.c.b16 %v535, %v535
      %v568 = vpack.c.b16 %v536, %v536
      %v569 = vpack.c.b16 %v537, %v537
      %v570 = vpack.c.b16 %v538, %v538
      %v571 = vpack.c.b16 %v539, %v539
      %v572 = vpack.c.b16 %v540, %v540
      %v573 = vpack.c.b16 %v541, %v541
      %v574 = vpack.c.b16 %v542, %v542
      %v575 = vpack.c.b16 %v543, %v543
      %v576 = vpack.c.b16 %v544, %v544
      %v577 = vpack.c.b16 %v545, %v545
      %v578 = vpack.c.b16 %v546, %v546
      %v579 = vpack.c.b16 %v547, %v547
      %v580 = vpack.c.b16 %v548, %v548
      %v581 = vpack.c.b16 %v549, %v549
      %v582 = vpack.c.b16 %v550, %v550
      %v583 = vpack.c.b16 %v551, %v551
      %v584 = vpack.c.b16 %v552, %v552
      %v585 = vpack.c.b16 %v553, %v553
      %v586 = vpack.c.b16 %v554, %v554
      %v587 = vpack.c.b16 %v555, %v555
      %vm620 = vcmask 257024
      %621 = vst.msk [vmem:[%s210] sm:$0xf] %vm620, %v556
      %622 = vst.msk [vmem:[%s210 + $0x4] sm:$0xf] %vm620, %v557
      %623 = vst.msk [vmem:[%s210 + $0x8] sm:$0xf] %vm620, %v558
      %624 = vst.msk [vmem:[%s210 + $0xc] sm:$0xf] %vm620, %v559
      %625 = vst.msk [vmem:[%s210 + $0x10] sm:$0xf] %vm620, %v560
      %626 = vst.msk [vmem:[%s210 + $0x14] sm:$0xf] %vm620, %v561
      %627 = vst.msk [vmem:[%s210 + $0x18] sm:$0xf] %vm620, %v562
      %628 = vst.msk [vmem:[%s210 + $0x1c] sm:$0xf] %vm620, %v563
      %629 = vst.msk [vmem:[%s210 + $0x20] sm:$0xf] %vm620, %v564
      %630 = vst.msk [vmem:[%s210 + $0x24] sm:$0xf] %vm620, %v565
      %631 = vst.msk [vmem:[%s210 + $0x28] sm:$0xf] %vm620, %v566
      %632 = vst.msk [vmem:[%s210 + $0x2c] sm:$0xf] %vm620, %v567
      %633 = vst.msk [vmem:[%s210 + $0x30] sm:$0xf] %vm620, %v568
      %634 = vst.msk [vmem:[%s210 + $0x34] sm:$0xf] %vm620, %v569
      %635 = vst.msk [vmem:[%s210 + $0x38] sm:$0xf] %vm620, %v570
      %636 = vst.msk [vmem:[%s210 + $0x3c] sm:$0xf] %vm620, %v571
      %637 = vst.msk [vmem:[%s210 + $0x40] sm:$0xf] %vm620, %v572
      %638 = vst.msk [vmem:[%s210 + $0x44] sm:$0xf] %vm620, %v573
      %639 = vst.msk [vmem:[%s210 + $0x48] sm:$0xf] %vm620, %v574
      %640 = vst.msk [vmem:[%s210 + $0x4c] sm:$0xf] %vm620, %v575
      %641 = vst.msk [vmem:[%s210 + $0x50] sm:$0xf] %vm620, %v576
      %642 = vst.msk [vmem:[%s210 + $0x54] sm:$0xf] %vm620, %v577
      %643 = vst.msk [vmem:[%s210 + $0x58] sm:$0xf] %vm620, %v578
      %644 = vst.msk [vmem:[%s210 + $0x5c] sm:$0xf] %vm620, %v579
      %645 = vst.msk [vmem:[%s210 + $0x60] sm:$0xf] %vm620, %v580
      %646 = vst.msk [vmem:[%s210 + $0x64] sm:$0xf] %vm620, %v581
      %647 = vst.msk [vmem:[%s210 + $0x68] sm:$0xf] %vm620, %v582
      %648 = vst.msk [vmem:[%s210 + $0x6c] sm:$0xf] %vm620, %v583
      %649 = vst.msk [vmem:[%s210 + $0x70] sm:$0xf] %vm620, %v584
      %650 = vst.msk [vmem:[%s210 + $0x74] sm:$0xf] %vm620, %v585
      %651 = vst.msk [vmem:[%s210 + $0x78] sm:$0xf] %vm620, %v586
      %652 = vst.msk [vmem:[%s210 + $0x7c] sm:$0xf] %vm620, %v587
      %vm653 = vcmask 261120
      %v654 = vsel %vm653, %v366, 0.0
      %v655 = vsel %vm653, %v369, 0.0
      %v656 = vadd.f32 %v654, %v655
      %v657 = vsel %vm653, %v374, 0.0
      %v658 = vadd.f32 %v656, %v657
      %v659 = vsel %vm653, %v377, 0.0
      %v660 = vadd.f32 %v658, %v659
      %v661 = vsel %vm653, %v382, 0.0
      %v662 = vadd.f32 %v660, %v661
      %v663 = vsel %vm653, %v385, 0.0
      %v664 = vadd.f32 %v662, %v663
      %v665 = vsel %vm653, %v390, 0.0
      %v666 = vadd.f32 %v664, %v665
      %v667 = vsel %vm653, %v393, 0.0
      %v668 = vadd.f32 %v666, %v667
      %v669 = vsel %vm653, %v398, 0.0
      %v670 = vadd.f32 %v668, %v669
      %v671 = vsel %vm653, %v401, 0.0
      %v672 = vadd.f32 %v670, %v671
      %v673 = vsel %vm653, %v406, 0.0
      %v674 = vadd.f32 %v672, %v673
      %v675 = vsel %vm653, %v409, 0.0
      %v676 = vadd.f32 %v674, %v675
      %v677 = vsel %vm653, %v414, 0.0
      %v678 = vadd.f32 %v676, %v677
      %v679 = vsel %vm653, %v417, 0.0
      %v680 = vadd.f32 %v678, %v679
      %v681 = vsel %vm653, %v422, 0.0
      %v682 = vadd.f32 %v680, %v681
      %v683 = vsel %vm653, %v425, 0.0
      %v684 = vadd.f32 %v682, %v683
      %v685 = vsel %vm653, %v430, 0.0
      %v686 = vadd.f32 %v684, %v685
      %v687 = vsel %vm653, %v433, 0.0
      %v688 = vadd.f32 %v686, %v687
      %v689 = vsel %vm653, %v438, 0.0
      %v690 = vadd.f32 %v688, %v689
      %v691 = vsel %vm653, %v441, 0.0
      %v692 = vadd.f32 %v690, %v691
      %v693 = vsel %vm653, %v446, 0.0
      %v694 = vadd.f32 %v692, %v693
      %v695 = vsel %vm653, %v449, 0.0
      %v696 = vadd.f32 %v694, %v695
      %v697 = vsel %vm653, %v454, 0.0
      %v698 = vadd.f32 %v696, %v697
      %v699 = vsel %vm653, %v457, 0.0
      %v700 = vadd.f32 %v698, %v699
      %v701 = vsel %vm653, %v462, 0.0
      %v702 = vadd.f32 %v700, %v701
      %v703 = vsel %vm653, %v465, 0.0
      %v704 = vadd.f32 %v702, %v703
      %v705 = vsel %vm653, %v470, 0.0
      %v706 = vadd.f32 %v704, %v705
      %v707 = vsel %vm653, %v473, 0.0
      %v708 = vadd.f32 %v706, %v707
      %v709 = vsel %vm653, %v478, 0.0
      %v710 = vadd.f32 %v708, %v709
      %v711 = vsel %vm653, %v481, 0.0
      %v712 = vadd.f32 %v710, %v711
      %v713 = vsel %vm653, %v486, 0.0
      %v714 = vadd.f32 %v712, %v713
      %v715 = vsel %vm653, %v489, 0.0
      %v716 = vadd.f32 %v714, %v715
      %v717 = vrot.slane %v716, 4
      %v718 = vadd.f32 %v716, %v717
      %v719 = vrot.slane %v718, 2
      %v720 = vadd.f32 %v718, %v719
      %v721 = vrot.slane %v720, 1
      %v722 = vadd.f32 %v720, %v721
      %vm723 = vcmask 253952
      %724 = vst.msk [vmem:[%s214] sm:$0x1] %vm723, %v722
      %v725 = vmul.f32 %v366, %v366
      %v726 = vmul.f32 %v369, %v369
      %v727 = vmul.f32 %v374, %v374
      %v728 = vmul.f32 %v377, %v377
      %v729 = vmul.f32 %v382, %v382
      %v730 = vmul.f32 %v385, %v385
      %v731 = vmul.f32 %v390, %v390
      %v732 = vmul.f32 %v393, %v393
      %v733 = vmul.f32 %v398, %v398
      %v734 = vmul.f32 %v401, %v401
      %v735 = vmul.f32 %v406, %v406
      %v736 = vmul.f32 %v409, %v409
      %v737 = vmul.f32 %v414, %v414
      %v738 = vmul.f32 %v417, %v417
      %v739 = vmul.f32 %v422, %v422
      %v740 = vmul.f32 %v425, %v425
      %v741 = vmul.f32 %v430, %v430
      %v742 = vmul.f32 %v433, %v433
      %v743 = vmul.f32 %v438, %v438
      %v744 = vmul.f32 %v441, %v441
      %v745 = vmul.f32 %v446, %v446
      %v746 = vmul.f32 %v449, %v449
      %v747 = vmul.f32 %v454, %v454
      %v748 = vmul.f32 %v457, %v457
      %v749 = vmul.f32 %v462, %v462
      %v750 = vmul.f32 %v465, %v465
      %v751 = vmul.f32 %v470, %v470
      %v752 = vmul.f32 %v473, %v473
      %v753 = vmul.f32 %v478, %v478
      %v754 = vmul.f32 %v481, %v481
      %v755 = vmul.f32 %v486, %v486
      %v756 = vmul.f32 %v489, %v489
      %v757 = vsel %vm653, %v725, 0.0
      %v758 = vsel %vm653, %v726, 0.0
      %v759 = vadd.f32 %v757, %v758
      %v760 = vsel %vm653, %v727, 0.0
      %v761 = vadd.f32 %v759, %v760
      %v762 = vsel %vm653, %v728, 0.0
      %v763 = vadd.f32 %v761, %v762
      %v764 = vsel %vm653, %v729, 0.0
      %v765 = vadd.f32 %v763, %v764
      %v766 = vsel %vm653, %v730, 0.0
      %v767 = vadd.f32 %v765, %v766
      %v768 = vsel %vm653, %v731, 0.0
      %v769 = vadd.f32 %v767, %v768
      %v770 = vsel %vm653, %v732, 0.0
      %v771 = vadd.f32 %v769, %v770
      %v772 = vsel %vm653, %v733, 0.0
      %v773 = vadd.f32 %v771, %v772
      %v774 = vsel %vm653, %v734, 0.0
      %v775 = vadd.f32 %v773, %v774
      %v776 = vsel %vm653, %v735, 0.0
      %v777 = vadd.f32 %v775, %v776
      %v778 = vsel %vm653, %v736, 0.0
      %v779 = vadd.f32 %v777, %v778
      %v780 = vsel %vm653, %v737, 0.0
      %v781 = vadd.f32 %v779, %v780
      %v782 = vsel %vm653, %v738, 0.0
      %v783 = vadd.f32 %v781, %v782
      %v784 = vsel %vm653, %v739, 0.0
      %v785 = vadd.f32 %v783, %v784
      %v786 = vsel %vm653, %v740, 0.0
      %v787 = vadd.f32 %v785, %v786
      %v788 = vsel %vm653, %v741, 0.0
      %v789 = vadd.f32 %v787, %v788
      %v790 = vsel %vm653, %v742, 0.0
      %v791 = vadd.f32 %v789, %v790
      %v792 = vsel %vm653, %v743, 0.0
      %v793 = vadd.f32 %v791, %v792
      %v794 = vsel %vm653, %v744, 0.0
      %v795 = vadd.f32 %v793, %v794
      %v796 = vsel %vm653, %v745, 0.0
      %v797 = vadd.f32 %v795, %v796
      %v798 = vsel %vm653, %v746, 0.0
      %v799 = vadd.f32 %v797, %v798
      %v800 = vsel %vm653, %v747, 0.0
      %v801 = vadd.f32 %v799, %v800
      %v802 = vsel %vm653, %v748, 0.0
      %v803 = vadd.f32 %v801, %v802
      %v804 = vsel %vm653, %v749, 0.0
      %v805 = vadd.f32 %v803, %v804
      %v806 = vsel %vm653, %v750, 0.0
      %v807 = vadd.f32 %v805, %v806
      %v808 = vsel %vm653, %v751, 0.0
      %v809 = vadd.f32 %v807, %v808
      %v810 = vsel %vm653, %v752, 0.0
      %v811 = vadd.f32 %v809, %v810
      %v812 = vsel %vm653, %v753, 0.0
      %v813 = vadd.f32 %v811, %v812
      %v814 = vsel %vm653, %v754, 0.0
      %v815 = vadd.f32 %v813, %v814
      %v816 = vsel %vm653, %v755, 0.0
      %v817 = vadd.f32 %v815, %v816
      %v818 = vsel %vm653, %v756, 0.0
      %v819 = vadd.f32 %v817, %v818
      %v820 = vrot.slane %v819, 4
      %v821 = vadd.f32 %v819, %v820
      %v822 = vrot.slane %v821, 2
      %v823 = vadd.f32 %v821, %v822
      %v824 = vrot.slane %v823, 1
      %v825 = vadd.f32 %v823, %v824
      %826 = vst.msk [vmem:[%s217] sm:$0x1] %vm723, %v825
      %s827 = smul.u32 32, %s16
      %p828 = scmp.lt.s32.totalorder %s827, 63
      %s829 = scalar_select %p828, %s827, 63
      %s830 = smul.addr %s829, 4
      %s831 = scalar_lea.vmem %s2, %s830
      %p832 = scmp.lt.s32.totalorder %s16, 1
      %s833 = scalar_select %p832, %s16, 1
      %s834 = scalar_lea.vmem %s3, %s833
      %p835 = scmp.lt.s32.totalorder %s16, 1
      %s836 = scalar_select %p835, %s16, 1
      %s837 = scalar_lea.vmem %s4, %s836
      // Predicated region
      $region29: #{block_forward.4} parent=27 // pred_check
        %p838 = pneg %p81
      $region30: #{block_forward.4} parent=27 // pred_check_branch
        %840 = sbr.rel (%p838) target = $region32
      $region31: #{block_forward.4} parent=27 // pred_region
        %s841 = smul.u32 32, %s16
      $region32: #{block_forward.4} parent=27 // pred_fallthru
        _
      // Predicated region
      $region33: #{block_forward.4} parent=27 // pred_check
        %p842 = pneg %p107
      $region34: #{block_forward.4} parent=27 // pred_check_branch
        %844 = sbr.rel (%p842) target = $region36
      $region35: #{block_forward.4} parent=27 // pred_region
        _
      $region36: #{block_forward.4} parent=27 // pred_fallthru
        _
      // Predicated region
      $region37: #{block_forward.4} parent=27 // pred_check
        %p845 = pneg %p133
      $region38: #{block_forward.4} parent=27 // pred_check_branch
        %847 = sbr.rel (%p845) target = $region40
      $region39: #{block_forward.4} parent=27 // pred_region
        _
      $region40: #{block_forward.4} parent=27 // pred_fallthru
        _
    $region28: #{block_forward.4} parent=5 // pred_fallthru
      _
    %p848 = scmp.le.s32.totalorder 2, %s11
    // Predicated region
    $region41: #{block_forward.4} parent=5 // pred_check
      %p849 = pneg %p848
    $region42: #{block_forward.4} parent=5 // pred_check_branch
      %851 = sbr.rel (%p849) target = $region44
    $region43: #{block_forward.4} parent=5 // pred_region
      %s852 = ssub.s32 %s11, 2
      // Predicated region
      $region45: #{block_forward.4} parent=43 // pred_check
        %p853 = pneg %p87
      $region46: #{block_forward.4} parent=43 // pred_check_branch
        %855 = sbr.rel (%p853) target = $region48
      $region47: #{block_forward.4} parent=43 // pred_region
        %s856 = smul.u32 32, %s17
        %p857 = scmp.lt.s32.totalorder %s856, 63
        %s858 = scalar_select %p857, %s856, 63
        %s859 = smul.addr %s858, 4
        %s860 = scalar_lea.vmem %s2, %s859
      $region48: #{block_forward.4} parent=43 // pred_fallthru
        _
      // Predicated region
      $region49: #{block_forward.4} parent=43 // pred_check
        %p861 = pneg %p113
      $region50: #{block_forward.4} parent=43 // pred_check_branch
        %863 = sbr.rel (%p861) target = $region52
      $region51: #{block_forward.4} parent=43 // pred_region
        %p864 = scmp.lt.s32.totalorder %s17, 1
        %s865 = scalar_select %p864, %s17, 1
        %s866 = scalar_lea.vmem %s3, %s865
      $region52: #{block_forward.4} parent=43 // pred_fallthru
        _
      // Predicated region
      $region53: #{block_forward.4} parent=43 // pred_check
        %p867 = pneg %p139
      $region54: #{block_forward.4} parent=43 // pred_check_branch
        %869 = sbr.rel (%p867) target = $region56
      $region55: #{block_forward.4} parent=43 // pred_region
        %p870 = scmp.lt.s32.totalorder %s17, 1
        %s871 = scalar_select %p870, %s17, 1
        %s872 = scalar_lea.vmem %s4, %s871
      $region56: #{block_forward.4} parent=43 // pred_fallthru
        _
    $region44: #{block_forward.4} parent=5 // pred_fallthru
      _
  $region6: #{block_forward.4} parent=0 // loop_footer
    %s15 = sadd.s32 1, %s11
  $region7: #{block_forward.4} parent=0 // loop_footer_branch
    %10 = sbr.rel target = $region3
  $region8: #{block_forward.4} parent=0 // loop_exit
    _

// kernel: block_forward.5
$region0: #{block_forward.5}
  #allocation0 [shape = 'u32[]', space=smem, size = 0x4, offset = 0x4, fixed_abs, tag = 'smem constant byte address 0x4 - core index']
  #allocation1 [shape = 'u32[144,128]{1,0:T(1,128)}', space=vmem, size = 0x12000, scoped, tag = 'internal scratch']
  #allocation2 [shape = 'bf16[18,18,32]{2,1,0:T(8,128)(2,1)}', space=vmem, size = 0x1b000, scoped, tag = 'scratch operand']
  %s0 = inlined_call_operand.vmem [shape: bf16[2,16,16,32], index: 0, kind: input, shape index: {}]
  %s1 = inlined_call_operand.vmem [shape: f32[2,1,32], index: 1, kind: input, shape index: {}]
  %s2 = inlined_call_operand.vmem [shape: f32[2,1,32], index: 2, kind: input, shape index: {}]
  %s3 = inlined_call_operand.vmem [shape: f32[1,32], index: 3, kind: input, shape index: {}]
  %s4 = inlined_call_operand.vmem [shape: f32[1,32], index: 4, kind: input, shape index: {}]
  %s5 = inlined_call_operand.vmem [shape: bf16[288,32], index: 5, kind: input, shape index: {}]
  %s6 = inlined_call_operand.vmem [shape: bf16[2,16,16,32], index: 6, kind: output, shape index: {0}]
  %s7 = inlined_call_operand.vmem [shape: f32[4,1,32], index: 7, kind: output, shape index: {1}]
  %s8 = inlined_call_operand.vmem [shape: f32[4,1,32], index: 8, kind: output, shape index: {2}]
  %9 = xla_tuple %s6, %s7, %s8
  %s10 = sld [smem:[#allocation0]]
  $region77: #{block_forward.5} parent=0
    _
  %s12 = ssub.s32 1, %s10
  %s13 = scalar_select 0, %s12, %s10
  loop: start=0, step=1, limit=6
  $region2: #{block_forward.5} parent=0 // loop_pre_header
    _
  $region3: #{block_forward.5} parent=0 // loop_header
    %s15 = sphi 0, %s19
    %p16 = scmp.ge.s32.totalorder %s15, 6
    %s22 = sphi 0, %s34
    %s23 = sphi 0, %s30
    %s24 = sphi 0, %s22
    %s25 = sphi 0, %s23
    %s26 = sphi 0, %s24
    %s27 = sphi 0, %s25
    %s37 = sphi 0, %s39
    %s40 = sphi 0, %s37
    %s41 = sphi 0, %s40
    %s57 = sphi 0, %s41
    %s61 = sphi 0, %s61
    %s63 = sphi 0, %s61
    %s64 = sphi 0, %s63
    %s78 = sphi 0, %s64
    %s82 = sphi 0, %s82
    %s84 = sphi 0, %s82
    %s85 = sphi 0, %s84
    %s99 = sphi 0, %s85
    %s103 = sphi 0, %s103
    %s105 = sphi 0, %s103
    %s106 = sphi 0, %s105
    %s120 = sphi 0, %s106
    %s124 = sphi 0, %s124
    %s126 = sphi 0, %s124
    %s127 = sphi 0, %s126
    %s141 = sphi 0, %s127
    %s145 = sphi 0, %s145
    %s147 = sphi 0, %s145
    %s148 = sphi 0, %s147
    %s162 = sphi 0, %s148
    %s170 = sphi 0, %s172
    %s173 = sphi 0, %s170
    %s174 = sphi 0, %s173
    %s190 = sphi 0, %s174
    %s200 = sphi 0, %s202
    %s203 = sphi 0, %s200
    %s204 = sphi 0, %s203
    %s220 = sphi 0, %s204
    %s230 = sphi 0, %s232
    %s233 = sphi 0, %s230
    %s234 = sphi 0, %s233
    %s250 = sphi 0, %s234
  $region4: #{block_forward.5} parent=0 // loop_header_branch
    %18 = sbr.rel (%p16) target = $region8
  $region5: #{block_forward.5} parent=0 // loop_body
    %s20 = ssub.s32 %s15, 1
    %s21 = ssub.s32 %s15, 2
    %s28 = sadd.s32 1, %s23
    %p29 = scmp.ge.s32.totalorder %s28, 2
    %s30 = scalar_select %p29, 0, %s28
    %s31 = sadd.s32 1, %s22
    %s32 = scalar_select %p29, %s31, %s22
    %p33 = scmp.ge.s32.totalorder %s32, 2
    %s34 = scalar_select %p33, 0, %s32
    %s35 = ssub.s32 %s22, %s34
    %p36 = scmp.eq.s32.totalorder %s35, 0
    %s38 = sadd.s32 %s37, 1
    %s39 = scalar_select %p36, %s37, %s38
    %p42 = pneg %p36
    %p43 = scmp.eq.s32.totalorder %s15, 3
    %p44 = por %p42, %p43
    %p45 = scmp.ne.s32.totalorder %s37, %s40
    %p46 = scmp.eq.s32.totalorder %s15, 0
    %p47 = por %p45, %p46
    %p48 = scmp.ne.s32.totalorder %s37, %s40
    %p49 = scmp.eq.s32.totalorder %s20, 3
    %p50 = por %p48, %p49
    %p51 = scmp.ne.s32.totalorder %s40, %s41
    %p52 = scmp.eq.s32.totalorder %s20, 0
    %p53 = por %p51, %p52
    %p54 = scmp.ne.s32.totalorder %s40, %s41
    %p55 = scmp.eq.s32.totalorder %s21, 3
    %p56 = por %p54, %p55
    %p58 = scmp.ne.s32.totalorder %s41, %s57
    %p59 = scmp.eq.s32.totalorder %s21, 0
    %p60 = por %p58, %p59
    %s62 = sadd.s32 %s61, 1
    %p65 = scmp.eq.s32.totalorder %s15, 3
    %p66 = scmp.ne.s32.totalorder %s61, %s63
    %p67 = scmp.eq.s32.totalorder %s15, 0
    %p68 = por %p66, %p67
    %p69 = scmp.ne.s32.totalorder %s61, %s63
    %p70 = scmp.eq.s32.totalorder %s20, 3
    %p71 = por %p69, %p70
    %p72 = scmp.ne.s32.totalorder %s63, %s64
    %p73 = scmp.eq.s32.totalorder %s20, 0
    %p74 = por %p72, %p73
    %p75 = scmp.ne.s32.totalorder %s63, %s64
    %p76 = scmp.eq.s32.totalorder %s21, 3
    %p77 = por %p75, %p76
    %p79 = scmp.ne.s32.totalorder %s64, %s78
    %p80 = scmp.eq.s32.totalorder %s21, 0
    %p81 = por %p79, %p80
    %s83 = sadd.s32 %s82, 1
    %p86 = scmp.eq.s32.totalorder %s15, 3
    %p87 = scmp.ne.s32.totalorder %s82, %s84
    %p88 = scmp.eq.s32.totalorder %s15, 0
    %p89 = por %p87, %p88
    %p90 = scmp.ne.s32.totalorder %s82, %s84
    %p91 = scmp.eq.s32.totalorder %s20, 3
    %p92 = por %p90, %p91
    %p93 = scmp.ne.s32.totalorder %s84, %s85
    %p94 = scmp.eq.s32.totalorder %s20, 0
    %p95 = por %p93, %p94
    %p96 = scmp.ne.s32.totalorder %s84, %s85
    %p97 = scmp.eq.s32.totalorder %s21, 3
    %p98 = por %p96, %p97
    %p100 = scmp.ne.s32.totalorder %s85, %s99
    %p101 = scmp.eq.s32.totalorder %s21, 0
    %p102 = por %p100, %p101
    %s104 = sadd.s32 %s103, 1
    %p107 = scmp.eq.s32.totalorder %s15, 3
    %p108 = scmp.ne.s32.totalorder %s103, %s105
    %p109 = scmp.eq.s32.totalorder %s15, 0
    %p110 = por %p108, %p109
    %p111 = scmp.ne.s32.totalorder %s103, %s105
    %p112 = scmp.eq.s32.totalorder %s20, 3
    %p113 = por %p111, %p112
    %p114 = scmp.ne.s32.totalorder %s105, %s106
    %p115 = scmp.eq.s32.totalorder %s20, 0
    %p116 = por %p114, %p115
    %p117 = scmp.ne.s32.totalorder %s105, %s106
    %p118 = scmp.eq.s32.totalorder %s21, 3
    %p119 = por %p117, %p118
    %p121 = scmp.ne.s32.totalorder %s106, %s120
    %p122 = scmp.eq.s32.totalorder %s21, 0
    %p123 = por %p121, %p122
    %s125 = sadd.s32 %s124, 1
    %p128 = scmp.eq.s32.totalorder %s15, 3
    %p129 = scmp.ne.s32.totalorder %s124, %s126
    %p130 = scmp.eq.s32.totalorder %s15, 0
    %p131 = por %p129, %p130
    %p132 = scmp.ne.s32.totalorder %s124, %s126
    %p133 = scmp.eq.s32.totalorder %s20, 3
    %p134 = por %p132, %p133
    %p135 = scmp.ne.s32.totalorder %s126, %s127
    %p136 = scmp.eq.s32.totalorder %s20, 0
    %p137 = por %p135, %p136
    %p138 = scmp.ne.s32.totalorder %s126, %s127
    %p139 = scmp.eq.s32.totalorder %s21, 3
    %p140 = por %p138, %p139
    %p142 = scmp.ne.s32.totalorder %s127, %s141
    %p143 = scmp.eq.s32.totalorder %s21, 0
    %p144 = por %p142, %p143
    %s146 = sadd.s32 %s145, 1
    %p149 = scmp.eq.s32.totalorder %s15, 3
    %p150 = scmp.ne.s32.totalorder %s145, %s147
    %p151 = scmp.eq.s32.totalorder %s15, 0
    %p152 = por %p150, %p151
    %p153 = scmp.ne.s32.totalorder %s145, %s147
    %p154 = scmp.eq.s32.totalorder %s20, 3
    %p155 = por %p153, %p154
    %p156 = scmp.ne.s32.totalorder %s147, %s148
    %p157 = scmp.eq.s32.totalorder %s20, 0
    %p158 = por %p156, %p157
    %p159 = scmp.ne.s32.totalorder %s147, %s148
    %p160 = scmp.eq.s32.totalorder %s21, 3
    %p161 = por %p159, %p160
    %p163 = scmp.ne.s32.totalorder %s148, %s162
    %p164 = scmp.eq.s32.totalorder %s21, 0
    %p165 = por %p163, %p164
    %s166 = ssub.s32 %s22, %s34
    %s167 = ssub.s32 %s23, %s30
    %s168 = sor.u32 %s166, %s167
    %p169 = scmp.eq.s32.totalorder %s168, 0
    %s171 = sadd.s32 %s170, 1
    %s172 = scalar_select %p169, %s170, %s171
    %p175 = pneg %p169
    %p176 = scmp.eq.s32.totalorder %s15, 3
    %p177 = por %p175, %p176
    %p178 = scmp.ne.s32.totalorder %s170, %s173
    %p179 = scmp.eq.s32.totalorder %s15, 0
    %p180 = por %p178, %p179
    %p181 = scmp.ne.s32.totalorder %s170, %s173
    %p182 = scmp.eq.s32.totalorder %s20, 3
    %p183 = por %p181, %p182
    %p184 = scmp.ne.s32.totalorder %s173, %s174
    %p185 = scmp.eq.s32.totalorder %s20, 0
    %p186 = por %p184, %p185
    %p187 = scmp.ne.s32.totalorder %s173, %s174
    %p188 = scmp.eq.s32.totalorder %s21, 3
    %p189 = por %p187, %p188
    %p191 = scmp.ne.s32.totalorder %s174, %s190
    %p192 = scmp.eq.s32.totalorder %s21, 0
    %p193 = por %p191, %p192
    %s194 = smul.u32 %s22, 2
    %s195 = sadd.s32 %s194, %s23
    %s196 = smul.u32 %s34, 2
    %s197 = sadd.s32 %s196, %s30
    %s198 = ssub.s32 %s195, %s197
    %p199 = scmp.eq.s32.totalorder %s198, 0
    %s201 = sadd.s32 %s200, 1
    %s202 = scalar_select %p199, %s200, %s201
    %p205 = pneg %p199
    %p206 = scmp.eq.s32.totalorder %s15, 3
    %p207 = por %p205, %p206
    %p208 = scmp.ne.s32.totalorder %s200, %s203
    %p209 = scmp.eq.s32.totalorder %s15, 0
    %p210 = por %p208, %p209
    %p211 = scmp.ne.s32.totalorder %s200, %s203
    %p212 = scmp.eq.s32.totalorder %s20, 3
    %p213 = por %p211, %p212
    %p214 = scmp.ne.s32.totalorder %s203, %s204
    %p215 = scmp.eq.s32.totalorder %s20, 0
    %p216 = por %p214, %p215
    %p217 = scmp.ne.s32.totalorder %s203, %s204
    %p218 = scmp.eq.s32.totalorder %s21, 3
    %p219 = por %p217, %p218
    %p221 = scmp.ne.s32.totalorder %s204, %s220
    %p222 = scmp.eq.s32.totalorder %s21, 0
    %p223 = por %p221, %p222
    %s224 = smul.u32 %s22, 2
    %s225 = sadd.s32 %s224, %s23
    %s226 = smul.u32 %s34, 2
    %s227 = sadd.s32 %s226, %s30
    %s228 = ssub.s32 %s225, %s227
    %p229 = scmp.eq.s32.totalorder %s228, 0
    %s231 = sadd.s32 %s230, 1
    %s232 = scalar_select %p229, %s230, %s231
    %p235 = pneg %p229
    %p236 = scmp.eq.s32.totalorder %s15, 3
    %p237 = por %p235, %p236
    %p238 = scmp.ne.s32.totalorder %s230, %s233
    %p239 = scmp.eq.s32.totalorder %s15, 0
    %p240 = por %p238, %p239
    %p241 = scmp.ne.s32.totalorder %s230, %s233
    %p242 = scmp.eq.s32.totalorder %s20, 3
    %p243 = por %p241, %p242
    %p244 = scmp.ne.s32.totalorder %s233, %s234
    %p245 = scmp.eq.s32.totalorder %s20, 0
    %p246 = por %p244, %p245
    %p247 = scmp.ne.s32.totalorder %s233, %s234
    %p248 = scmp.eq.s32.totalorder %s21, 3
    %p249 = por %p247, %p248
    %p251 = scmp.ne.s32.totalorder %s234, %s250
    %p252 = scmp.eq.s32.totalorder %s21, 0
    %p253 = por %p251, %p252
    %p254 = scmp.le.s32.totalorder 1, %s15
    %p255 = scmp.lt.s32.totalorder %s15, 5
    %p256 = pnand %p254, %p255
    %p257 = pneg %p256
    // Predicated region
    $region9: #{block_forward.5} parent=5 // pred_check
      _
    $region10: #{block_forward.5} parent=5 // pred_check_branch
      %259 = sbr.rel (%p256) target = $region12
    $region11: #{block_forward.5} parent=5 // pred_region
      %s260 = ssub.s32 %s15, 1
      // Predicated region
      $region13: #{block_forward.5} parent=11 // pred_check
        %p261 = pneg %p74
      $region14: #{block_forward.5} parent=11 // pred_check_branch
        %263 = sbr.rel (%p261) target = $region16
      $region15: #{block_forward.5} parent=11 // pred_region
        _
      $region16: #{block_forward.5} parent=11 // pred_fallthru
        _
      // Predicated region
      $region17: #{block_forward.5} parent=11 // pred_check
        %p264 = pneg %p95
      $region18: #{block_forward.5} parent=11 // pred_check_branch
        %266 = sbr.rel (%p264) target = $region20
      $region19: #{block_forward.5} parent=11 // pred_region
        _
      $region20: #{block_forward.5} parent=11 // pred_fallthru
        _
      // Predicated region
      $region21: #{block_forward.5} parent=11 // pred_check
        %p267 = pneg %p116
      $region22: #{block_forward.5} parent=11 // pred_check_branch
        %269 = sbr.rel (%p267) target = $region24
      $region23: #{block_forward.5} parent=11 // pred_region
        _
      $region24: #{block_forward.5} parent=11 // pred_fallthru
        _
      // Predicated region
      $region25: #{block_forward.5} parent=11 // pred_check
        %p270 = pneg %p137
      $region26: #{block_forward.5} parent=11 // pred_check_branch
        %272 = sbr.rel (%p270) target = $region28
      $region27: #{block_forward.5} parent=11 // pred_region
        _
      $region28: #{block_forward.5} parent=11 // pred_fallthru
        _
      // Predicated region
      $region29: #{block_forward.5} parent=11 // pred_check
        %p273 = pneg %p158
      $region30: #{block_forward.5} parent=11 // pred_check_branch
        %275 = sbr.rel (%p273) target = $region32
      $region31: #{block_forward.5} parent=11 // pred_region
        _
      $region32: #{block_forward.5} parent=11 // pred_fallthru
        _
    $region12: #{block_forward.5} parent=5 // pred_fallthru
      _
    %p276 = scmp.lt.s32.totalorder %s15, 4
    // Predicated region
    $region33: #{block_forward.5} parent=5 // pred_check
      %p277 = pneg %p276
    $region34: #{block_forward.5} parent=5 // pred_check_branch
      %279 = sbr.rel (%p277) target = $region36
    $region35: #{block_forward.5} parent=5 // pred_region
      // Predicated region
      $region37: #{block_forward.5} parent=35 // pred_check
        %p280 = pneg %p47
      $region38: #{block_forward.5} parent=35 // pred_check_branch
        %282 = sbr.rel (%p280) target = $region40
      $region39: #{block_forward.5} parent=35 // pred_region
        %p283 = scmp.lt.s32.totalorder %s22, 1
        %s284 = scalar_select %p283, %s22, 1
        %s285 = smul.addr %s284, 32
        %s286 = smul.addr %s285, 4
        %s287 = scalar_lea.vmem %s0, %s286
      $region40: #{block_forward.5} parent=35 // pred_fallthru
        _
    $region36: #{block_forward.5} parent=5 // pred_fallthru
      _
    %p288 = scmp.le.s32.totalorder 1, %s15
    %p289 = scmp.lt.s32.totalorder %s15, 5
    %p290 = pnand %p288, %p289
    %p291 = pneg %p290
    // Predicated region
    $region41: #{block_forward.5} parent=5 // pred_check
      _
    $region42: #{block_forward.5} parent=5 // pred_check_branch
      %293 = sbr.rel (%p290) target = $region44
    $region43: #{block_forward.5} parent=5 // pred_region
      %s294 = ssub.s32 %s15, 1
      %p295 = scmp.lt.s32.totalorder %s24, 1
      %s296 = scalar_select %p295, %s24, 1
      %s297 = smul.addr %s296, 32
      %s298 = smul.addr %s297, 4
      %s299 = scalar_lea.vmem %s0, %s298
      %p300 = pneg %p53
      %p301 = pneg %p50
      %p302 = pneg %p74
      %p303 = pneg %p71
      %p304 = pneg %p95
      %p305 = pneg %p92
      %p306 = pneg %p116
      %p307 = pneg %p113
      %p308 = pneg %p137
      %p309 = pneg %p134
      %p310 = pneg %p158
      %p311 = pneg %p155
      %p312 = pneg %p186
      %p313 = pneg %p183
      %s314 = smul.u32 8, %s25
      %p315 = scmp.lt.s32.totalorder %s24, 1
      %s316 = scalar_select %p315, %s24, 1
      %p317 = scmp.lt.s32.totalorder %s314, 15
      %s318 = scalar_select %p317, %s314, 15
      %s319 = smul.addr %s318, 2
      %s320 = smul.addr %s316, 32
      %s321 = sadd.s32 %s319, %s320
      %s322 = smul.addr %s321, 4
      %s323 = scalar_lea.vmem %s6, %s322
      %p324 = pneg %p216
      %p325 = pneg %p213
      %s326 = smul.u32 %s24, 2
      %s327 = sadd.s32 %s326, %s25
      %p328 = scmp.lt.s32.totalorder %s327, 3
      %s329 = scalar_select %p328, %s327, 3
      %s330 = scalar_lea.vmem %s7, %s329
      %p331 = pneg %p246
      %p332 = pneg %p243
      %s333 = smul.u32 %s24, 2
      %s334 = sadd.s32 %s333, %s25
      %p335 = scmp.lt.s32.totalorder %s334, 3
      %s336 = scalar_select %p335, %s334, 3
      %s337 = scalar_lea.vmem %s8, %s336
      %p338 = scmp.lt.s32.totalorder %s24, 1
      %s339 = scalar_select %p338, %s24, 1
      %s340 = smul.addr %s339, 32
      %s341 = smul.addr %s340, 4
      %s342 = scalar_lea.vmem %s0, %s341
      %s343 = smul.u32 8, %s25
      %p344 = scmp.lt.s32.totalorder %s24, 1
      %s345 = scalar_select %p344, %s24, 1
      %p346 = scmp.lt.s32.totalorder %s343, 15
      %s347 = scalar_select %p346, %s343, 15
      %s348 = smul.addr %s347, 2
      %s349 = smul.addr %s345, 32
      %s350 = sadd.s32 %s348, %s349
      %s351 = smul.addr %s350, 4
      %s352 = scalar_lea.vmem %s6, %s351
      %s353 = smul.u32 8, %s25
      %s354 = smul.u32 %s24, 2
      %s355 = sadd.s32 %s354, %s25
      %p356 = scmp.lt.s32.totalorder %s355, 3
      %s357 = scalar_select %p356, %s355, 3
      %s358 = scalar_lea.vmem %s7, %s357
      %s359 = smul.u32 %s24, 2
      %s360 = sadd.s32 %s359, %s25
      %s361 = smul.u32 %s24, 2
      %s362 = sadd.s32 %s361, %s25
      %p363 = scmp.lt.s32.totalorder %s362, 3
      %s364 = scalar_select %p363, %s362, 3
      %s365 = scalar_lea.vmem %s8, %s364
      %s366 = smul.u32 %s24, 2
      %s367 = sadd.s32 %s366, %s25
      %p369 = scmp.eq.s32.totalorder %s25, 0
      // Predicated region
      $region45: #{block_forward.5} parent=43 // pred_check
        %p370 = pneg %p369
      $region46: #{block_forward.5} parent=43 // pred_check_branch
        %372 = sbr.rel (%p370) target = $region48
      $region47: #{block_forward.5} parent=43 // pred_region
        %v373 = vld [vmem:[%s1] sm:$0x1]
        %v374 = vld [vmem:[%s1 + $0x1] sm:$0x1]
        %v375 = vld [vmem:[%s2] sm:$0x1]
        %v376 = vld [vmem:[%s2 + $0x1] sm:$0x1]
        %v377 = vld [vmem:[%s3] sm:$0x1]
        %v378 = vld [vmem:[%s4] sm:$0x1]
        %vm379 = vcmask 253952
        %v380 = vsel %vm379, %v373, 0.0
        %v381 = vsel %vm379, %v374, 0.0
        %v382 = vadd.f32 %v380, %v381
        %v383 = vrot.slane %v382, 4
        %v384 = vadd.f32 %v382, %v383
        %v385 = vrot.slane %v384, 2
        %v386 = vadd.f32 %v384, %v385
        %v387 = vrot.slane %v386, 1
        %v388 = vadd.f32 %v386, %v387
        %v389 = vsel %vm379, %v375, 0.0
        %v390 = vsel %vm379, %v376, 0.0
        %v391 = vadd.f32 %v389, %v390
        %v392 = vrot.slane %v391, 4
        %v393 = vadd.f32 %v391, %v392
        %v394 = vrot.slane %v393, 2
        %v395 = vadd.f32 %v393, %v394
        %v396 = vrot.slane %v395, 1
        %v397 = vadd.f32 %v395, %v396
        %v398 = vmul.f32 %v388, 0.001953125
        %v399 = vmul.f32 %v397, 0.001953125
        %v400 = vmul.f32 %v398, %v398
        %v401 = vsub.f32 %v399, %v400
        %v402 = vmax.f32 %v401, 0.0
        %v403 = vadd.f32 %v402, 1e-05
        %v404 = vrsqrt.pop %v403
        %v405 = vmul.f32 %v377, %v404
        %v406 = vmul.f32 %v398, %v405
        %v407 = vsub.f32 %v378, %v406
        %v408 = vld [vmem:[%s342] sm:$0xf]
        %v409 = vld [vmem:[%s342 + $0x4] sm:$0xf]
        %v410 = vld [vmem:[%s342 + $0x8] sm:$0xf]
        %v411 = vld [vmem:[%s342 + $0xc] sm:$0xf]
        %v412 = vld [vmem:[%s342 + $0x10] sm:$0xf]
        %v413 = vld [vmem:[%s342 + $0x14] sm:$0xf]
        %v414 = vld [vmem:[%s342 + $0x18] sm:$0xf]
        %v415 = vld [vmem:[%s342 + $0x1c] sm:$0xf]
        %v416 = vld [vmem:[%s342 + $0x20] sm:$0xf]
        %v417 = vld [vmem:[%s342 + $0x24] sm:$0xf]
        %v418 = vld [vmem:[%s342 + $0x28] sm:$0xf]
        %v419 = vld [vmem:[%s342 + $0x2c] sm:$0xf]
        %v420 = vld [vmem:[%s342 + $0x30] sm:$0xf]
        %v421 = vld [vmem:[%s342 + $0x34] sm:$0xf]
        %v422 = vld [vmem:[%s342 + $0x38] sm:$0xf]
        %v423 = vld [vmem:[%s342 + $0x3c] sm:$0xf]
        %v424 = vld [vmem:[%s342 + $0x40] sm:$0xf]
        %v425 = vld [vmem:[%s342 + $0x44] sm:$0xf]
        %v426 = vld [vmem:[%s342 + $0x48] sm:$0xf]
        %v427 = vld [vmem:[%s342 + $0x4c] sm:$0xf]
        %v428 = vld [vmem:[%s342 + $0x50] sm:$0xf]
        %v429 = vld [vmem:[%s342 + $0x54] sm:$0xf]
        %v430 = vld [vmem:[%s342 + $0x58] sm:$0xf]
        %v431 = vld [vmem:[%s342 + $0x5c] sm:$0xf]
        %v432 = vld [vmem:[%s342 + $0x60] sm:$0xf]
        %v433 = vld [vmem:[%s342 + $0x64] sm:$0xf]
        %v434 = vld [vmem:[%s342 + $0x68] sm:$0xf]
        %v435 = vld [vmem:[%s342 + $0x6c] sm:$0xf]
        %v436 = vld [vmem:[%s342 + $0x70] sm:$0xf]
        %v437 = vld [vmem:[%s342 + $0x74] sm:$0xf]
        %v438 = vld [vmem:[%s342 + $0x78] sm:$0xf]
        %v439 = vld [vmem:[%s342 + $0x7c] sm:$0xf]
        %v440 = vunpack.c.l.bf16 %v408
        %v441 = vunpack.c.l.bf16 %v409
        %v442 = vunpack.c.l.bf16 %v410
        %v443 = vunpack.c.l.bf16 %v411
        %v444 = vunpack.c.l.bf16 %v412
        %v445 = vunpack.c.l.bf16 %v413
        %v446 = vunpack.c.l.bf16 %v414
        %v447 = vunpack.c.l.bf16 %v415
        %v448 = vunpack.c.l.bf16 %v416
        %v449 = vunpack.c.l.bf16 %v417
        %v450 = vunpack.c.l.bf16 %v418
        %v451 = vunpack.c.l.bf16 %v419
        %v452 = vunpack.c.l.bf16 %v420
        %v453 = vunpack.c.l.bf16 %v421
        %v454 = vunpack.c.l.bf16 %v422
        %v455 = vunpack.c.l.bf16 %v423
        %v456 = vunpack.c.l.bf16 %v424
        %v457 = vunpack.c.l.bf16 %v425
        %v458 = vunpack.c.l.bf16 %v426
        %v459 = vunpack.c.l.bf16 %v427
        %v460 = vunpack.c.l.bf16 %v428
        %v461 = vunpack.c.l.bf16 %v429
        %v462 = vunpack.c.l.bf16 %v430
        %v463 = vunpack.c.l.bf16 %v431
        %v464 = vunpack.c.l.bf16 %v432
        %v465 = vunpack.c.l.bf16 %v433
        %v466 = vunpack.c.l.bf16 %v434
        %v467 = vunpack.c.l.bf16 %v435
        %v468 = vunpack.c.l.bf16 %v436
        %v469 = vunpack.c.l.bf16 %v437
        %v470 = vunpack.c.l.bf16 %v438
        %v471 = vunpack.c.l.bf16 %v439
        %v473 = vlaneseq
        %v474 = vshrl.u32 %v473, 7
        %v475 = vsub.s32 0, %v474
        %v476 = vrot.slane %v405, %v475
        %v478 = vmul.f32 %v440, %v476
        %v479 = vmul.f32 %v441, %v476
        %v480 = vmul.f32 %v442, %v476
        %v481 = vmul.f32 %v443, %v476
        %v482 = vmul.f32 %v444, %v476
        %v483 = vmul.f32 %v445, %v476
        %v484 = vmul.f32 %v446, %v476
        %v485 = vmul.f32 %v447, %v476
        %v486 = vmul.f32 %v448, %v476
        %v487 = vmul.f32 %v449, %v476
        %v488 = vmul.f32 %v450, %v476
        %v489 = vmul.f32 %v451, %v476
        %v490 = vmul.f32 %v452, %v476
        %v491 = vmul.f32 %v453, %v476
        %v492 = vmul.f32 %v454, %v476
        %v493 = vmul.f32 %v455, %v476
        %v494 = vmul.f32 %v456, %v476
        %v495 = vmul.f32 %v457, %v476
        %v496 = vmul.f32 %v458, %v476
        %v497 = vmul.f32 %v459, %v476
        %v498 = vmul.f32 %v460, %v476
        %v499 = vmul.f32 %v461, %v476
        %v500 = vmul.f32 %v462, %v476
        %v501 = vmul.f32 %v463, %v476
        %v502 = vmul.f32 %v464, %v476
        %v503 = vmul.f32 %v465, %v476
        %v504 = vmul.f32 %v466, %v476
        %v505 = vmul.f32 %v467, %v476
        %v506 = vmul.f32 %v468, %v476
        %v507 = vmul.f32 %v469, %v476
        %v508 = vmul.f32 %v470, %v476
        %v509 = vmul.f32 %v471, %v476
        %v511 = vlaneseq
        %v512 = vshrl.u32 %v511, 7
        %v513 = vsub.s32 0, %v512
        %v514 = vrot.slane %v407, %v513
        %v516 = vadd.f32 %v478, %v514
        %v517 = vadd.f32 %v479, %v514
        %v518 = vadd.f32 %v480, %v514
        %v519 = vadd.f32 %v481, %v514
        %v520 = vadd.f32 %v482, %v514
        %v521 = vadd.f32 %v483, %v514
        %v522 = vadd.f32 %v484, %v514
        %v523 = vadd.f32 %v485, %v514
        %v524 = vadd.f32 %v486, %v514
        %v525 = vadd.f32 %v487, %v514
        %v526 = vadd.f32 %v488, %v514
        %v527 = vadd.f32 %v489, %v514
        %v528 = vadd.f32 %v490, %v514
        %v529 = vadd.f32 %v491, %v514
        %v530 = vadd.f32 %v492, %v514
        %v531 = vadd.f32 %v493, %v514
        %v532 = vadd.f32 %v494, %v514
        %v533 = vadd.f32 %v495, %v514
        %v534 = vadd.f32 %v496, %v514
        %v535 = vadd.f32 %v497, %v514
        %v536 = vadd.f32 %v498, %v514
        %v537 = vadd.f32 %v499, %v514
        %v538 = vadd.f32 %v500, %v514
        %v539 = vadd.f32 %v501, %v514
        %v540 = vadd.f32 %v502, %v514
        %v541 = vadd.f32 %v503, %v514
        %v542 = vadd.f32 %v504, %v514
        %v543 = vadd.f32 %v505, %v514
        %v544 = vadd.f32 %v506, %v514
        %v545 = vadd.f32 %v507, %v514
        %v546 = vadd.f32 %v508, %v514
        %v547 = vadd.f32 %v509, %v514
        %v548 = vmax.f32 %v516, 0.0
        %v549 = vmax.f32 %v517, 0.0
        %v550 = vmax.f32 %v518, 0.0
        %v551 = vmax.f32 %v519, 0.0
        %v552 = vmax.f32 %v520, 0.0
        %v553 = vmax.f32 %v521, 0.0
        %v554 = vmax.f32 %v522, 0.0
        %v555 = vmax.f32 %v523, 0.0
        %v556 = vmax.f32 %v524, 0.0
        %v557 = vmax.f32 %v525, 0.0
        %v558 = vmax.f32 %v526, 0.0
        %v559 = vmax.f32 %v527, 0.0
        %v560 = vmax.f32 %v528, 0.0
        %v561 = vmax.f32 %v529, 0.0
        %v562 = vmax.f32 %v530, 0.0
        %v563 = vmax.f32 %v531, 0.0
        %v564 = vmax.f32 %v532, 0.0
        %v565 = vmax.f32 %v533, 0.0
        %v566 = vmax.f32 %v534, 0.0
        %v567 = vmax.f32 %v535, 0.0
        %v568 = vmax.f32 %v536, 0.0
        %v569 = vmax.f32 %v537, 0.0
        %v570 = vmax.f32 %v538, 0.0
        %v571 = vmax.f32 %v539, 0.0
        %v572 = vmax.f32 %v540, 0.0
        %v573 = vmax.f32 %v541, 0.0
        %v574 = vmax.f32 %v542, 0.0
        %v575 = vmax.f32 %v543, 0.0
        %v576 = vmax.f32 %v544, 0.0
        %v577 = vmax.f32 %v545, 0.0
        %v578 = vmax.f32 %v546, 0.0
        %v579 = vmax.f32 %v547, 0.0
        %v580 = vpack.c.bf16 %v549, %v548
        %v581 = vpack.c.bf16 %v551, %v550
        %v582 = vpack.c.bf16 %v553, %v552
        %v583 = vpack.c.bf16 %v555, %v554
        %v584 = vpack.c.bf16 %v557, %v556
        %v585 = vpack.c.bf16 %v559, %v558
        %v586 = vpack.c.bf16 %v561, %v560
        %v587 = vpack.c.bf16 %v563, %v562
        %v588 = vpack.c.bf16 %v565, %v564
        %v589 = vpack.c.bf16 %v567, %v566
        %v590 = vpack.c.bf16 %v569, %v568
        %v591 = vpack.c.bf16 %v571, %v570
        %v592 = vpack.c.bf16 %v573, %v572
        %v593 = vpack.c.bf16 %v575, %v574
        %v594 = vpack.c.bf16 %v577, %v576
        %v595 = vpack.c.bf16 %v579, %v578
        %vm596 = vcmask 257024
        %597 = vst.msk [vmem:[#allocation2] sm:$0xf] %vm596, 0
        %598 = vst.msk [vmem:[#allocation2 + $0x4] sm:$0xf] %vm596, 0
        %599 = vst.msk [vmem:[#allocation2 + $0x8] sm:$0x1] %vm379, 0
        %s600 = scalar_lea.vmem [#allocation2], 204
        %601 = vst.msk [vmem:[%s600] sm:$0xf] %vm596, 0
        %602 = vst.msk [vmem:[%s600 + $0x4] sm:$0xf] %vm596, 0
        %603 = vst.msk [vmem:[%s600 + $0x8] sm:$0x1] %vm379, 0
        %s604 = scalar_lea.vmem [#allocation2], 12
        %vm605 = vcmask 253952
        %vm606 = vsmask.f32 256
        %vm607 = vmand %vm605, %vm606
        %v608 = vld [vmem:[%s604] sm:$0x1]
        %v609 = vsel %vm607, 0, %v608
        %610 = vst [vmem:[%s604] sm:$0x1] %v609
        %v611 = vld [vmem:[%s604 + $0xc] sm:$0x1]
        %v612 = vsel %vm607, 0, %v611
        %613 = vst [vmem:[%s604 + $0xc] sm:$0x1] %v612
        %v614 = vld [vmem:[%s604 + $0x18] sm:$0x1]
        %v615 = vsel %vm607, 0, %v614
        %616 = vst [vmem:[%s604 + $0x18] sm:$0x1] %v615
        %v617 = vld [vmem:[%s604 + $0x24] sm:$0x1]
        %v618 = vsel %vm607, 0, %v617
        %619 = vst [vmem:[%s604 + $0x24] sm:$0x1] %v618
        %v620 = vld [vmem:[%s604 + $0x30] sm:$0x1]
        %v621 = vsel %vm607, 0, %v620
        %622 = vst [vmem:[%s604 + $0x30] sm:$0x1] %v621
        %v623 = vld [vmem:[%s604 + $0x3c] sm:$0x1]
        %v624 = vsel %vm607, 0, %v623
        %625 = vst [vmem:[%s604 + $0x3c] sm:$0x1] %v624
        %v626 = vld [vmem:[%s604 + $0x48] sm:$0x1]
        %v627 = vsel %vm607, 0, %v626
        %628 = vst [vmem:[%s604 + $0x48] sm:$0x1] %v627
        %v629 = vld [vmem:[%s604 + $0x54] sm:$0x1]
        %v630 = vsel %vm607, 0, %v629
        %631 = vst [vmem:[%s604 + $0x54] sm:$0x1] %v630
        %v632 = vld [vmem:[%s604 + $0x60] sm:$0x1]
        %v633 = vsel %vm607, 0, %v632
        %634 = vst [vmem:[%s604 + $0x60] sm:$0x1] %v633
        %v635 = vld [vmem:[%s604 + $0x6c] sm:$0x1]
        %v636 = vsel %vm607, 0, %v635
        %637 = vst [vmem:[%s604 + $0x6c] sm:$0x1] %v636
        %v638 = vld [vmem:[%s604 + $0x78] sm:$0x1]
        %v639 = vsel %vm607, 0, %v638
        %640 = vst [vmem:[%s604 + $0x78] sm:$0x1] %v639
        %v641 = vld [vmem:[%s604 + $0x84] sm:$0x1]
        %v642 = vsel %vm607, 0, %v641
        %643 = vst [vmem:[%s604 + $0x84] sm:$0x1] %v642
        %v644 = vld [vmem:[%s604 + $0x90] sm:$0x1]
        %v645 = vsel %vm607, 0, %v644
        %646 = vst [vmem:[%s604 + $0x90] sm:$0x1] %v645
        %v647 = vld [vmem:[%s604 + $0x9c] sm:$0x1]
        %v648 = vsel %vm607, 0, %v647
        %649 = vst [vmem:[%s604 + $0x9c] sm:$0x1] %v648
        %v650 = vld [vmem:[%s604 + $0xa8] sm:$0x1]
        %v651 = vsel %vm607, 0, %v650
        %652 = vst [vmem:[%s604 + $0xa8] sm:$0x1] %v651
        %v653 = vld [vmem:[%s604 + $0xb4] sm:$0x1]
        %v654 = vsel %vm607, 0, %v653
        %655 = vst [vmem:[%s604 + $0xb4] sm:$0x1] %v654
        %vm656 = vsmask.f32 7938
        %vm657 = vmand %vm605, %vm656
        %v658 = vld [vmem:[%s604 + $0x8] sm:$0x1]
        %v659 = vsel %vm657, 0, %v658
        %660 = vst [vmem:[%s604 + $0x8] sm:$0x1] %v659
        %v661 = vld [vmem:[%s604 + $0x14] sm:$0x1]
        %v662 = vsel %vm657, 0, %v661
        %663 = vst [vmem:[%s604 + $0x14] sm:$0x1] %v662
        %v664 = vld [vmem:[%s604 + $0x20] sm:$0x1]
        %v665 = vsel %vm657, 0, %v664
        %666 = vst [vmem:[%s604 + $0x20] sm:$0x1] %v665
        %v667 = vld [vmem:[%s604 + $0x2c] sm:$0x1]
        %v668 = vsel %vm657, 0, %v667
        %669 = vst [vmem:[%s604 + $0x2c] sm:$0x1] %v668
        %v670 = vld [vmem:[%s604 + $0x38] sm:$0x1]
        %v671 = vsel %vm657, 0, %v670
        %672 = vst [vmem:[%s604 + $0x38] sm:$0x1] %v671
        %v673 = vld [vmem:[%s604 + $0x44] sm:$0x1]
        %v674 = vsel %vm657, 0, %v673
        %675 = vst [vmem:[%s604 + $0x44] sm:$0x1] %v674
        %v676 = vld [vmem:[%s604 + $0x50] sm:$0x1]
        %v677 = vsel %vm657, 0, %v676
        %678 = vst [vmem:[%s604 + $0x50] sm:$0x1] %v677
        %v679 = vld [vmem:[%s604 + $0x5c] sm:$0x1]
        %v680 = vsel %vm657, 0, %v679
        %681 = vst [vmem:[%s604 + $0x5c] sm:$0x1] %v680
        %v682 = vld [vmem:[%s604 + $0x68] sm:$0x1]
        %v683 = vsel %vm657, 0, %v682
        %684 = vst [vmem:[%s604 + $0x68] sm:$0x1] %v683
        %v685 = vld [vmem:[%s604 + $0x74] sm:$0x1]
        %v686 = vsel %vm657, 0, %v685
        %687 = vst [vmem:[%s604 + $0x74] sm:$0x1] %v686
        %v688 = vld [vmem:[%s604 + $0x80] sm:$0x1]
        %v689 = vsel %vm657, 0, %v688
        %690 = vst [vmem:[%s604 + $0x80] sm:$0x1] %v689
        %v691 = vld [vmem:[%s604 + $0x8c] sm:$0x1]
        %v692 = vsel %vm657, 0, %v691
        %693 = vst [vmem:[%s604 + $0x8c] sm:$0x1] %v692
        %v694 = vld [vmem:[%s604 + $0x98] sm:$0x1]
        %v695 = vsel %vm657, 0, %v694
        %696 = vst [vmem:[%s604 + $0x98] sm:$0x1] %v695
        %v697 = vld [vmem:[%s604 + $0xa4] sm:$0x1]
        %v698 = vsel %vm657, 0, %v697
        %699 = vst [vmem:[%s604 + $0xa4] sm:$0x1] %v698
        %v700 = vld [vmem:[%s604 + $0xb0] sm:$0x1]
        %v701 = vsel %vm657, 0, %v700
        %702 = vst [vmem:[%s604 + $0xb0] sm:$0x1] %v701
        %v703 = vld [vmem:[%s604 + $0xbc] sm:$0x1]
        %v704 = vsel %vm657, 0, %v703
        %705 = vst [vmem:[%s604 + $0xbc] sm:$0x1] %v704
        %v722 = vunpack.c.l.b16 %v580
        %v723 = vunpack.c.h.b16 %v580
        %v724 = vunpack.c.l.b16 %v581
        %v725 = vunpack.c.h.b16 %v581
        %v726 = vunpack.c.l.b16 %v582
        %v727 = vunpack.c.h.b16 %v582
        %v728 = vunpack.c.l.b16 %v583
        %v729 = vunpack.c.h.b16 %v583
        %v730 = vunpack.c.l.b16 %v584
        %v731 = vunpack.c.h.b16 %v584
        %v732 = vunpack.c.l.b16 %v585
        %v733 = vunpack.c.h.b16 %v585
        %v734 = vunpack.c.l.b16 %v586
        %v735 = vunpack.c.h.b16 %v586
        %v736 = vunpack.c.l.b16 %v587
        %v737 = vunpack.c.h.b16 %v587
        %v738 = vunpack.c.l.b16 %v588
        %v739 = vunpack.c.h.b16 %v588
        %v740 = vunpack.c.l.b16 %v589
        %v741 = vunpack.c.h.b16 %v589
        %v742 = vunpack.c.l.b16 %v590
        %v743 = vunpack.c.h.b16 %v590
        %v744 = vunpack.c.l.b16 %v591
        %v745 = vunpack.c.h.b16 %v591
        %v746 = vunpack.c.l.b16 %v592
        %v747 = vunpack.c.h.b16 %v592
        %v748 = vunpack.c.l.b16 %v593
        %v749 = vunpack.c.h.b16 %v593
        %v750 = vunpack.c.l.b16 %v594
        %v751 = vunpack.c.h.b16 %v594
        %v752 = vunpack.c.l.b16 %v595
        %v753 = vunpack.c.h.b16 %v595
        %v754 = vpack.c.b16 %v722, %v722
        %v755 = vpack.c.b16 %v723, %v723
        %v756 = vpack.c.b16 %v724, %v724
        %v757 = vpack.c.b16 %v725, %v725
        %v758 = vpack.c.b16 %v726, %v726
        %v759 = vpack.c.b16 %v727, %v727
        %v760 = vpack.c.b16 %v728, %v728
        %v761 = vpack.c.b16 %v729, %v729
        %v762 = vpack.c.b16 %v730, %v730
        %v763 = vpack.c.b16 %v731, %v731
        %v764 = vpack.c.b16 %v732, %v732
        %v765 = vpack.c.b16 %v733, %v733
        %v766 = vpack.c.b16 %v734, %v734
        %v767 = vpack.c.b16 %v735, %v735
        %v768 = vpack.c.b16 %v736, %v736
        %v769 = vpack.c.b16 %v737, %v737
        %v770 = vpack.c.b16 %v738, %v738
        %v771 = vpack.c.b16 %v739, %v739
        %v772 = vpack.c.b16 %v740, %v740
        %v773 = vpack.c.b16 %v741, %v741
        %v774 = vpack.c.b16 %v742, %v742
        %v775 = vpack.c.b16 %v743, %v743
        %v776 = vpack.c.b16 %v744, %v744
        %v777 = vpack.c.b16 %v745, %v745
        %v778 = vpack.c.b16 %v746, %v746
        %v779 = vpack.c.b16 %v747, %v747
        %v780 = vpack.c.b16 %v748, %v748
        %v781 = vpack.c.b16 %v749, %v749
        %v782 = vpack.c.b16 %v750, %v750
        %v783 = vpack.c.b16 %v751, %v751
        %v784 = vpack.c.b16 %v752, %v752
        %v785 = vpack.c.b16 %v753, %v753
        %vm786 = vsmask.f32 4368
        %vm787 = vmor %vm606, %vm786
        %v789 = vshrl.u32 %v754, 16
        %v791 = vrot.slane %v789, 7
        %v792 = vshll.u32 %v754, 16
        %v794 = vor.u32 %v791, %v792
        %v795 = vrot.slane %v791, 4
        %v797 = vshrl.u32 %v755, 16
        %v799 = vrot.slane %v797, 7
        %v800 = vshll.u32 %v755, 16
        %v802 = vor.u32 %v799, %v800
        %v803 = vsel %vm787, %v795, %v802
        %v804 = vrot.slane %v799, 4
        %v806 = vshrl.u32 %v756, 16
        %v808 = vrot.slane %v806, 7
        %v809 = vshll.u32 %v756, 16
        %v811 = vor.u32 %v808, %v809
        %v812 = vrot.slane %v808, 4
        %v814 = vshrl.u32 %v757, 16
        %v816 = vrot.slane %v814, 7
        %v817 = vshll.u32 %v757, 16
        %v819 = vor.u32 %v816, %v817
        %v820 = vsel %vm787, %v812, %v819
        %v821 = vrot.slane %v816, 4
        %v823 = vshrl.u32 %v758, 16
        %v825 = vrot.slane %v823, 7
        %v826 = vshll.u32 %v758, 16
        %v828 = vor.u32 %v825, %v826
        %v829 = vrot.slane %v825, 4
        %v831 = vshrl.u32 %v759, 16
        %v833 = vrot.slane %v831, 7
        %v834 = vshll.u32 %v759, 16
        %v836 = vor.u32 %v833, %v834
        %v837 = vsel %vm787, %v829, %v836
        %v838 = vrot.slane %v833, 4
        %v840 = vshrl.u32 %v760, 16
        %v842 = vrot.slane %v840, 7
        %v843 = vshll.u32 %v760, 16
        %v845 = vor.u32 %v842, %v843
        %v846 = vrot.slane %v842, 4
        %v848 = vshrl.u32 %v761, 16
        %v850 = vrot.slane %v848, 7
        %v851 = vshll.u32 %v761, 16
        %v853 = vor.u32 %v850, %v851
        %v854 = vsel %vm787, %v846, %v853
        %v855 = vrot.slane %v850, 4
        %v857 = vshrl.u32 %v762, 16
        %v859 = vrot.slane %v857, 7
        %v860 = vshll.u32 %v762, 16
        %v862 = vor.u32 %v859, %v860
        %v863 = vrot.slane %v859, 4
        %v865 = vshrl.u32 %v763, 16
        %v867 = vrot.slane %v865, 7
        %v868 = vshll.u32 %v763, 16
        %v870 = vor.u32 %v867, %v868
        %v871 = vsel %vm787, %v863, %v870
        %v872 = vrot.slane %v867, 4
        %v874 = vshrl.u32 %v764, 16
        %v876 = vrot.slane %v874, 7
        %v877 = vshll.u32 %v764, 16
        %v879 = vor.u32 %v876, %v877
        %v880 = vrot.slane %v876, 4
        %v882 = vshrl.u32 %v765, 16
        %v884 = vrot.slane %v882, 7
        %v885 = vshll.u32 %v765, 16
        %v887 = vor.u32 %v884, %v885
        %v888 = vsel %vm787, %v880, %v887
        %v889 = vrot.slane %v884, 4
        %v891 = vshrl.u32 %v766, 16
        %v893 = vrot.slane %v891, 7
        %v894 = vshll.u32 %v766, 16
        %v896 = vor.u32 %v893, %v894
        %v897 = vrot.slane %v893, 4
        %v899 = vshrl.u32 %v767, 16
        %v901 = vrot.slane %v899, 7
        %v902 = vshll.u32 %v767, 16
        %v904 = vor.u32 %v901, %v902
        %v905 = vsel %vm787, %v897, %v904
        %v906 = vrot.slane %v901, 4
        %v908 = vshrl.u32 %v768, 16
        %v910 = vrot.slane %v908, 7
        %v911 = vshll.u32 %v768, 16
        %v913 = vor.u32 %v910, %v911
        %v914 = vrot.slane %v910, 4
        %v916 = vshrl.u32 %v769, 16
        %v918 = vrot.slane %v916, 7
        %v919 = vshll.u32 %v769, 16
        %v921 = vor.u32 %v918, %v919
        %v922 = vsel %vm787, %v914, %v921
        %v923 = vrot.slane %v918, 4
        %v925 = vshrl.u32 %v770, 16
        %v927 = vrot.slane %v925, 7
        %v928 = vshll.u32 %v770, 16
        %v930 = vor.u32 %v927, %v928
        %v931 = vrot.slane %v927, 4
        %v933 = vshrl.u32 %v771, 16
        %v935 = vrot.slane %v933, 7
        %v936 = vshll.u32 %v771, 16
        %v938 = vor.u32 %v935, %v936
        %v939 = vsel %vm787, %v931, %v938
        %v940 = vrot.slane %v935, 4
        %v942 = vshrl.u32 %v772, 16
        %v944 = vrot.slane %v942, 7
        %v945 = vshll.u32 %v772, 16
        %v947 = vor.u32 %v944, %v945
        %v948 = vrot.slane %v944, 4
        %v950 = vshrl.u32 %v773, 16
        %v952 = vrot.slane %v950, 7
        %v953 = vshll.u32 %v773, 16
        %v955 = vor.u32 %v952, %v953
        %v956 = vsel %vm787, %v948, %v955
        %v957 = vrot.slane %v952, 4
        %v959 = vshrl.u32 %v774, 16
        %v961 = vrot.slane %v959, 7
        %v962 = vshll.u32 %v774, 16
        %v964 = vor.u32 %v961, %v962
        %v965 = vrot.slane %v961, 4
        %v967 = vshrl.u32 %v775, 16
        %v969 = vrot.slane %v967, 7
        %v970 = vshll.u32 %v775, 16
        %v972 = vor.u32 %v969, %v970
        %v973 = vsel %vm787, %v965, %v972
        %v974 = vrot.slane %v969, 4
        %v976 = vshrl.u32 %v776, 16
        %v978 = vrot.slane %v976, 7
        %v979 = vshll.u32 %v776, 16
        %v981 = vor.u32 %v978, %v979
        %v982 = vrot.slane %v978, 4
        %v984 = vshrl.u32 %v777, 16
        %v986 = vrot.slane %v984, 7
        %v987 = vshll.u32 %v777, 16
        %v989 = vor.u32 %v986, %v987
        %v990 = vsel %vm787, %v982, %v989
        %v991 = vrot.slane %v986, 4
        %v993 = vshrl.u32 %v778, 16
        %v995 = vrot.slane %v993, 7
        %v996 = vshll.u32 %v778, 16
        %v998 = vor.u32 %v995, %v996
        %v999 = vrot.slane %v995, 4
        %v1001 = vshrl.u32 %v779, 16
        %v1003 = vrot.slane %v1001, 7
        %v1004 = vshll.u32 %v779, 16
        %v1006 = vor.u32 %v1003, %v1004
        %v1007 = vsel %vm787, %v999, %v1006
        %v1008 = vrot.slane %v1003, 4
        %v1010 = vshrl.u32 %v780, 16
        %v1012 = vrot.slane %v1010, 7
        %v1013 = vshll.u32 %v780, 16
        %v1015 = vor.u32 %v1012, %v1013
        %v1016 = vrot.slane %v1012, 4
        %v1018 = vshrl.u32 %v781, 16
        %v1020 = vrot.slane %v1018, 7
        %v1021 = vshll.u32 %v781, 16
        %v1023 = vor.u32 %v1020, %v1021
        %v1024 = vsel %vm787, %v1016, %v1023
        %v1025 = vrot.slane %v1020, 4
        %v1027 = vshrl.u32 %v782, 16
        %v1029 = vrot.slane %v1027, 7
        %v1030 = vshll.u32 %v782, 16
        %v1032 = vor.u32 %v1029, %v1030
        %v1033 = vrot.slane %v1029, 4
        %v1035 = vshrl.u32 %v783, 16
        %v1037 = vrot.slane %v1035, 7
        %v1038 = vshll.u32 %v783, 16
        %v1040 = vor.u32 %v1037, %v1038
        %v1041 = vsel %vm787, %v1033, %v1040
        %v1042 = vrot.slane %v1037, 4
        %v1044 = vshrl.u32 %v784, 16
        %v1046 = vrot.slane %v1044, 7
        %v1047 = vshll.u32 %v784, 16
        %v1049 = vor.u32 %v1046, %v1047
        %v1050 = vrot.slane %v1046, 4
        %v1052 = vshrl.u32 %v785, 16
        %v1054 = vrot.slane %v1052, 7
        %v1055 = vshll.u32 %v785, 16
        %v1057 = vor.u32 %v1054, %v1055
        %v1058 = vsel %vm787, %v1050, %v1057
        %v1059 = vrot.slane %v1054, 4
        %vm1108 = vcmask 257024
        %vm1109 = vmand %vm1108, %vm656
        %v1110 = vld [vmem:[%s604] sm:$0xf]
        %v1111 = vsel %vm1109, %v794, %v1110
        %1112 = vst [vmem:[%s604] sm:$0xf] %v1111
        %1113 = vst.msk [vmem:[%s604 + $0x4] sm:$0xf] %vm596, %v803
        %v1114 = vld [vmem:[%s604 + $0x8] sm:$0x1]
        %v1115 = vsel %vm607, %v804, %v1114
        %1116 = vst [vmem:[%s604 + $0x8] sm:$0x1] %v1115
        %v1117 = vld [vmem:[%s604 + $0xc] sm:$0xf]
        %v1118 = vsel %vm1109, %v811, %v1117
        %1119 = vst [vmem:[%s604 + $0xc] sm:$0xf] %v1118
        %1120 = vst.msk [vmem:[%s604 + $0x10] sm:$0xf] %vm596, %v820
        %v1121 = vld [vmem:[%s604 + $0x14] sm:$0x1]
        %v1122 = vsel %vm607, %v821, %v1121
        %1123 = vst [vmem:[%s604 + $0x14] sm:$0x1] %v1122
        %v1124 = vld [vmem:[%s604 + $0x18] sm:$0xf]
        %v1125 = vsel %vm1109, %v828, %v1124
        %1126 = vst [vmem:[%s604 + $0x18] sm:$0xf] %v1125
        %1127 = vst.msk [vmem:[%s604 + $0x1c] sm:$0xf] %vm596, %v837
        %v1128 = vld [vmem:[%s604 + $0x20] sm:$0x1]
        %v1129 = vsel %vm607, %v838, %v1128
        %1130 = vst [vmem:[%s604 + $0x20] sm:$0x1] %v1129
        %v1131 = vld [vmem:[%s604 + $0x24] sm:$0xf]
        %v1132 = vsel %vm1109, %v845, %v1131
        %1133 = vst [vmem:[%s604 + $0x24] sm:$0xf] %v1132
        %1134 = vst.msk [vmem:[%s604 + $0x28] sm:$0xf] %vm596, %v854
        %v1135 = vld [vmem:[%s604 + $0x2c] sm:$0x1]
        %v1136 = vsel %vm607, %v855, %v1135
        %1137 = vst [vmem:[%s604 + $0x2c] sm:$0x1] %v1136
        %v1138 = vld [vmem:[%s604 + $0x30] sm:$0xf]
        %v1139 = vsel %vm1109, %v862, %v1138
        %1140 = vst [vmem:[%s604 + $0x30] sm:$0xf] %v1139
        %1141 = vst.msk [vmem:[%s604 + $0x34] sm:$0xf] %vm596, %v871
        %v1142 = vld [vmem:[%s604 + $0x38] sm:$0x1]
        %v1143 = vsel %vm607, %v872, %v1142
        %1144 = vst [vmem:[%s604 + $0x38] sm:$0x1] %v1143
        %v1145 = vld [vmem:[%s604 + $0x3c] sm:$0xf]
        %v1146 = vsel %vm1109, %v879, %v1145
        %1147 = vst [vmem:[%s604 + $0x3c] sm:$0xf] %v1146
        %1148 = vst.msk [vmem:[%s604 + $0x40] sm:$0xf] %vm596, %v888
        %v1149 = vld [vmem:[%s604 + $0x44] sm:$0x1]
        %v1150 = vsel %vm607, %v889, %v1149
        %1151 = vst [vmem:[%s604 + $0x44] sm:$0x1] %v1150
        %v1152 = vld [vmem:[%s604 + $0x48] sm:$0xf]
        %v1153 = vsel %vm1109, %v896, %v1152
        %1154 = vst [vmem:[%s604 + $0x48] sm:$0xf] %v1153
        %1155 = vst.msk [vmem:[%s604 + $0x4c] sm:$0xf] %vm596, %v905
        %v1156 = vld [vmem:[%s604 + $0x50] sm:$0x1]
        %v1157 = vsel %vm607, %v906, %v1156
        %1158 = vst [vmem:[%s604 + $0x50] sm:$0x1] %v1157
        %v1159 = vld [vmem:[%s604 + $0x54] sm:$0xf]
        %v1160 = vsel %vm1109, %v913, %v1159
        %1161 = vst [vmem:[%s604 + $0x54] sm:$0xf] %v1160
        %1162 = vst.msk [vmem:[%s604 + $0x58] sm:$0xf] %vm596, %v922
        %v1163 = vld [vmem:[%s604 + $0x5c] sm:$0x1]
        %v1164 = vsel %vm607, %v923, %v1163
        %1165 = vst [vmem:[%s604 + $0x5c] sm:$0x1] %v1164
        %v1166 = vld [vmem:[%s604 + $0x60] sm:$0xf]
        %v1167 = vsel %vm1109, %v930, %v1166
        %1168 = vst [vmem:[%s604 + $0x60] sm:$0xf] %v1167
        %1169 = vst.msk [vmem:[%s604 + $0x64] sm:$0xf] %vm596, %v939
        %v1170 = vld [vmem:[%s604 + $0x68] sm:$0x1]
        %v1171 = vsel %vm607, %v940, %v1170
        %1172 = vst [vmem:[%s604 + $0x68] sm:$0x1] %v1171
        %v1173 = vld [vmem:[%s604 + $0x6c] sm:$0xf]
        %v1174 = vsel %vm1109, %v947, %v1173
        %1175 = vst [vmem:[%s604 + $0x6c] sm:$0xf] %v1174
        %1176 = vst.msk [vmem:[%s604 + $0x70] sm:$0xf] %vm596, %v956
        %v1177 = vld [vmem:[%s604 + $0x74] sm:$0x1]
        %v1178 = vsel %vm607, %v957, %v1177
        %1179 = vst [vmem:[%s604 + $0x74] sm:$0x1] %v1178
        %v1180 = vld [vmem:[%s604 + $0x78] sm:$0xf]
        %v1181 = vsel %vm1109, %v964, %v1180
        %1182 = vst [vmem:[%s604 + $0x78] sm:$0xf] %v1181
        %1183 = vst.msk [vmem:[%s604 + $0x7c] sm:$0xf] %vm596, %v973
        %v1184 = vld [vmem:[%s604 + $0x80] sm:$0x1]
        %v1185 = vsel %vm607, %v974, %v1184
        %1186 = vst [vmem:[%s604 + $0x80] sm:$0x1] %v1185
        %v1187 = vld [vmem:[%s604 + $0x84] sm:$0xf]
        %v1188 = vsel %vm1109, %v981, %v1187
        %1189 = vst [vmem:[%s604 + $0x84] sm:$0xf] %v1188
        %1190 = vst.msk [vmem:[%s604 + $0x88] sm:$0xf] %vm596, %v990
        %v1191 = vld [vmem:[%s604 + $0x8c] sm:$0x1]
        %v1192 = vsel %vm607, %v991, %v1191
        %1193 = vst [vmem:[%s604 + $0x8c] sm:$0x1] %v1192
        %v1194 = vld [vmem:[%s604 + $0x90] sm:$0xf]
        %v1195 = vsel %vm1109, %v998, %v1194
        %1196 = vst [vmem:[%s604 + $0x90] sm:$0xf] %v1195
        %1197 = vst.msk [vmem:[%s604 + $0x94] sm:$0xf] %vm596, %v1007
        %v1198 = vld [vmem:[%s604 + $0x98] sm:$0x1]
        %v1199 = vsel %vm607, %v1008, %v1198
        %1200 = vst [vmem:[%s604 + $0x98] sm:$0x1] %v1199
        %v1201 = vld [vmem:[%s604 + $0x9c] sm:$0xf]
        %v1202 = vsel %vm1109, %v1015, %v1201
        %1203 = vst [vmem:[%s604 + $0x9c] sm:$0xf] %v1202
        %1204 = vst.msk [vmem:[%s604 + $0xa0] sm:$0xf] %vm596, %v1024
        %v1205 = vld [vmem:[%s604 + $0xa4] sm:$0x1]
        %v1206 = vsel %vm607, %v1025, %v1205
        %1207 = vst [vmem:[%s604 + $0xa4] sm:$0x1] %v1206
        %v1208 = vld [vmem:[%s604 + $0xa8] sm:$0xf]
        %v1209 = vsel %vm1109, %v1032, %v1208
        %1210 = vst [vmem:[%s604 + $0xa8] sm:$0xf] %v1209
        %1211 = vst.msk [vmem:[%s604 + $0xac] sm:$0xf] %vm596, %v1041
        %v1212 = vld [vmem:[%s604 + $0xb0] sm:$0x1]
        %v1213 = vsel %vm607, %v1042, %v1212
        %1214 = vst [vmem:[%s604 + $0xb0] sm:$0x1] %v1213
        %v1215 = vld [vmem:[%s604 + $0xb4] sm:$0xf]
        %v1216 = vsel %vm1109, %v1049, %v1215
        %1217 = vst [vmem:[%s604 + $0xb4] sm:$0xf] %v1216
        %1218 = vst.msk [vmem:[%s604 + $0xb8] sm:$0xf] %vm596, %v1058
        %v1219 = vld [vmem:[%s604 + $0xbc] sm:$0x1]
        %v1220 = vsel %vm607, %v1059, %v1219
        %1221 = vst [vmem:[%s604 + $0xbc] sm:$0x1] %v1220
      $region48: #{block_forward.5} parent=43 // pred_fallthru
        _
      %s1222 = smul.u32 %s25, 8
      %s1223 = smul.u32 %s1222, 3
      %s1224 = smul.addr %s1223, 4
      %s1225 = scalar_lea.vmem [#allocation2], %s1224
      %v1226 = vld [vmem:[%s1225] sm:$0xf]
      %v1227 = vld [vmem:[%s1225 + $0x4] sm:$0xf]
      %v1228 = vld [vmem:[%s1225 + $0xc] sm:$0xf]
      %v1229 = vld [vmem:[%s1225 + $0x10] sm:$0xf]
      %v1230 = vld [vmem:[%s1225 + $0x18] sm:$0xf]
      %v1231 = vld [vmem:[%s1225 + $0x1c] sm:$0xf]
      %v1232 = vld [vmem:[%s1225 + $0x24] sm:$0xf]
      %v1233 = vld [vmem:[%s1225 + $0x28] sm:$0xf]
      %v1234 = vld [vmem:[%s1225 + $0x30] sm:$0xf]
      %v1235 = vld [vmem:[%s1225 + $0x34] sm:$0xf]
      %v1236 = vld [vmem:[%s1225 + $0x3c] sm:$0xf]
      %v1237 = vld [vmem:[%s1225 + $0x40] sm:$0xf]
      %v1238 = vld [vmem:[%s1225 + $0x48] sm:$0xf]
      %v1239 = vld [vmem:[%s1225 + $0x4c] sm:$0xf]
      %v1240 = vld [vmem:[%s1225 + $0x54] sm:$0xf]
      %v1241 = vld [vmem:[%s1225 + $0x58] sm:$0xf]
      %v1242 = vld [vmem:[%s1225 + $0x8] sm:$0x1]
      %v1243 = vld [vmem:[%s1225 + $0x14] sm:$0x1]
      %v1244 = vld [vmem:[%s1225 + $0x20] sm:$0x1]
      %v1245 = vld [vmem:[%s1225 + $0x2c] sm:$0x1]
      %v1246 = vld [vmem:[%s1225 + $0x38] sm:$0x1]
      %v1247 = vld [vmem:[%s1225 + $0x44] sm:$0x1]
      %v1248 = vld [vmem:[%s1225 + $0x50] sm:$0x1]
      %v1249 = vld [vmem:[%s1225 + $0x5c] sm:$0x1]
      %v1250 = vld [vmem:[%s1225] sm:$0xe]
      %v1251 = vld [vmem:[%s1225 + $0xc] sm:$0xe]
      %v1252 = vld [vmem:[%s1225 + $0x18] sm:$0xe]
      %v1253 = vld [vmem:[%s1225 + $0x24] sm:$0xe]
      %v1254 = vld [vmem:[%s1225 + $0x30] sm:$0xe]
      %v1255 = vld [vmem:[%s1225 + $0x3c] sm:$0xe]
      %v1256 = vld [vmem:[%s1225 + $0x48] sm:$0xe]
      %v1257 = vld [vmem:[%s1225 + $0x54] sm:$0xe]
      %s1258 = sadd.s32 %s1222, 1
      %s1259 = smul.u32 %s1258, 3
      %s1260 = smul.addr %s1259, 4
      %s1261 = scalar_lea.vmem [#allocation2], %s1260
      %v1262 = vld [vmem:[%s1261] sm:$0xf]
      %v1263 = vld [vmem:[%s1261 + $0x4] sm:$0xf]
      %v1264 = vld [vmem:[%s1261 + $0xc] sm:$0xf]
      %v1265 = vld [vmem:[%s1261 + $0x10] sm:$0xf]
      %v1266 = vld [vmem:[%s1261 + $0x18] sm:$0xf]
      %v1267 = vld [vmem:[%s1261 + $0x1c] sm:$0xf]
      %v1268 = vld [vmem:[%s1261 + $0x24] sm:$0xf]
      %v1269 = vld [vmem:[%s1261 + $0x28] sm:$0xf]
      %v1270 = vld [vmem:[%s1261 + $0x30] sm:$0xf]
      %v1271 = vld [vmem:[%s1261 + $0x34] sm:$0xf]
      %v1272 = vld [vmem:[%s1261 + $0x3c] sm:$0xf]
      %v1273 = vld [vmem:[%s1261 + $0x40] sm:$0xf]
      %v1274 = vld [vmem:[%s1261 + $0x48] sm:$0xf]
      %v1275 = vld [vmem:[%s1261 + $0x4c] sm:$0xf]
      %v1276 = vld [vmem:[%s1261 + $0x54] sm:$0xf]
      %v1277 = vld [vmem:[%s1261 + $0x58] sm:$0xf]
      %v1278 = vld [vmem:[%s1261 + $0x8] sm:$0x1]
      %v1279 = vld [vmem:[%s1261 + $0x14] sm:$0x1]
      %v1280 = vld [vmem:[%s1261 + $0x20] sm:$0x1]
      %v1281 = vld [vmem:[%s1261 + $0x2c] sm:$0x1]
      %v1282 = vld [vmem:[%s1261 + $0x38] sm:$0x1]
      %v1283 = vld [vmem:[%s1261 + $0x44] sm:$0x1]
      %v1284 = vld [vmem:[%s1261 + $0x50] sm:$0x1]
      %v1285 = vld [vmem:[%s1261 + $0x5c] sm:$0x1]
      %v1286 = vld [vmem:[%s1261] sm:$0xe]
      %v1287 = vld [vmem:[%s1261 + $0xc] sm:$0xe]
      %v1288 = vld [vmem:[%s1261 + $0x18] sm:$0xe]
      %v1289 = vld [vmem:[%s1261 + $0x24] sm:$0xe]
      %v1290 = vld [vmem:[%s1261 + $0x30] sm:$0xe]
      %v1291 = vld [vmem:[%s1261 + $0x3c] sm:$0xe]
      %v1292 = vld [vmem:[%s1261 + $0x48] sm:$0xe]
      %v1293 = vld [vmem:[%s1261 + $0x54] sm:$0xe]
      %s1294 = sadd.s32 %s1222, 2
      %s1295 = smul.u32 %s1294, 3
      %s1296 = smul.addr %s1295, 4
      %s1297 = scalar_lea.vmem [#allocation2], %s1296
      %v1298 = vld [vmem:[%s1297] sm:$0xf]
      %v1299 = vld [vmem:[%s1297 + $0x4] sm:$0xf]
      %v1300 = vld [vmem:[%s1297 + $0xc] sm:$0xf]
      %v1301 = vld [vmem:[%s1297 + $0x10] sm:$0xf]
      %v1302 = vld [vmem:[%s1297 + $0x18] sm:$0xf]
      %v1303 = vld [vmem:[%s1297 + $0x1c] sm:$0xf]
      %v1304 = vld [vmem:[%s1297 + $0x24] sm:$0xf]
      %v1305 = vld [vmem:[%s1297 + $0x28] sm:$0xf]
      %v1306 = vld [vmem:[%s1297 + $0x30] sm:$0xf]
      %v1307 = vld [vmem:[%s1297 + $0x34] sm:$0xf]
      %v1308 = vld [vmem:[%s1297 + $0x3c] sm:$0xf]
      %v1309 = vld [vmem:[%s1297 + $0x40] sm:$0xf]
      %v1310 = vld [vmem:[%s1297 + $0x48] sm:$0xf]
      %v1311 = vld [vmem:[%s1297 + $0x4c] sm:$0xf]
      %v1312 = vld [vmem:[%s1297 + $0x54] sm:$0xf]
      %v1313 = vld [vmem:[%s1297 + $0x58] sm:$0xf]
      %v1314 = vld [vmem:[%s1297 + $0x8] sm:$0x1]
      %v1315 = vld [vmem:[%s1297 + $0x14] sm:$0x1]
      %v1316 = vld [vmem:[%s1297 + $0x20] sm:$0x1]
      %v1317 = vld [vmem:[%s1297 + $0x2c] sm:$0x1]
      %v1318 = vld [vmem:[%s1297 + $0x38] sm:$0x1]
      %v1319 = vld [vmem:[%s1297 + $0x44] sm:$0x1]
      %v1320 = vld [vmem:[%s1297 + $0x50] sm:$0x1]
      %v1321 = vld [vmem:[%s1297 + $0x5c] sm:$0x1]
      %v1322 = vld [vmem:[%s1297] sm:$0xe]
      %v1323 = vld [vmem:[%s1297 + $0xc] sm:$0xe]
      %v1324 = vld [vmem:[%s1297 + $0x18] sm:$0xe]
      %v1325 = vld [vmem:[%s1297 + $0x24] sm:$0xe]
      %v1326 = vld [vmem:[%s1297 + $0x30] sm:$0xe]
      %v1327 = vld [vmem:[%s1297 + $0x3c] sm:$0xe]
      %v1328 = vld [vmem:[%s1297 + $0x48] sm:$0xe]
      %v1329 = vld [vmem:[%s1297 + $0x54] sm:$0xe]
      %v1346 = vunpack.c.l.b16 %v1226
      %v1347 = vunpack.c.l.b16 %v1227
      %v1348 = vunpack.c.l.b16 %v1228
      %v1349 = vunpack.c.l.b16 %v1229
      %v1350 = vunpack.c.l.b16 %v1230
      %v1351 = vunpack.c.l.b16 %v1231
      %v1352 = vunpack.c.l.b16 %v1232
      %v1353 = vunpack.c.l.b16 %v1233
      %v1354 = vunpack.c.l.b16 %v1234
      %v1355 = vunpack.c.l.b16 %v1235
      %v1356 = vunpack.c.l.b16 %v1236
      %v1357 = vunpack.c.l.b16 %v1237
      %v1358 = vunpack.c.l.b16 %v1238
      %v1359 = vunpack.c.l.b16 %v1239
      %v1360 = vunpack.c.l.b16 %v1240
      %v1361 = vunpack.c.l.b16 %v1241
      %v1362 = vpack.c.b16 %v1347, %v1346
      %v1363 = vpack.c.b16 %v1349, %v1348
      %v1364 = vpack.c.b16 %v1351, %v1350
      %v1365 = vpack.c.b16 %v1353, %v1352
      %v1366 = vpack.c.b16 %v1355, %v1354
      %v1367 = vpack.c.b16 %v1357, %v1356
      %v1368 = vpack.c.b16 %v1359, %v1358
      %v1369 = vpack.c.b16 %v1361, %v1360
      %v1378 = vunpack.c.l.b16 %v1242
      %v1379 = vunpack.c.l.b16 %v1243
      %v1380 = vunpack.c.l.b16 %v1244
      %v1381 = vunpack.c.l.b16 %v1245
      %v1382 = vunpack.c.l.b16 %v1246
      %v1383 = vunpack.c.l.b16 %v1247
      %v1384 = vunpack.c.l.b16 %v1248
      %v1385 = vunpack.c.l.b16 %v1249
      %v1386 = vpack.c.b16 %v1378, %v1378
      %v1387 = vpack.c.b16 %v1379, %v1379
      %v1388 = vpack.c.b16 %v1380, %v1380
      %v1389 = vpack.c.b16 %v1381, %v1381
      %v1390 = vpack.c.b16 %v1382, %v1382
      %v1391 = vpack.c.b16 %v1383, %v1383
      %v1392 = vpack.c.b16 %v1384, %v1384
      %v1393 = vpack.c.b16 %v1385, %v1385
      %vm1394 = vsmask.f32 7424
      %v1396 = vshrl.u32 %v1362, 16
      %v1398 = vshll.u32 %v1362, 16
      %v1400 = vrot.slane %v1398, 1
      %v1401 = vor.u32 %v1396, %v1400
      %v1403 = vshll.u32 %v1386, 16
      %v1405 = vrot.slane %v1403, 1
      %v1406 = vsel %vm1394, %v1401, %v1405
      %v1408 = vshrl.u32 %v1363, 16
      %v1410 = vshll.u32 %v1363, 16
      %v1412 = vrot.slane %v1410, 1
      %v1413 = vor.u32 %v1408, %v1412
      %v1415 = vshll.u32 %v1387, 16
      %v1417 = vrot.slane %v1415, 1
      %v1418 = vsel %vm1394, %v1413, %v1417
      %v1420 = vshrl.u32 %v1364, 16
      %v1422 = vshll.u32 %v1364, 16
      %v1424 = vrot.slane %v1422, 1
      %v1425 = vor.u32 %v1420, %v1424
      %v1427 = vshll.u32 %v1388, 16
      %v1429 = vrot.slane %v1427, 1
      %v1430 = vsel %vm1394, %v1425, %v1429
      %v1432 = vshrl.u32 %v1365, 16
      %v1434 = vshll.u32 %v1365, 16
      %v1436 = vrot.slane %v1434, 1
      %v1437 = vor.u32 %v1432, %v1436
      %v1439 = vshll.u32 %v1389, 16
      %v1441 = vrot.slane %v1439, 1
      %v1442 = vsel %vm1394, %v1437, %v1441
      %v1444 = vshrl.u32 %v1366, 16
      %v1446 = vshll.u32 %v1366, 16
      %v1448 = vrot.slane %v1446, 1
      %v1449 = vor.u32 %v1444, %v1448
      %v1451 = vshll.u32 %v1390, 16
      %v1453 = vrot.slane %v1451, 1
      %v1454 = vsel %vm1394, %v1449, %v1453
      %v1456 = vshrl.u32 %v1367, 16
      %v1458 = vshll.u32 %v1367, 16
      %v1460 = vrot.slane %v1458, 1
      %v1461 = vor.u32 %v1456, %v1460
      %v1463 = vshll.u32 %v1391, 16
      %v1465 = vrot.slane %v1463, 1
      %v1466 = vsel %vm1394, %v1461, %v1465
      %v1468 = vshrl.u32 %v1368, 16
      %v1470 = vshll.u32 %v1368, 16
      %v1472 = vrot.slane %v1470, 1
      %v1473 = vor.u32 %v1468, %v1472
      %v1475 = vshll.u32 %v1392, 16
      %v1477 = vrot.slane %v1475, 1
      %v1478 = vsel %vm1394, %v1473, %v1477
      %v1480 = vshrl.u32 %v1369, 16
      %v1482 = vshll.u32 %v1369, 16
      %v1484 = vrot.slane %v1482, 1
      %v1485 = vor.u32 %v1480, %v1484
      %v1487 = vshll.u32 %v1393, 16
      %v1489 = vrot.slane %v1487, 1
      %v1490 = vsel %vm1394, %v1485, %v1489
      %1491 = vrot.lane.b32.xlu0 %v1406, 32
      %v1492 = vpop.permute.xlu0 %1491
      %1493 = vrot.lane.b32.xlu0 %v1418, 32
      %v1494 = vpop.permute.xlu0 %1493
      %1495 = vrot.lane.b32.xlu0 %v1430, 32
      %v1496 = vpop.permute.xlu0 %1495
      %1497 = vrot.lane.b32.xlu0 %v1442, 32
      %v1498 = vpop.permute.xlu0 %1497
      %1499 = vrot.lane.b32.xlu0 %v1454, 32
      %v1500 = vpop.permute.xlu0 %1499
      %1501 = vrot.lane.b32.xlu0 %v1466, 32
      %v1502 = vpop.permute.xlu0 %1501
      %1503 = vrot.lane.b32.xlu0 %v1478, 32
      %v1504 = vpop.permute.xlu0 %1503
      %1505 = vrot.lane.b32.xlu0 %v1490, 32
      %v1506 = vpop.permute.xlu0 %1505
      %v1515 = vunpack.c.l.b16 %v1250
      %v1516 = vunpack.c.l.b16 %v1251
      %v1517 = vunpack.c.l.b16 %v1252
      %v1518 = vunpack.c.l.b16 %v1253
      %v1519 = vunpack.c.l.b16 %v1254
      %v1520 = vunpack.c.l.b16 %v1255
      %v1521 = vunpack.c.l.b16 %v1256
      %v1522 = vunpack.c.l.b16 %v1257
      %v1523 = vpack.c.b16 %v1347, %v1515
      %v1524 = vpack.c.b16 %v1349, %v1516
      %v1525 = vpack.c.b16 %v1351, %v1517
      %v1526 = vpack.c.b16 %v1353, %v1518
      %v1527 = vpack.c.b16 %v1355, %v1519
      %v1528 = vpack.c.b16 %v1357, %v1520
      %v1529 = vpack.c.b16 %v1359, %v1521
      %v1530 = vpack.c.b16 %v1361, %v1522
      %vm1531 = vcmask 1046528
      %v1532 = vrot.slane %v1523, 1
      %v1533 = vrot.slane %v1386, 1
      %v1534 = vsel %vm1531, %v1532, %v1533
      %v1535 = vrot.slane %v1524, 1
      %v1536 = vrot.slane %v1387, 1
      %v1537 = vsel %vm1531, %v1535, %v1536
      %v1538 = vrot.slane %v1525, 1
      %v1539 = vrot.slane %v1388, 1
      %v1540 = vsel %vm1531, %v1538, %v1539
      %v1541 = vrot.slane %v1526, 1
      %v1542 = vrot.slane %v1389, 1
      %v1543 = vsel %vm1531, %v1541, %v1542
      %v1544 = vrot.slane %v1527, 1
      %v1545 = vrot.slane %v1390, 1
      %v1546 = vsel %vm1531, %v1544, %v1545
      %v1547 = vrot.slane %v1528, 1
      %v1548 = vrot.slane %v1391, 1
      %v1549 = vsel %vm1531, %v1547, %v1548
      %v1550 = vrot.slane %v1529, 1
      %v1551 = vrot.slane %v1392, 1
      %v1552 = vsel %vm1531, %v1550, %v1551
      %v1553 = vrot.slane %v1530, 1
      %v1554 = vrot.slane %v1393, 1
      %v1555 = vsel %vm1531, %v1553, %v1554
      %1556 = vrot.lane.b32.xlu0 %v1534, 64
      %v1557 = vpop.permute.xlu0 %1556
      %1558 = vrot.lane.b32.xlu0 %v1537, 64
      %v1559 = vpop.permute.xlu0 %1558
      %1560 = vrot.lane.b32.xlu0 %v1540, 64
      %v1561 = vpop.permute.xlu0 %1560
      %1562 = vrot.lane.b32.xlu0 %v1543, 64
      %v1563 = vpop.permute.xlu0 %1562
      %1564 = vrot.lane.b32.xlu0 %v1546, 64
      %v1565 = vpop.permute.xlu0 %1564
      %1566 = vrot.lane.b32.xlu0 %v1549, 64
      %v1567 = vpop.permute.xlu0 %1566
      %1568 = vrot.lane.b32.xlu0 %v1552, 64
      %v1569 = vpop.permute.xlu0 %1568
      %1570 = vrot.lane.b32.xlu0 %v1555, 64
      %v1571 = vpop.permute.xlu0 %1570
      %v1588 = vunpack.c.l.b16 %v1262
      %v1589 = vunpack.c.l.b16 %v1263
      %v1590 = vunpack.c.l.b16 %v1264
      %v1591 = vunpack.c.l.b16 %v1265
      %v1592 = vunpack.c.l.b16 %v1266
      %v1593 = vunpack.c.l.b16 %v1267
      %v1594 = vunpack.c.l.b16 %v1268
      %v1595 = vunpack.c.l.b16 %v1269
      %v1596 = vunpack.c.l.b16 %v1270
      %v1597 = vunpack.c.l.b16 %v1271
      %v1598 = vunpack.c.l.b16 %v1272
      %v1599 = vunpack.c.l.b16 %v1273
      %v1600 = vunpack.c.l.b16 %v1274
      %v1601 = vunpack.c.l.b16 %v1275
      %v1602 = vunpack.c.l.b16 %v1276
      %v1603 = vunpack.c.l.b16 %v1277
      %v1604 = vpack.c.b16 %v1589, %v1588
      %v1605 = vpack.c.b16 %v1591, %v1590
      %v1606 = vpack.c.b16 %v1593, %v1592
      %v1607 = vpack.c.b16 %v1595, %v1594
      %v1608 = vpack.c.b16 %v1597, %v1596
      %v1609 = vpack.c.b16 %v1599, %v1598
      %v1610 = vpack.c.b16 %v1601, %v1600
      %v1611 = vpack.c.b16 %v1603, %v1602
      %1612 = vrot.lane.b32.xlu0 %v1604, 96
      %v1613 = vpop.permute.xlu0 %1612
      %1614 = vrot.lane.b32.xlu0 %v1605, 96
      %v1615 = vpop.permute.xlu0 %1614
      %1616 = vrot.lane.b32.xlu0 %v1606, 96
      %v1617 = vpop.permute.xlu0 %1616
      %1618 = vrot.lane.b32.xlu0 %v1607, 96
      %v1619 = vpop.permute.xlu0 %1618
      %1620 = vrot.lane.b32.xlu0 %v1608, 96
      %v1621 = vpop.permute.xlu0 %1620
      %1622 = vrot.lane.b32.xlu0 %v1609, 96
      %v1623 = vpop.permute.xlu0 %1622
      %1624 = vrot.lane.b32.xlu0 %v1610, 96
      %v1625 = vpop.permute.xlu0 %1624
      %1626 = vrot.lane.b32.xlu0 %v1611, 96
      %v1627 = vpop.permute.xlu0 %1626
      %v1636 = vunpack.c.l.b16 %v1278
      %v1637 = vunpack.c.l.b16 %v1279
      %v1638 = vunpack.c.l.b16 %v1280
      %v1639 = vunpack.c.l.b16 %v1281
      %v1640 = vunpack.c.l.b16 %v1282
      %v1641 = vunpack.c.l.b16 %v1283
      %v1642 = vunpack.c.l.b16 %v1284
      %v1643 = vunpack.c.l.b16 %v1285
      %v1644 = vpack.c.b16 %v1636, %v1636
      %v1645 = vpack.c.b16 %v1637, %v1637
      %v1646 = vpack.c.b16 %v1638, %v1638
      %v1647 = vpack.c.b16 %v1639, %v1639
      %v1648 = vpack.c.b16 %v1640, %v1640
      %v1649 = vpack.c.b16 %v1641, %v1641
      %v1650 = vpack.c.b16 %v1642, %v1642
      %v1651 = vpack.c.b16 %v1643, %v1643
      %v1653 = vshrl.u32 %v1604, 16
      %v1655 = vshll.u32 %v1604, 16
      %v1657 = vrot.slane %v1655, 1
      %v1658 = vor.u32 %v1653, %v1657
      %v1660 = vshll.u32 %v1644, 16
      %v1662 = vrot.slane %v1660, 1
      %v1663 = vsel %vm1394, %v1658, %v1662
      %v1665 = vshrl.u32 %v1605, 16
      %v1667 = vshll.u32 %v1605, 16
      %v1669 = vrot.slane %v1667, 1
      %v1670 = vor.u32 %v1665, %v1669
      %v1672 = vshll.u32 %v1645, 16
      %v1674 = vrot.slane %v1672, 1
      %v1675 = vsel %vm1394, %v1670, %v1674
      %v1677 = vshrl.u32 %v1606, 16
      %v1679 = vshll.u32 %v1606, 16
      %v1681 = vrot.slane %v1679, 1
      %v1682 = vor.u32 %v1677, %v1681
      %v1684 = vshll.u32 %v1646, 16
      %v1686 = vrot.slane %v1684, 1
      %v1687 = vsel %vm1394, %v1682, %v1686
      %v1689 = vshrl.u32 %v1607, 16
      %v1691 = vshll.u32 %v1607, 16
      %v1693 = vrot.slane %v1691, 1
      %v1694 = vor.u32 %v1689, %v1693
      %v1696 = vshll.u32 %v1647, 16
      %v1698 = vrot.slane %v1696, 1
      %v1699 = vsel %vm1394, %v1694, %v1698
      %v1701 = vshrl.u32 %v1608, 16
      %v1703 = vshll.u32 %v1608, 16
      %v1705 = vrot.slane %v1703, 1
      %v1706 = vor.u32 %v1701, %v1705
      %v1708 = vshll.u32 %v1648, 16
      %v1710 = vrot.slane %v1708, 1
      %v1711 = vsel %vm1394, %v1706, %v1710
      %v1713 = vshrl.u32 %v1609, 16
      %v1715 = vshll.u32 %v1609, 16
      %v1717 = vrot.slane %v1715, 1
      %v1718 = vor.u32 %v1713, %v1717
      %v1720 = vshll.u32 %v1649, 16
      %v1722 = vrot.slane %v1720, 1
      %v1723 = vsel %vm1394, %v1718, %v1722
      %v1725 = vshrl.u32 %v1610, 16
      %v1727 = vshll.u32 %v1610, 16
      %v1729 = vrot.slane %v1727, 1
      %v1730 = vor.u32 %v1725, %v1729
      %v1732 = vshll.u32 %v1650, 16
      %v1734 = vrot.slane %v1732, 1
      %v1735 = vsel %vm1394, %v1730, %v1734
      %v1737 = vshrl.u32 %v1611, 16
      %v1739 = vshll.u32 %v1611, 16
      %v1741 = vrot.slane %v1739, 1
      %v1742 = vor.u32 %v1737, %v1741
      %v1744 = vshll.u32 %v1651, 16
      %v1746 = vrot.slane %v1744, 1
      %v1747 = vsel %vm1394, %v1742, %v1746
      %v1756 = vunpack.c.l.b16 %v1286
      %v1757 = vunpack.c.l.b16 %v1287
      %v1758 = vunpack.c.l.b16 %v1288
      %v1759 = vunpack.c.l.b16 %v1289
      %v1760 = vunpack.c.l.b16 %v1290
      %v1761 = vunpack.c.l.b16 %v1291
      %v1762 = vunpack.c.l.b16 %v1292
      %v1763 = vunpack.c.l.b16 %v1293
      %v1764 = vpack.c.b16 %v1589, %v1756
      %v1765 = vpack.c.b16 %v1591, %v1757
      %v1766 = vpack.c.b16 %v1593, %v1758
      %v1767 = vpack.c.b16 %v1595, %v1759
      %v1768 = vpack.c.b16 %v1597, %v1760
      %v1769 = vpack.c.b16 %v1599, %v1761
      %v1770 = vpack.c.b16 %v1601, %v1762
      %v1771 = vpack.c.b16 %v1603, %v1763
      %v1772 = vrot.slane %v1764, 1
      %v1773 = vrot.slane %v1644, 1
      %v1774 = vsel %vm1531, %v1772, %v1773
      %v1775 = vrot.slane %v1765, 1
      %v1776 = vrot.slane %v1645, 1
      %v1777 = vsel %vm1531, %v1775, %v1776
      %v1778 = vrot.slane %v1766, 1
      %v1779 = vrot.slane %v1646, 1
      %v1780 = vsel %vm1531, %v1778, %v1779
      %v1781 = vrot.slane %v1767, 1
      %v1782 = vrot.slane %v1647, 1
      %v1783 = vsel %vm1531, %v1781, %v1782
      %v1784 = vrot.slane %v1768, 1
      %v1785 = vrot.slane %v1648, 1
      %v1786 = vsel %vm1531, %v1784, %v1785
      %v1787 = vrot.slane %v1769, 1
      %v1788 = vrot.slane %v1649, 1
      %v1789 = vsel %vm1531, %v1787, %v1788
      %v1790 = vrot.slane %v1770, 1
      %v1791 = vrot.slane %v1650, 1
      %v1792 = vsel %vm1531, %v1790, %v1791
      %v1793 = vrot.slane %v1771, 1
      %v1794 = vrot.slane %v1651, 1
      %v1795 = vsel %vm1531, %v1793, %v1794
      %1796 = vrot.lane.b32.xlu0 %v1774, 32
      %v1797 = vpop.permute.xlu0 %1796
      %1798 = vrot.lane.b32.xlu0 %v1777, 32
      %v1799 = vpop.permute.xlu0 %1798
      %1800 = vrot.lane.b32.xlu0 %v1780, 32
      %v1801 = vpop.permute.xlu0 %1800
      %1802 = vrot.lane.b32.xlu0 %v1783, 32
      %v1803 = vpop.permute.xlu0 %1802
      %1804 = vrot.lane.b32.xlu0 %v1786, 32
      %v1805 = vpop.permute.xlu0 %1804
      %1806 = vrot.lane.b32.xlu0 %v1789, 32
      %v1807 = vpop.permute.xlu0 %1806
      %1808 = vrot.lane.b32.xlu0 %v1792, 32
      %v1809 = vpop.permute.xlu0 %1808
      %1810 = vrot.lane.b32.xlu0 %v1795, 32
      %v1811 = vpop.permute.xlu0 %1810
      %v1828 = vunpack.c.l.b16 %v1298
      %v1829 = vunpack.c.l.b16 %v1299
      %v1830 = vunpack.c.l.b16 %v1300
      %v1831 = vunpack.c.l.b16 %v1301
      %v1832 = vunpack.c.l.b16 %v1302
      %v1833 = vunpack.c.l.b16 %v1303
      %v1834 = vunpack.c.l.b16 %v1304
      %v1835 = vunpack.c.l.b16 %v1305
      %v1836 = vunpack.c.l.b16 %v1306
      %v1837 = vunpack.c.l.b16 %v1307
      %v1838 = vunpack.c.l.b16 %v1308
      %v1839 = vunpack.c.l.b16 %v1309
      %v1840 = vunpack.c.l.b16 %v1310
      %v1841 = vunpack.c.l.b16 %v1311
      %v1842 = vunpack.c.l.b16 %v1312
      %v1843 = vunpack.c.l.b16 %v1313
      %v1844 = vpack.c.b16 %v1829, %v1828
      %v1845 = vpack.c.b16 %v1831, %v1830
      %v1846 = vpack.c.b16 %v1833, %v1832
      %v1847 = vpack.c.b16 %v1835, %v1834
      %v1848 = vpack.c.b16 %v1837, %v1836
      %v1849 = vpack.c.b16 %v1839, %v1838
      %v1850 = vpack.c.b16 %v1841, %v1840
      %v1851 = vpack.c.b16 %v1843, %v1842
      %1852 = vrot.lane.b32.xlu0 %v1844, 64
      %v1853 = vpop.permute.xlu0 %1852
      %1854 = vrot.lane.b32.xlu0 %v1845, 64
      %v1855 = vpop.permute.xlu0 %1854
      %1856 = vrot.lane.b32.xlu0 %v1846, 64
      %v1857 = vpop.permute.xlu0 %1856
      %1858 = vrot.lane.b32.xlu0 %v1847, 64
      %v1859 = vpop.permute.xlu0 %1858
      %1860 = vrot.lane.b32.xlu0 %v1848, 64
      %v1861 = vpop.permute.xlu0 %1860
      %1862 = vrot.lane.b32.xlu0 %v1849, 64
      %v1863 = vpop.permute.xlu0 %1862
      %1864 = vrot.lane.b32.xlu0 %v1850, 64
      %v1865 = vpop.permute.xlu0 %1864
      %1866 = vrot.lane.b32.xlu0 %v1851, 64
      %v1867 = vpop.permute.xlu0 %1866
      %v1876 = vunpack.c.l.b16 %v1314
      %v1877 = vunpack.c.l.b16 %v1315
      %v1878 = vunpack.c.l.b16 %v1316
      %v1879 = vunpack.c.l.b16 %v1317
      %v1880 = vunpack.c.l.b16 %v1318
      %v1881 = vunpack.c.l.b16 %v1319
      %v1882 = vunpack.c.l.b16 %v1320
      %v1883 = vunpack.c.l.b16 %v1321
      %v1884 = vpack.c.b16 %v1876, %v1876
      %v1885 = vpack.c.b16 %v1877, %v1877
      %v1886 = vpack.c.b16 %v1878, %v1878
      %v1887 = vpack.c.b16 %v1879, %v1879
      %v1888 = vpack.c.b16 %v1880, %v1880
      %v1889 = vpack.c.b16 %v1881, %v1881
      %v1890 = vpack.c.b16 %v1882, %v1882
      %v1891 = vpack.c.b16 %v1883, %v1883
      %v1893 = vshrl.u32 %v1844, 16
      %v1895 = vshll.u32 %v1844, 16
      %v1897 = vrot.slane %v1895, 1
      %v1898 = vor.u32 %v1893, %v1897
      %v1900 = vshll.u32 %v1884, 16
      %v1902 = vrot.slane %v1900, 1
      %v1903 = vsel %vm1394, %v1898, %v1902
      %v1905 = vshrl.u32 %v1845, 16
      %v1907 = vshll.u32 %v1845, 16
      %v1909 = vrot.slane %v1907, 1
      %v1910 = vor.u32 %v1905, %v1909
      %v1912 = vshll.u32 %v1885, 16
      %v1914 = vrot.slane %v1912, 1
      %v1915 = vsel %vm1394, %v1910, %v1914
      %v1917 = vshrl.u32 %v1846, 16
      %v1919 = vshll.u32 %v1846, 16
      %v1921 = vrot.slane %v1919, 1
      %v1922 = vor.u32 %v1917, %v1921
      %v1924 = vshll.u32 %v1886, 16
      %v1926 = vrot.slane %v1924, 1
      %v1927 = vsel %vm1394, %v1922, %v1926
      %v1929 = vshrl.u32 %v1847, 16
      %v1931 = vshll.u32 %v1847, 16
      %v1933 = vrot.slane %v1931, 1
      %v1934 = vor.u32 %v1929, %v1933
      %v1936 = vshll.u32 %v1887, 16
      %v1938 = vrot.slane %v1936, 1
      %v1939 = vsel %vm1394, %v1934, %v1938
      %v1941 = vshrl.u32 %v1848, 16
      %v1943 = vshll.u32 %v1848, 16
      %v1945 = vrot.slane %v1943, 1
      %v1946 = vor.u32 %v1941, %v1945
      %v1948 = vshll.u32 %v1888, 16
      %v1950 = vrot.slane %v1948, 1
      %v1951 = vsel %vm1394, %v1946, %v1950
      %v1953 = vshrl.u32 %v1849, 16
      %v1955 = vshll.u32 %v1849, 16
      %v1957 = vrot.slane %v1955, 1
      %v1958 = vor.u32 %v1953, %v1957
      %v1960 = vshll.u32 %v1889, 16
      %v1962 = vrot.slane %v1960, 1
      %v1963 = vsel %vm1394, %v1958, %v1962
      %v1965 = vshrl.u32 %v1850, 16
      %v1967 = vshll.u32 %v1850, 16
      %v1969 = vrot.slane %v1967, 1
      %v1970 = vor.u32 %v1965, %v1969
      %v1972 = vshll.u32 %v1890, 16
      %v1974 = vrot.slane %v1972, 1
      %v1975 = vsel %vm1394, %v1970, %v1974
      %v1977 = vshrl.u32 %v1851, 16
      %v1979 = vshll.u32 %v1851, 16
      %v1981 = vrot.slane %v1979, 1
      %v1982 = vor.u32 %v1977, %v1981
      %v1984 = vshll.u32 %v1891, 16
      %v1986 = vrot.slane %v1984, 1
      %v1987 = vsel %vm1394, %v1982, %v1986
      %1988 = vrot.lane.b32.xlu0 %v1903, 96
      %v1989 = vpop.permute.xlu0 %1988
      %1990 = vrot.lane.b32.xlu0 %v1915, 96
      %v1991 = vpop.permute.xlu0 %1990
      %1992 = vrot.lane.b32.xlu0 %v1927, 96
      %v1993 = vpop.permute.xlu0 %1992
      %1994 = vrot.lane.b32.xlu0 %v1939, 96
      %v1995 = vpop.permute.xlu0 %1994
      %1996 = vrot.lane.b32.xlu0 %v1951, 96
      %v1997 = vpop.permute.xlu0 %1996
      %1998 = vrot.lane.b32.xlu0 %v1963, 96
      %v1999 = vpop.permute.xlu0 %1998
      %2000 = vrot.lane.b32.xlu0 %v1975, 96
      %v2001 = vpop.permute.xlu0 %2000
      %2002 = vrot.lane.b32.xlu0 %v1987, 96
      %v2003 = vpop.permute.xlu0 %2002
      %v2012 = vunpack.c.l.b16 %v1322
      %v2013 = vunpack.c.l.b16 %v1323
      %v2014 = vunpack.c.l.b16 %v1324
      %v2015 = vunpack.c.l.b16 %v1325
      %v2016 = vunpack.c.l.b16 %v1326
      %v2017 = vunpack.c.l.b16 %v1327
      %v2018 = vunpack.c.l.b16 %v1328
      %v2019 = vunpack.c.l.b16 %v1329
      %v2020 = vpack.c.b16 %v1829, %v2012
      %v2021 = vpack.c.b16 %v1831, %v2013
      %v2022 = vpack.c.b16 %v1833, %v2014
      %v2023 = vpack.c.b16 %v1835, %v2015
      %v2024 = vpack.c.b16 %v1837, %v2016
      %v2025 = vpack.c.b16 %v1839, %v2017
      %v2026 = vpack.c.b16 %v1841, %v2018
      %v2027 = vpack.c.b16 %v1843, %v2019
      %v2028 = vrot.slane %v2020, 1
      %v2029 = vrot.slane %v1884, 1
      %v2030 = vsel %vm1531, %v2028, %v2029
      %v2031 = vrot.slane %v2021, 1
      %v2032 = vrot.slane %v1885, 1
      %v2033 = vsel %vm1531, %v2031, %v2032
      %v2034 = vrot.slane %v2022, 1
      %v2035 = vrot.slane %v1886, 1
      %v2036 = vsel %vm1531, %v2034, %v2035
      %v2037 = vrot.slane %v2023, 1
      %v2038 = vrot.slane %v1887, 1
      %v2039 = vsel %vm1531, %v2037, %v2038
      %v2040 = vrot.slane %v2024, 1
      %v2041 = vrot.slane %v1888, 1
      %v2042 = vsel %vm1531, %v2040, %v2041
      %v2043 = vrot.slane %v2025, 1
      %v2044 = vrot.slane %v1889, 1
      %v2045 = vsel %vm1531, %v2043, %v2044
      %v2046 = vrot.slane %v2026, 1
      %v2047 = vrot.slane %v1890, 1
      %v2048 = vsel %vm1531, %v2046, %v2047
      %v2049 = vrot.slane %v2027, 1
      %v2050 = vrot.slane %v1891, 1
      %v2051 = vsel %vm1531, %v2049, %v2050
      %vm2052 = vcmask 261120
      %v2054 = vsel %vm2052, %v1362, %v1492
      %v2056 = vsel %vm2052, %v1363, %v1494
      %v2058 = vsel %vm2052, %v1364, %v1496
      %v2060 = vsel %vm2052, %v1365, %v1498
      %v2062 = vsel %vm2052, %v1366, %v1500
      %v2064 = vsel %vm2052, %v1367, %v1502
      %v2066 = vsel %vm2052, %v1368, %v1504
      %v2068 = vsel %vm2052, %v1369, %v1506
      %vm2069 = vcmask 523264
      %v2071 = vsel %vm2069, %v2054, %v1557
      %v2073 = vsel %vm2069, %v2056, %v1559
      %v2075 = vsel %vm2069, %v2058, %v1561
      %v2077 = vsel %vm2069, %v2060, %v1563
      %v2079 = vsel %vm2069, %v2062, %v1565
      %v2081 = vsel %vm2069, %v2064, %v1567
      %v2083 = vsel %vm2069, %v2066, %v1569
      %v2085 = vsel %vm2069, %v2068, %v1571
      %vm2086 = vcmask 785408
      %v2088 = vsel %vm2086, %v2071, %v1613
      %v2091 = vsel %vm2086, %v2073, %v1615
      %v2094 = vsel %vm2086, %v2075, %v1617
      %v2097 = vsel %vm2086, %v2077, %v1619
      %v2100 = vsel %vm2086, %v2079, %v1621
      %v2103 = vsel %vm2086, %v2081, %v1623
      %v2106 = vsel %vm2086, %v2083, %v1625
      %v2109 = vsel %vm2086, %v2085, %v1627
      %v2113 = vsel %vm2052, %v1663, %v1797
      %v2116 = vsel %vm2052, %v1675, %v1799
      %v2119 = vsel %vm2052, %v1687, %v1801
      %v2122 = vsel %vm2052, %v1699, %v1803
      %v2125 = vsel %vm2052, %v1711, %v1805
      %v2128 = vsel %vm2052, %v1723, %v1807
      %v2131 = vsel %vm2052, %v1735, %v1809
      %v2134 = vsel %vm2052, %v1747, %v1811
      %v2136 = vsel %vm2069, %v2113, %v1853
      %v2138 = vsel %vm2069, %v2116, %v1855
      %v2140 = vsel %vm2069, %v2119, %v1857
      %v2142 = vsel %vm2069, %v2122, %v1859
      %v2144 = vsel %vm2069, %v2125, %v1861
      %v2146 = vsel %vm2069, %v2128, %v1863
      %v2148 = vsel %vm2069, %v2131, %v1865
      %v2150 = vsel %vm2069, %v2134, %v1867
      %v2152 = vsel %vm2086, %v2136, %v1989
      %v2155 = vsel %vm2086, %v2138, %v1991
      %v2158 = vsel %vm2086, %v2140, %v1993
      %v2161 = vsel %vm2086, %v2142, %v1995
      %v2164 = vsel %vm2086, %v2144, %v1997
      %v2167 = vsel %vm2086, %v2146, %v1999
      %v2170 = vsel %vm2086, %v2148, %v2001
      %v2173 = vsel %vm2086, %v2150, %v2003
      %v2175 = vld [vmem:[%s5] sm:$0xf]
      %v2176 = vld [vmem:[%s5 + $0x4] sm:$0xf]
      %v2177 = vld [vmem:[%s5 + $0x8] sm:$0xf]
      %v2178 = vld [vmem:[%s5 + $0xc] sm:$0xf]
      %v2179 = vld [vmem:[%s5 + $0x10] sm:$0xf]
      %v2180 = vld [vmem:[%s5 + $0x14] sm:$0xf]
      %v2181 = vld [vmem:[%s5 + $0x18] sm:$0xf]
      %v2182 = vld [vmem:[%s5 + $0x1c] sm:$0xf]
      %v2183 = vld [vmem:[%s5 + $0x20] sm:$0xf]
      %v2184 = vld [vmem:[%s5 + $0x24] sm:$0xf]
      %v2185 = vld [vmem:[%s5 + $0x28] sm:$0xf]
      %v2186 = vld [vmem:[%s5 + $0x2c] sm:$0xf]
      %v2187 = vld [vmem:[%s5 + $0x30] sm:$0xf]
      %v2188 = vld [vmem:[%s5 + $0x34] sm:$0xf]
      %v2189 = vld [vmem:[%s5 + $0x38] sm:$0xf]
      %v2190 = vld [vmem:[%s5 + $0x3c] sm:$0xf]
      %v2191 = vld [vmem:[%s5 + $0x40] sm:$0xf]
      %v2192 = vld [vmem:[%s5 + $0x44] sm:$0xf]
      %v2193 = vld [vmem:[%s5 + $0x48] sm:$0xf]
      %v2194 = vld [vmem:[%s5 + $0x4c] sm:$0xf]
      %v2195 = vld [vmem:[%s5 + $0x50] sm:$0xf]
      %v2196 = vld [vmem:[%s5 + $0x54] sm:$0xf]
      %v2197 = vld [vmem:[%s5 + $0x58] sm:$0xf]
      %v2198 = vld [vmem:[%s5 + $0x5c] sm:$0xf]
      %v2199 = vld [vmem:[%s5 + $0x60] sm:$0xf]
      %v2200 = vld [vmem:[%s5 + $0x64] sm:$0xf]
      %v2201 = vld [vmem:[%s5 + $0x68] sm:$0xf]
      %v2202 = vld [vmem:[%s5 + $0x6c] sm:$0xf]
      %v2203 = vld [vmem:[%s5 + $0x70] sm:$0xf]
      %v2204 = vld [vmem:[%s5 + $0x74] sm:$0xf]
      %v2205 = vld [vmem:[%s5 + $0x78] sm:$0xf]
      %v2206 = vld [vmem:[%s5 + $0x7c] sm:$0xf]
      %v2207 = vld [vmem:[%s5 + $0x80] sm:$0xf]
      %v2208 = vld [vmem:[%s5 + $0x84] sm:$0xf]
      %v2209 = vld [vmem:[%s5 + $0x88] sm:$0xf]
      %v2210 = vld [vmem:[%s5 + $0x8c] sm:$0xf]
      %v2247 = vunpack.c.l.b16 %v2175
      %v2248 = vunpack.c.l.b16 %v2176
      %v2249 = vunpack.c.l.b16 %v2177
      %v2250 = vunpack.c.l.b16 %v2178
      %v2251 = vunpack.c.l.b16 %v2179
      %v2252 = vunpack.c.l.b16 %v2180
      %v2253 = vunpack.c.l.b16 %v2181
      %v2254 = vunpack.c.l.b16 %v2182
      %v2255 = vunpack.c.l.b16 %v2183
      %v2256 = vunpack.c.l.b16 %v2184
      %v2257 = vunpack.c.l.b16 %v2185
      %v2258 = vunpack.c.l.b16 %v2186
      %v2259 = vunpack.c.l.b16 %v2187
      %v2260 = vunpack.c.l.b16 %v2188
      %v2261 = vunpack.c.l.b16 %v2189
      %v2262 = vunpack.c.l.b16 %v2190
      %v2263 = vunpack.c.l.b16 %v2191
      %v2264 = vunpack.c.l.b16 %v2192
      %v2265 = vunpack.c.l.b16 %v2193
      %v2266 = vunpack.c.l.b16 %v2194
      %v2267 = vunpack.c.l.b16 %v2195
      %v2268 = vunpack.c.l.b16 %v2196
      %v2269 = vunpack.c.l.b16 %v2197
      %v2270 = vunpack.c.l.b16 %v2198
      %v2271 = vunpack.c.l.b16 %v2199
      %v2272 = vunpack.c.l.b16 %v2200
      %v2273 = vunpack.c.l.b16 %v2201
      %v2274 = vunpack.c.l.b16 %v2202
      %v2275 = vunpack.c.l.b16 %v2203
      %v2276 = vunpack.c.l.b16 %v2204
      %v2277 = vunpack.c.l.b16 %v2205
      %v2278 = vunpack.c.l.b16 %v2206
      %v2279 = vunpack.c.l.b16 %v2207
      %v2280 = vunpack.c.l.b16 %v2208
      %v2281 = vunpack.c.l.b16 %v2209
      %v2282 = vunpack.c.l.b16 %v2210
      %v2283 = vpack.c.b16 %v2248, %v2247
      %v2284 = vpack.c.b16 %v2250, %v2249
      %v2285 = vpack.c.b16 %v2252, %v2251
      %v2286 = vpack.c.b16 %v2254, %v2253
      %v2287 = vpack.c.b16 %v2256, %v2255
      %v2288 = vpack.c.b16 %v2258, %v2257
      %v2289 = vpack.c.b16 %v2260, %v2259
      %v2290 = vpack.c.b16 %v2262, %v2261
      %v2291 = vpack.c.b16 %v2264, %v2263
      %v2292 = vpack.c.b16 %v2266, %v2265
      %v2293 = vpack.c.b16 %v2268, %v2267
      %v2294 = vpack.c.b16 %v2270, %v2269
      %v2295 = vpack.c.b16 %v2272, %v2271
      %v2296 = vpack.c.b16 %v2274, %v2273
      %v2297 = vpack.c.b16 %v2276, %v2275
      %v2298 = vpack.c.b16 %v2278, %v2277
      %v2299 = vpack.c.b16 %v2280, %v2279
      %v2300 = vpack.c.b16 %v2282, %v2281
      %v2320 = vsel %vm2052, %v2030, 0
      %v2323 = vsel %vm2052, %v2033, 0
      %v2326 = vsel %vm2052, %v2036, 0
      %v2329 = vsel %vm2052, %v2039, 0
      %v2332 = vsel %vm2052, %v2042, 0
      %v2335 = vsel %vm2052, %v2045, 0
      %v2338 = vsel %vm2052, %v2048, 0
      %v2341 = vsel %vm2052, %v2051, 0
      %2343 = vmatprep.subr.bf16.mxu0 0
      %2344 = vmatpush1.bf16.msra.mxu0 %v2283
      %2345 = vmatprep.subr.bf16.mxu0 0
      %2346 = vmatpush1.bf16.msra.mxu0 %v2284
      %2347 = vmatprep.subr.bf16.mxu0 0
      %2348 = vmatpush1.bf16.msra.mxu0 %v2285
      %2349 = vmatprep.subr.bf16.mxu0 0
      %2350 = vmatpush1.bf16.msra.mxu0 %v2286
      %2351 = vmatprep.subr.bf16.mxu0 0
      %2352 = vmatpush1.bf16.msra.mxu0 %v2287
      %2353 = vmatprep.subr.bf16.mxu0 0
      %2354 = vmatpush1.bf16.msra.mxu0 %v2288
      %2355 = vmatprep.subr.bf16.mxu0 0
      %2356 = vmatpush1.bf16.msra.mxu0 %v2289
      %2357 = vmatprep.subr.bf16.mxu0 0
      %2358 = vmatpush1.bf16.msra.mxu0 %v2290
      %2359 = vmatprep.subr.bf16.mxu0 0
      %2360 = vmatpush1.bf16.msra.mxu0 %v2291
      %2361 = vmatprep.subr.bf16.mxu0 0
      %2362 = vmatpush1.bf16.msra.mxu0 %v2292
      %2363 = vmatprep.subr.bf16.mxu0 0
      %2364 = vmatpush1.bf16.msra.mxu0 %v2293
      %2365 = vmatprep.subr.bf16.mxu0 0
      %2366 = vmatpush1.bf16.msra.mxu0 %v2294
      %2367 = vmatprep.subr.bf16.mxu0 0
      %2368 = vmatpush1.bf16.msra.mxu0 %v2295
      %2369 = vmatprep.subr.bf16.mxu0 0
      %2370 = vmatpush1.bf16.msra.mxu0 %v2296
      %2371 = vmatprep.subr.bf16.mxu0 0
      %2372 = vmatpush1.bf16.msra.mxu0 %v2297
      %2373 = vmatprep.subr.bf16.mxu0 0
      %2374 = vmatpush1.bf16.msra.mxu0 %v2298
      %2375 = vmatprep.mubr.bf16.mxu0 %v2152
      %2376 = vmatmul.mubr.bf16.gmra.mrb[0].mxu0 %v2088
      %v2377 = vpop.f32.mrb[0].mxu0
      %v2378 = vadd.f32 0.0, %v2377
      %v2379 = vpop.f32.mrb[0].mxu0
      %v2380 = vpop.f32.mrb[0].mxu0
      %v2381 = vadd.f32 0.0, %v2380
      %v2382 = vpop.f32.mrb[0].mxu0
      %2383 = vmatprep.mubr.bf16.mxu0 %v2155
      %2384 = vmatmul.mubr.bf16.gmra.mrb[0].mxu0 %v2091
      %v2385 = vpop.f32.mrb[0].mxu0
      %v2386 = vadd.f32 0.0, %v2385
      %v2387 = vpop.f32.mrb[0].mxu0
      %v2388 = vpop.f32.mrb[0].mxu0
      %v2389 = vadd.f32 0.0, %v2388
      %v2390 = vpop.f32.mrb[0].mxu0
      %2391 = vmatprep.mubr.bf16.mxu0 %v2158
      %2392 = vmatmul.mubr.bf16.gmra.mrb[0].mxu0 %v2094
      %v2393 = vpop.f32.mrb[0].mxu0
      %v2394 = vadd.f32 0.0, %v2393
      %v2395 = vpop.f32.mrb[0].mxu0
      %v2396 = vpop.f32.mrb[0].mxu0
      %v2397 = vadd.f32 0.0, %v2396
      %v2398 = vpop.f32.mrb[0].mxu0
      %2399 = vmatprep.mubr.bf16.mxu0 %v2161
      %2400 = vmatmul.mubr.bf16.gmra.mrb[0].mxu0 %v2097
      %v2401 = vpop.f32.mrb[0].mxu0
      %v2402 = vadd.f32 0.0, %v2401
      %v2403 = vpop.f32.mrb[0].mxu0
      %v2404 = vpop.f32.mrb[0].mxu0
      %v2405 = vadd.f32 0.0, %v2404
      %v2406 = vpop.f32.mrb[0].mxu0
      %2407 = vmatprep.mubr.bf16.mxu0 %v2164
      %2408 = vmatmul.mubr.bf16.gmra.mrb[0].mxu0 %v2100
      %v2409 = vpop.f32.mrb[0].mxu0
      %v2410 = vadd.f32 0.0, %v2409
      %v2411 = vpop.f32.mrb[0].mxu0
      %v2412 = vpop.f32.mrb[0].mxu0
      %v2413 = vadd.f32 0.0, %v2412
      %v2414 = vpop.f32.mrb[0].mxu0
      %2415 = vmatprep.mubr.bf16.mxu0 %v2167
      %2416 = vmatmul.mubr.bf16.gmra.mrb[0].mxu0 %v2103
      %v2417 = vpop.f32.mrb[0].mxu0
      %v2418 = vadd.f32 0.0, %v2417
      %v2419 = vpop.f32.mrb[0].mxu0
      %v2420 = vpop.f32.mrb[0].mxu0
      %v2421 = vadd.f32 0.0, %v2420
      %v2422 = vpop.f32.mrb[0].mxu0
      %2423 = vmatprep.mubr.bf16.mxu0 %v2170
      %2424 = vmatmul.mubr.bf16.gmra.mrb[0].mxu0 %v2106
      %v2425 = vpop.f32.mrb[0].mxu0
      %v2426 = vadd.f32 0.0, %v2425
      %v2427 = vpop.f32.mrb[0].mxu0
      %v2428 = vpop.f32.mrb[0].mxu0
      %v2429 = vadd.f32 0.0, %v2428
      %v2430 = vpop.f32.mrb[0].mxu0
      %2431 = vmatprep.mubr.bf16.mxu0 %v2173
      %2432 = vmatmul.mubr.bf16.gmra.mrb[0].mxu0 %v2109
      %v2433 = vpop.f32.mrb[0].mxu0
      %v2434 = vadd.f32 0.0, %v2433
      %v2435 = vpop.f32.mrb[0].mxu0
      %v2436 = vpop.f32.mrb[0].mxu0
      %v2437 = vadd.f32 0.0, %v2436
      %v2438 = vpop.f32.mrb[0].mxu0
      %2439 = vdwg.mxu0
      %2440 = vmatprep.subr.bf16.mxu0 0
      %2441 = vmatpush1.bf16.msra.mxu0 %v2299
      %2442 = vmatprep.subr.bf16.mxu0 0
      %2443 = vmatpush1.bf16.msra.mxu0 %v2300
      %2444 = vmatprep.subr.bf16.mxu0 0
      %2445 = vmatpush1.bf16.msra.mxu0 0
      %2446 = vmatprep.subr.bf16.mxu0 0
      %2447 = vmatpush1.bf16.msra.mxu0 0
      %2448 = vmatprep.subr.bf16.mxu0 0
      %2449 = vmatpush1.bf16.msra.mxu0 0
      %2450 = vmatprep.subr.bf16.mxu0 0
      %2451 = vmatpush1.bf16.msra.mxu0 0
      %2452 = vmatprep.subr.bf16.mxu0 0
      %2453 = vmatpush1.bf16.msra.mxu0 0
      %2454 = vmatprep.subr.bf16.mxu0 0
      %2455 = vmatpush1.bf16.msra.mxu0 0
      %2456 = vmatprep.subr.bf16.mxu0 0
      %2457 = vmatpush1.bf16.msra.mxu0 0
      %2458 = vmatprep.subr.bf16.mxu0 0
      %2459 = vmatpush1.bf16.msra.mxu0 0
      %2460 = vmatprep.subr.bf16.mxu0 0
      %2461 = vmatpush1.bf16.msra.mxu0 0
      %2462 = vmatprep.subr.bf16.mxu0 0
      %2463 = vmatpush1.bf16.msra.mxu0 0
      %2464 = vmatprep.subr.bf16.mxu0 0
      %2465 = vmatpush1.bf16.msra.mxu0 0
      %2466 = vmatprep.subr.bf16.mxu0 0
      %2467 = vmatpush1.bf16.msra.mxu0 0
      %2468 = vmatprep.subr.bf16.mxu0 0
      %2469 = vmatpush1.bf16.msra.mxu0 0
      %2470 = vmatprep.subr.bf16.mxu0 0
      %2471 = vmatpush1.bf16.msra.mxu0 0
      %2472 = vmatprep.mubr.bf16.mxu0 0
      %2473 = vmatmul.mubr.bf16.gmra.mrb[0].mxu0 %v2320
      %v2474 = vpop.f32.mrb[0].mxu0
      %v2475 = vadd.f32 %v2378, %v2474
      %v2476 = vpop.f32.mrb[0].mxu0
      %v2477 = vpop.f32.mrb[0].mxu0
      %v2478 = vadd.f32 %v2381, %v2477
      %v2479 = vpop.f32.mrb[0].mxu0
      %2480 = vmatprep.mubr.bf16.mxu0 0
      %2481 = vmatmul.mubr.bf16.gmra.mrb[0].mxu0 %v2323
      %v2482 = vpop.f32.mrb[0].mxu0
      %v2483 = vadd.f32 %v2386, %v2482
      %v2484 = vpop.f32.mrb[0].mxu0
      %v2485 = vpop.f32.mrb[0].mxu0
      %v2486 = vadd.f32 %v2389, %v2485
      %v2487 = vpop.f32.mrb[0].mxu0
      %2488 = vmatprep.mubr.bf16.mxu0 0
      %2489 = vmatmul.mubr.bf16.gmra.mrb[0].mxu0 %v2326
      %v2490 = vpop.f32.mrb[0].mxu0
      %v2491 = vadd.f32 %v2394, %v2490
      %v2492 = vpop.f32.mrb[0].mxu0
      %v2493 = vpop.f32.mrb[0].mxu0
      %v2494 = vadd.f32 %v2397, %v2493
      %v2495 = vpop.f32.mrb[0].mxu0
      %2496 = vmatprep.mubr.bf16.mxu0 0
      %2497 = vmatmul.mubr.bf16.gmra.mrb[0].mxu0 %v2329
      %v2498 = vpop.f32.mrb[0].mxu0
      %v2499 = vadd.f32 %v2402, %v2498
      %v2500 = vpop.f32.mrb[0].mxu0
      %v2501 = vpop.f32.mrb[0].mxu0
      %v2502 = vadd.f32 %v2405, %v2501
      %v2503 = vpop.f32.mrb[0].mxu0
      %2504 = vmatprep.mubr.bf16.mxu0 0
      %2505 = vmatmul.mubr.bf16.gmra.mrb[0].mxu0 %v2332
      %v2506 = vpop.f32.mrb[0].mxu0
      %v2507 = vadd.f32 %v2410, %v2506
      %v2508 = vpop.f32.mrb[0].mxu0
      %v2509 = vpop.f32.mrb[0].mxu0
      %v2510 = vadd.f32 %v2413, %v2509
      %v2511 = vpop.f32.mrb[0].mxu0
      %2512 = vmatprep.mubr.bf16.mxu0 0
      %2513 = vmatmul.mubr.bf16.gmra.mrb[0].mxu0 %v2335
      %v2514 = vpop.f32.mrb[0].mxu0
      %v2515 = vadd.f32 %v2418, %v2514
      %v2516 = vpop.f32.mrb[0].mxu0
      %v2517 = vpop.f32.mrb[0].mxu0
      %v2518 = vadd.f32 %v2421, %v2517
      %v2519 = vpop.f32.mrb[0].mxu0
      %2520 = vmatprep.mubr.bf16.mxu0 0
      %2521 = vmatmul.mubr.bf16.gmra.mrb[0].mxu0 %v2338
      %v2522 = vpop.f32.mrb[0].mxu0
      %v2523 = vadd.f32 %v2426, %v2522
      %v2524 = vpop.f32.mrb[0].mxu0
      %v2525 = vpop.f32.mrb[0].mxu0
      %v2526 = vadd.f32 %v2429, %v2525
      %v2527 = vpop.f32.mrb[0].mxu0
      %2528 = vmatprep.mubr.bf16.mxu0 0
      %2529 = vmatmul.mubr.bf16.gmra.mrb[0].mxu0 %v2341
      %v2530 = vpop.f32.mrb[0].mxu0
      %v2531 = vadd.f32 %v2434, %v2530
      %v2532 = vpop.f32.mrb[0].mxu0
      %v2533 = vpop.f32.mrb[0].mxu0
      %v2534 = vadd.f32 %v2437, %v2533
      %v2535 = vpop.f32.mrb[0].mxu0
      %2536 = vdwg.mxu0
      %v2537 = vpack.c.bf16 %v2478, %v2475
      %v2538 = vpack.c.bf16 %v2486, %v2483
      %v2539 = vpack.c.bf16 %v2494, %v2491
      %v2540 = vpack.c.bf16 %v2502, %v2499
      %v2541 = vpack.c.bf16 %v2510, %v2507
      %v2542 = vpack.c.bf16 %v2518, %v2515
      %v2543 = vpack.c.bf16 %v2526, %v2523
      %v2544 = vpack.c.bf16 %v2534, %v2531
      %v2553 = vunpack.c.l.b16 %v2537
      %v2554 = vunpack.c.h.b16 %v2537
      %v2555 = vunpack.c.l.b16 %v2538
      %v2556 = vunpack.c.h.b16 %v2538
      %v2557 = vunpack.c.l.b16 %v2539
      %v2558 = vunpack.c.h.b16 %v2539
      %v2559 = vunpack.c.l.b16 %v2540
      %v2560 = vunpack.c.h.b16 %v2540
      %v2561 = vunpack.c.l.b16 %v2541
      %v2562 = vunpack.c.h.b16 %v2541
      %v2563 = vunpack.c.l.b16 %v2542
      %v2564 = vunpack.c.h.b16 %v2542
      %v2565 = vunpack.c.l.b16 %v2543
      %v2566 = vunpack.c.h.b16 %v2543
      %v2567 = vunpack.c.l.b16 %v2544
      %v2568 = vunpack.c.h.b16 %v2544
      %v2569 = vpack.c.b16 %v2553, %v2553
      %v2570 = vpack.c.b16 %v2554, %v2554
      %v2571 = vpack.c.b16 %v2555, %v2555
      %v2572 = vpack.c.b16 %v2556, %v2556
      %v2573 = vpack.c.b16 %v2557, %v2557
      %v2574 = vpack.c.b16 %v2558, %v2558
      %v2575 = vpack.c.b16 %v2559, %v2559
      %v2576 = vpack.c.b16 %v2560, %v2560
      %v2577 = vpack.c.b16 %v2561, %v2561
      %v2578 = vpack.c.b16 %v2562, %v2562
      %v2579 = vpack.c.b16 %v2563, %v2563
      %v2580 = vpack.c.b16 %v2564, %v2564
      %v2581 = vpack.c.b16 %v2565, %v2565
      %v2582 = vpack.c.b16 %v2566, %v2566
      %v2583 = vpack.c.b16 %v2567, %v2567
      %v2584 = vpack.c.b16 %v2568, %v2568
      %vm2601 = vcmask 257024
      %2602 = vst.msk [vmem:[%s352] sm:$0xf] %vm2601, %v2569
      %2603 = vst.msk [vmem:[%s352 + $0x4] sm:$0xf] %vm2601, %v2570
      %2604 = vst.msk [vmem:[%s352 + $0x8] sm:$0xf] %vm2601, %v2571
      %2605 = vst.msk [vmem:[%s352 + $0xc] sm:$0xf] %vm2601, %v2572
      %2606 = vst.msk [vmem:[%s352 + $0x10] sm:$0xf] %vm2601, %v2573
      %2607 = vst.msk [vmem:[%s352 + $0x14] sm:$0xf] %vm2601, %v2574
      %2608 = vst.msk [vmem:[%s352 + $0x18] sm:$0xf] %vm2601, %v2575
      %2609 = vst.msk [vmem:[%s352 + $0x1c] sm:$0xf] %vm2601, %v2576
      %2610 = vst.msk [vmem:[%s352 + $0x20] sm:$0xf] %vm2601, %v2577
      %2611 = vst.msk [vmem:[%s352 + $0x24] sm:$0xf] %vm2601, %v2578
      %2612 = vst.msk [vmem:[%s352 + $0x28] sm:$0xf] %vm2601, %v2579
      %2613 = vst.msk [vmem:[%s352 + $0x2c] sm:$0xf] %vm2601, %v2580
      %2614 = vst.msk [vmem:[%s352 + $0x30] sm:$0xf] %vm2601, %v2581
      %2615 = vst.msk [vmem:[%s352 + $0x34] sm:$0xf] %vm2601, %v2582
      %2616 = vst.msk [vmem:[%s352 + $0x38] sm:$0xf] %vm2601, %v2583
      %2617 = vst.msk [vmem:[%s352 + $0x3c] sm:$0xf] %vm2601, %v2584
      %v2618 = vsel %vm2052, %v2475, 0.0
      %v2619 = vsel %vm2052, %v2478, 0.0
      %v2620 = vadd.f32 %v2618, %v2619
      %v2621 = vsel %vm2052, %v2483, 0.0
      %v2622 = vadd.f32 %v2620, %v2621
      %v2623 = vsel %vm2052, %v2486, 0.0
      %v2624 = vadd.f32 %v2622, %v2623
      %v2625 = vsel %vm2052, %v2491, 0.0
      %v2626 = vadd.f32 %v2624, %v2625
      %v2627 = vsel %vm2052, %v2494, 0.0
      %v2628 = vadd.f32 %v2626, %v2627
      %v2629 = vsel %vm2052, %v2499, 0.0
      %v2630 = vadd.f32 %v2628, %v2629
      %v2631 = vsel %vm2052, %v2502, 0.0
      %v2632 = vadd.f32 %v2630, %v2631
      %v2633 = vsel %vm2052, %v2507, 0.0
      %v2634 = vadd.f32 %v2632, %v2633
      %v2635 = vsel %vm2052, %v2510, 0.0
      %v2636 = vadd.f32 %v2634, %v2635
      %v2637 = vsel %vm2052, %v2515, 0.0
      %v2638 = vadd.f32 %v2636, %v2637
      %v2639 = vsel %vm2052, %v2518, 0.0
      %v2640 = vadd.f32 %v2638, %v2639
      %v2641 = vsel %vm2052, %v2523, 0.0
      %v2642 = vadd.f32 %v2640, %v2641
      %v2643 = vsel %vm2052, %v2526, 0.0
      %v2644 = vadd.f32 %v2642, %v2643
      %v2645 = vsel %vm2052, %v2531, 0.0
      %v2646 = vadd.f32 %v2644, %v2645
      %v2647 = vsel %vm2052, %v2534, 0.0
      %v2648 = vadd.f32 %v2646, %v2647
      %v2649 = vrot.slane %v2648, 4
      %v2650 = vadd.f32 %v2648, %v2649
      %v2651 = vrot.slane %v2650, 2
      %v2652 = vadd.f32 %v2650, %v2651
      %v2653 = vrot.slane %v2652, 1
      %v2654 = vadd.f32 %v2652, %v2653
      %vm2655 = vcmask 253952
      %2656 = vst.msk [vmem:[%s358] sm:$0x1] %vm2655, %v2654
      %v2657 = vmul.f32 %v2475, %v2475
      %v2658 = vmul.f32 %v2478, %v2478
      %v2659 = vmul.f32 %v2483, %v2483
      %v2660 = vmul.f32 %v2486, %v2486
      %v2661 = vmul.f32 %v2491, %v2491
      %v2662 = vmul.f32 %v2494, %v2494
      %v2663 = vmul.f32 %v2499, %v2499
      %v2664 = vmul.f32 %v2502, %v2502
      %v2665 = vmul.f32 %v2507, %v2507
      %v2666 = vmul.f32 %v2510, %v2510
      %v2667 = vmul.f32 %v2515, %v2515
      %v2668 = vmul.f32 %v2518, %v2518
      %v2669 = vmul.f32 %v2523, %v2523
      %v2670 = vmul.f32 %v2526, %v2526
      %v2671 = vmul.f32 %v2531, %v2531
      %v2672 = vmul.f32 %v2534, %v2534
      %v2673 = vsel %vm2052, %v2657, 0.0
      %v2674 = vsel %vm2052, %v2658, 0.0
      %v2675 = vadd.f32 %v2673, %v2674
      %v2676 = vsel %vm2052, %v2659, 0.0
      %v2677 = vadd.f32 %v2675, %v2676
      %v2678 = vsel %vm2052, %v2660, 0.0
      %v2679 = vadd.f32 %v2677, %v2678
      %v2680 = vsel %vm2052, %v2661, 0.0
      %v2681 = vadd.f32 %v2679, %v2680
      %v2682 = vsel %vm2052, %v2662, 0.0
      %v2683 = vadd.f32 %v2681, %v2682
      %v2684 = vsel %vm2052, %v2663, 0.0
      %v2685 = vadd.f32 %v2683, %v2684
      %v2686 = vsel %vm2052, %v2664, 0.0
      %v2687 = vadd.f32 %v2685, %v2686
      %v2688 = vsel %vm2052, %v2665, 0.0
      %v2689 = vadd.f32 %v2687, %v2688
      %v2690 = vsel %vm2052, %v2666, 0.0
      %v2691 = vadd.f32 %v2689, %v2690
      %v2692 = vsel %vm2052, %v2667, 0.0
      %v2693 = vadd.f32 %v2691, %v2692
      %v2694 = vsel %vm2052, %v2668, 0.0
      %v2695 = vadd.f32 %v2693, %v2694
      %v2696 = vsel %vm2052, %v2669, 0.0
      %v2697 = vadd.f32 %v2695, %v2696
      %v2698 = vsel %vm2052, %v2670, 0.0
      %v2699 = vadd.f32 %v2697, %v2698
      %v2700 = vsel %vm2052, %v2671, 0.0
      %v2701 = vadd.f32 %v2699, %v2700
      %v2702 = vsel %vm2052, %v2672, 0.0
      %v2703 = vadd.f32 %v2701, %v2702
      %v2704 = vrot.slane %v2703, 4
      %v2705 = vadd.f32 %v2703, %v2704
      %v2706 = vrot.slane %v2705, 2
      %v2707 = vadd.f32 %v2705, %v2706
      %v2708 = vrot.slane %v2707, 1
      %v2709 = vadd.f32 %v2707, %v2708
      %2710 = vst.msk [vmem:[%s365] sm:$0x1] %vm2655, %v2709
      %s2711 = smul.u32 8, %s25
      %p2712 = scmp.lt.s32.totalorder %s24, 1
      %s2713 = scalar_select %p2712, %s24, 1
      %p2714 = scmp.lt.s32.totalorder %s2711, 15
      %s2715 = scalar_select %p2714, %s2711, 15
      %s2716 = smul.addr %s2715, 2
      %s2717 = smul.addr %s2713, 32
      %s2718 = sadd.s32 %s2716, %s2717
      %s2719 = smul.addr %s2718, 4
      %s2720 = scalar_lea.vmem %s6, %s2719
      %s2721 = smul.u32 %s24, 2
      %s2722 = sadd.s32 %s2721, %s25
      %p2723 = scmp.lt.s32.totalorder %s2722, 3
      %s2724 = scalar_select %p2723, %s2722, 3
      %s2725 = scalar_lea.vmem %s7, %s2724
      %s2726 = smul.u32 %s24, 2
      %s2727 = sadd.s32 %s2726, %s25
      %p2728 = scmp.lt.s32.totalorder %s2727, 3
      %s2729 = scalar_select %p2728, %s2727, 3
      %s2730 = scalar_lea.vmem %s8, %s2729
      // Predicated region
      $region49: #{block_forward.5} parent=43 // pred_check
        %p2731 = pneg %p183
      $region50: #{block_forward.5} parent=43 // pred_check_branch
        %2733 = sbr.rel (%p2731) target = $region52
      $region51: #{block_forward.5} parent=43 // pred_region
        %s2734 = smul.u32 8, %s25
      $region52: #{block_forward.5} parent=43 // pred_fallthru
        _
      // Predicated region
      $region53: #{block_forward.5} parent=43 // pred_check
        %p2735 = pneg %p213
      $region54: #{block_forward.5} parent=43 // pred_check_branch
        %2737 = sbr.rel (%p2735) target = $region56
      $region55: #{block_forward.5} parent=43 // pred_region
        %s2738 = smul.u32 %s24, 2
        %s2739 = sadd.s32 %s2738, %s25
      $region56: #{block_forward.5} parent=43 // pred_fallthru
        _
      // Predicated region
      $region57: #{block_forward.5} parent=43 // pred_check
        %p2740 = pneg %p243
      $region58: #{block_forward.5} parent=43 // pred_check_branch
        %2742 = sbr.rel (%p2740) target = $region60
      $region59: #{block_forward.5} parent=43 // pred_region
        %s2743 = smul.u32 %s24, 2
        %s2744 = sadd.s32 %s2743, %s25
      $region60: #{block_forward.5} parent=43 // pred_fallthru
        _
    $region44: #{block_forward.5} parent=5 // pred_fallthru
      _
    %p2745 = scmp.le.s32.totalorder 2, %s15
    // Predicated region
    $region61: #{block_forward.5} parent=5 // pred_check
      %p2746 = pneg %p2745
    $region62: #{block_forward.5} parent=5 // pred_check_branch
      %2748 = sbr.rel (%p2746) target = $region64
    $region63: #{block_forward.5} parent=5 // pred_region
      %s2749 = ssub.s32 %s15, 2
      // Predicated region
      $region65: #{block_forward.5} parent=63 // pred_check
        %p2750 = pneg %p189
      $region66: #{block_forward.5} parent=63 // pred_check_branch
        %2752 = sbr.rel (%p2750) target = $region68
      $region67: #{block_forward.5} parent=63 // pred_region
        %s2753 = smul.u32 8, %s27
        %p2754 = scmp.lt.s32.totalorder %s26, 1
        %s2755 = scalar_select %p2754, %s26, 1
        %p2756 = scmp.lt.s32.totalorder %s2753, 15
        %s2757 = scalar_select %p2756, %s2753, 15
        %s2758 = smul.addr %s2757, 2
        %s2759 = smul.addr %s2755, 32
        %s2760 = sadd.s32 %s2758, %s2759
        %s2761 = smul.addr %s2760, 4
        %s2762 = scalar_lea.vmem %s6, %s2761
      $region68: #{block_forward.5} parent=63 // pred_fallthru
        _
      // Predicated region
      $region69: #{block_forward.5} parent=63 // pred_check
        %p2763 = pneg %p219
      $region70: #{block_forward.5} parent=63 // pred_check_branch
        %2765 = sbr.rel (%p2763) target = $region72
      $region71: #{block_forward.5} parent=63 // pred_region
        %s2766 = smul.u32 %s26, 2
        %s2767 = sadd.s32 %s2766, %s27
        %p2768 = scmp.lt.s32.totalorder %s2767, 3
        %s2769 = scalar_select %p2768, %s2767, 3
        %s2770 = scalar_lea.vmem %s7, %s2769
      $region72: #{block_forward.5} parent=63 // pred_fallthru
        _
      // Predicated region
      $region73: #{block_forward.5} parent=63 // pred_check
        %p2771 = pneg %p249
      $region74: #{block_forward.5} parent=63 // pred_check_branch
        %2773 = sbr.rel (%p2771) target = $region76
      $region75: #{block_forward.5} parent=63 // pred_region
        %s2774 = smul.u32 %s26, 2
        %s2775 = sadd.s32 %s2774, %s27
        %p2776 = scmp.lt.s32.totalorder %s2775, 3
        %s2777 = scalar_select %p2776, %s2775, 3
        %s2778 = scalar_lea.vmem %s8, %s2777
      $region76: #{block_forward.5} parent=63 // pred_fallthru
        _
    $region64: #{block_forward.5} parent=5 // pred_fallthru
      _
  $region6: #{block_forward.5} parent=0 // loop_footer
    %s19 = sadd.s32 1, %s15
  $region7: #{block_forward.5} parent=0 // loop_footer_branch
    %14 = sbr.rel target = $region3
  $region8: #{block_forward.5} parent=0 // loop_exit
    _

</llo_original>
